<compile_context>
chip_gen: v7x
topology: tpu7x:2x2x1
jax: 0.10.0
libtpu: 0.0.40
codegen_flags: <defaults>
</compile_context>

<pallas_src>
import math
from functools import partial

import jax
import jax.numpy as jnp
from jax.experimental import pallas as pl
from jax.experimental.pallas import tpu as pltpu


# ---------------------------------------------------------------------------
# Generation-aware VMEM / tile budgets
# ---------------------------------------------------------------------------
def _vmem_capacity_bytes():
    try:
        return int(pltpu.get_tpu_info().vmem_capacity_bytes)
    except Exception:
        return 64 * 1024 * 1024          # conservative (v7x-sized) fallback


_VMEM_CAP = _vmem_capacity_bytes()
_BIG_VMEM = _VMEM_CAP >= 100 * 1024 * 1024      # v5e/v6e (128 MiB) vs v7x (64 MiB)
VMEM_LIMIT = min(int(_VMEM_CAP * 0.6), 64 * 1024 * 1024)
_TM_CAP = 256 if _BIG_VMEM else 192             # row-tile cap
_TN_CAP = 1024 if _BIG_VMEM else 512            # output-column-tile cap (bf16 weights)


def _row_tile(n, cap):
    """Row tile <= cap, multiple of 8 when possible, and at least 2 grid steps
    for small n so both v7x TensorCores get work."""
    if n <= 8:
        return n
    target = min(cap, max(8, ((n // 2) // 8) * 8))
    for t in range(target, 7, -8):
        if n % t == 0:
            return t
    return target  # trailing partial block handled by Pallas edge masking


def _col_tile(f, cap):
    """Largest lane-dense (multiple-of-128) column tile <= cap."""
    if f <= cap:
        return f
    for t in range(cap, 127, -128):
        if f % t == 0:
            return t
    return max(128, (cap // 128) * 128)


# ---------------------------------------------------------------------------
# Kernel 1: GEMM + bias, tiled over rows and output columns (bf16 MXU, f32 acc)
# ---------------------------------------------------------------------------
def _matmul_bias_kernel(x_ref, w_ref, b_ref, o_ref):
    o_ref[...] = (
        jnp.dot(x_ref[...].astype(jnp.bfloat16), w_ref[...],
                preferred_element_type=jnp.float32)
        + b_ref[...]
    ).astype(o_ref.dtype)


def matmul_bias(x, w, b, *, out_dtype=None, tm=None, tn=None):
    """x (N,K) @ w (K,F) + b (1,F) -> (N,F)."""
    N, K = x.shape
    F = w.shape[1]
    out_dtype = out_dtype or x.dtype
    tm = _row_tile(N, tm or _TM_CAP)
    tn = _col_tile(F, tn or _TN_CAP)
    # rows are the innermost grid axis so the weight tile stays resident across row steps
    grid = (pl.cdiv(F, tn), pl.cdiv(N, tm))
    return pl.pallas_call(
        _matmul_bias_kernel,
        out_shape=jax.ShapeDtypeStruct((N, F), out_dtype),
        grid_spec=pltpu.PrefetchScalarGridSpec(
            num_scalar_prefetch=0,
            grid=grid,
            in_specs=[
                pl.BlockSpec((tm, K), lambda j, i: (i, 0)),
                pl.BlockSpec((K, tn), lambda j, i: (0, j)),
                pl.BlockSpec((1, tn), lambda j, i: (0, j)),
            ],
            out_specs=pl.BlockSpec((tm, tn), lambda j, i: (i, j)),
        ),
        compiler_params=pltpu.CompilerParams(
            dimension_semantics=("parallel", "parallel"),
            vmem_limit_bytes=VMEM_LIMIT),
        cost_estimate=pl.CostEstimate(
            flops=2 * N * K * F, transcendentals=0,
            bytes_accessed=4 * N * K + 2 * K * F + 4 * N * F),
    )(x, w, b)


# ---------------------------------------------------------------------------
# Kernel 2: GEMM (K-tiled, f32 accumulator) + bias + residual + LayerNorm
# ---------------------------------------------------------------------------
def _linear_add_ln_kernel(x_ref, w_ref, b_ref, r_ref, g_ref, bb_ref, o_ref,
                          acc_ref, *, eps):
    k = pl.program_id(1)

    @pl.when(k == 0)
    def _():
        acc_ref[...] = jnp.zeros_like(acc_ref)

    acc_ref[...] += jnp.dot(x_ref[...].astype(jnp.bfloat16), w_ref[...],
                            preferred_element_type=jnp.float32)

    @pl.when(k == pl.num_programs(1) - 1)
    def _():
        y = acc_ref[...] + b_ref[...] + r_ref[...]
        mu = jnp.mean(y, axis=-1, keepdims=True)
        yc = y - mu
        var = jnp.mean(yc * yc, axis=-1, keepdims=True)
        o_ref[...] = (yc * jax.lax.rsqrt(var + eps) * g_ref[...]
                      + bb_ref[...]).astype(o_ref.dtype)


def linear_add_layernorm(x, w, b, resid, gamma, beta, *, eps, tm=None, tk=None):
    """LayerNorm((x @ w + b) + resid) in one kernel; grid = (row tiles, K tiles)."""
    N, K = x.shape
    E = w.shape[1]
    tm = _row_tile(N, tm or _TM_CAP)
    tk = _col_tile(K, tk or 512)
    grid = (pl.cdiv(N, tm), pl.cdiv(K, tk))        # reduction axis last
    return pl.pallas_call(
        partial(_linear_add_ln_kernel, eps=eps),
        out_shape=jax.ShapeDtypeStruct((N, E), jnp.float32),
        grid_spec=pltpu.PrefetchScalarGridSpec(
            num_scalar_prefetch=0,
            grid=grid,
            in_specs=[
                pl.BlockSpec((tm, tk), lambda i, k: (i, k)),
                pl.BlockSpec((tk, E), lambda i, k: (k, 0)),
                pl.BlockSpec((1, E), lambda i, k: (0, 0)),
                pl.BlockSpec((tm, E), lambda i, k: (i, 0)),
                pl.BlockSpec((1, E), lambda i, k: (0, 0)),
                pl.BlockSpec((1, E), lambda i, k: (0, 0)),
            ],
            out_specs=pl.BlockSpec((tm, E), lambda i, k: (i, 0)),
            scratch_shapes=[pltpu.VMEM((tm, E), jnp.float32)],
        ),
        compiler_params=pltpu.CompilerParams(
            dimension_semantics=("parallel", "arbitrary"),
            vmem_limit_bytes=VMEM_LIMIT),
        cost_estimate=pl.CostEstimate(
            flops=2 * N * K * E + 10 * N * E, transcendentals=N,
            bytes_accessed=4 * N * K + 2 * K * E + 8 * N * E),
    )(x, w, b, resid, gamma, beta)


# ---------------------------------------------------------------------------
# Kernel 3: DERF attention (softmax over the heads axis per token), row-tiled
# ---------------------------------------------------------------------------
def _derf_attention_kernel(qkv_ref, bt_ref, c_ref, red_ref, bc_ref, o_ref, *,
                           num_heads, d_k):
    E = num_heads * d_k
    tm = qkv_ref.shape[0]
    q = qkv_ref[:, 0:E]
    k = qkv_ref[:, E:2 * E]
    v = qkv_ref[:, 2 * E:3 * E]
    bt = bt_ref[...]       # (E, E) bf16 block-diagonal B^T / sqrt(d_k)
    c = c_ref[...]         # (1, E) f32: 0.5*sum(omega^2, 0) + D, tiled over heads
    red = red_ref[...]     # (E, Hp) bf16 per-head lane reducer (0/1)
    bc = bc_ref[...]       # (Hp, E) bf16 per-head lane broadcaster (= red.T)
    Hp = red.shape[1]

    # --- symmetric-random-feature map, q and k batched as one MXU push ---
    qk = jnp.concatenate([q, k], axis=0).astype(jnp.bfloat16)            # (2*tm, E)
    logits = jnp.dot(qk, bt, preferred_element_type=jnp.float32) + c
    # per-row (per-token) shift: any per-row positive scale cancels in the
    # per-head L2 normalization below -> fp32-safe and mathematically identical
    logits = logits - jnp.max(logits, axis=-1, keepdims=True)
    f = jnp.exp(logits)
    ssq = jnp.dot((f * f).astype(jnp.bfloat16), red,
                  preferred_element_type=jnp.float32)                    # (2*tm, Hp)
    ssq_e = jnp.dot(ssq.astype(jnp.bfloat16), bc,
                    preferred_element_type=jnp.float32)                  # back to E lanes
    fn = f * jax.lax.rsqrt(ssq_e)                                        # unit per-head features (f32)
    qf = fn[0:tm]
    kf = fn[tm:]

    # --- attention over the HEADS axis per token (faithful to the reference) ---
    # Roll kf/v by r head blocks so head h of q meets head (h-r)%H of k/v; over
    # r = 0..H-1 every (h, g) pair appears exactly once.  Scores are reduced to
    # an Hp-wide slab before exp (only H useful lanes -> no d_k-fold EUP
    # redundancy), then broadcast back to E lanes with a small matmul.
    vf = v.astype(jnp.float32)
    num = jnp.zeros((tm, E), jnp.float32)
    den_s = jnp.zeros((tm, Hp), jnp.float32)
    for r in range(num_heads):
        kf_r = pltpu.roll(kf, shift=r * d_k, axis=1) if r else kf
        v_r = pltpu.roll(vf, shift=r * d_k, axis=1) if r else vf
        s = jnp.dot((qf * kf_r).astype(jnp.bfloat16), red,
                    preferred_element_type=jnp.float32)                  # (tm, Hp)
        e = jnp.exp(s)            # scores are dots of positive unit vectors -> (0,1]
        den_s = den_s + e
        e_full = jnp.dot(e.astype(jnp.bfloat16), bc,
                         preferred_element_type=jnp.float32)             # (tm, E)
        num = num + e_full * v_r
    den = jnp.dot(den_s.astype(jnp.bfloat16), bc,
                  preferred_element_type=jnp.float32)
    o_ref[...] = (num * pl.reciprocal(den, approx=True)).astype(o_ref.dtype)


def derf_attention(qkv, bt_block, c_full, red_mat, bc_mat, *, num_heads, d_k, tm=None):
    N = qkv.shape[0]
    E = num_heads * d_k
    Hp = bc_mat.shape[0]
    tm = _row_tile(N, tm or _TM_CAP)
    return pl.pallas_call(
        partial(_derf_attention_kernel, num_heads=num_heads, d_k=d_k),
        out_shape=jax.ShapeDtypeStruct((N, E), jnp.bfloat16),
        grid_spec=pltpu.PrefetchScalarGridSpec(
            num_scalar_prefetch=0,
            grid=(pl.cdiv(N, tm),),
            in_specs=[
                pl.BlockSpec((tm, 3 * E), lambda i: (i, 0)),
                pl.BlockSpec((E, E), lambda i: (0, 0)),
                pl.BlockSpec((1, E), lambda i: (0, 0)),
                pl.BlockSpec((E, Hp), lambda i: (0, 0)),
                pl.BlockSpec((Hp, E), lambda i: (0, 0)),
            ],
            out_specs=pl.BlockSpec((tm, E), lambda i: (i, 0)),
        ),
        compiler_params=pltpu.CompilerParams(
            dimension_semantics=("parallel",),
            vmem_limit_bytes=VMEM_LIMIT),
        cost_estimate=pl.CostEstimate(
            flops=N * E * (4 * E + 4 * Hp * (num_heads + 2)),
            transcendentals=N * (2 * E + num_heads * Hp),
            bytes_accessed=4 * 3 * N * E + 2 * N * E + 2 * (E * E + 2 * E * Hp)),
    )(qkv, bt_block, c_full, red_mat, bc_mat)


# ---------------------------------------------------------------------------
# Parameter construction (deterministic, matches reference __init__ shapes)
# ---------------------------------------------------------------------------
def init_linear(key, fan_in, fan_out):
    kw, kb = jax.random.split(key)
    bound = 1.0 / math.sqrt(fan_in)
    # stored as (in, out), i.e. x @ W with W = torch_weight.T; bf16 for the MXU
    w = jax.random.uniform(kw, (fan_in, fan_out), jnp.float32, -bound, bound)
    b = jax.random.uniform(kb, (1, fan_out), jnp.float32, -bound, bound)
    return w.astype(jnp.bfloat16), b


def init_srf(key, d_k, M, num_heads):
    k1, k2 = jax.random.split(key)
    rm = jax.random.normal(k1, (d_k, M), dtype=jnp.float32)
    _eig_values, eig_vectors = jnp.linalg.eigh(rm @ rm.T)   # random_matrix param
    B = jnp.zeros((d_k, d_k), jnp.float32)  # __init__ value (forward SVD update skipped, see TODO)
    D = jnp.float32(1.0)
    # omega = random_matrix @ randn(M, d_k).T  (fresh in reference forward; sampled once here)
    omega = eig_vectors @ jax.random.normal(k2, (M, d_k), dtype=jnp.float32).T
    c = 0.5 * jnp.sum(omega * omega, axis=0) + D            # (M,) == (d_k,)

    E = num_heads * d_k
    Hp = ((num_heads + 127) // 128) * 128
    bt_scaled = B.T / math.sqrt(d_k)                         # fold 1/sqrt(d_k) into B^T
    bt_block = jnp.kron(jnp.eye(num_heads, dtype=jnp.float32),
                        bt_scaled).astype(jnp.bfloat16)      # (E, E)
    c_full = jnp.tile(c, num_heads).reshape(1, E)
    head_id = jnp.arange(E) // d_k
    red_mat = (head_id[:, None] == jnp.arange(Hp)[None, :]).astype(jnp.bfloat16)  # (E, Hp)
    bc_mat = red_mat.T                                       # (Hp, E)
    return bt_block, c_full, red_mat, bc_mat


def init_layer(key, E, H, I, M):
    keys = jax.random.split(key, 7)
    d_k = E // H
    wq, bq = init_linear(keys[0], E, E)
    wk, bk = init_linear(keys[1], E, E)
    wv, bv = init_linear(keys[2], E, E)
    return dict(
        qkv=(jnp.concatenate([wq, wk, wv], axis=1),          # (E, 3E) fused projection, bf16
             jnp.concatenate([bq, bk, bv], axis=1)),         # (1, 3E) f32
        o=init_linear(keys[3], E, E),
        srf=init_srf(keys[4], d_k, M, H),
        inter=init_linear(keys[5], E, I),
        out=init_linear(keys[6], I, E),
        # single LayerNorm applied twice — matches the reference CustomBertLayer
        ln=(jnp.ones((1, E), jnp.float32), jnp.zeros((1, E), jnp.float32)),
    )


# ---------------------------------------------------------------------------
# Model forward (glue in plain JAX, hot path in Pallas)
# ---------------------------------------------------------------------------
def bert_layer(x, params, *, num_heads, eps):
    B, S, E = x.shape
    N = B * S
    d_k = E // num_heads
    xf = x.reshape(N, E)

    qkv = matmul_bias(xf, *params["qkv"], out_dtype=jnp.float32)   # fused Q/K/V: (N, 3E)

    ctx = derf_attention(qkv, *params["srf"],
                         num_heads=num_heads, d_k=d_k)             # (N, E) bf16, head-major cols

    # reproduce torch: context.transpose(1, 2).contiguous().view(B, S, E)
    # (mixes tokens; kept as one JAX transpose, in bf16 to halve HBM traffic)
    ctx = ctx.reshape(B, S, num_heads, d_k).transpose(0, 2, 1, 3).reshape(N, E)

    # out-proj + residual + LayerNorm (fused, K-tiled)
    h1 = linear_add_layernorm(ctx, *params["o"], xf, *params["ln"], eps=eps)
    # intermediate GEMM (no activation in the reference); bf16 activation out
    inter = matmul_bias(h1, *params["inter"], out_dtype=jnp.bfloat16)
    # dropout: inference identity; ffn-out + residual + LayerNorm (fused, K-tiled)
    h2 = linear_add_layernorm(inter, *params["out"], h1, *params["ln"], eps=eps)
    return h2.reshape(B, S, E)


def custom_bert_model(input_ids, layers, *, num_heads, eps):
    h = input_ids
    for p in layers:
        h = bert_layer(h, p, num_heads=num_heads, eps=eps)
    return h  # last_hidden_state


if __name__ == "__main__":
    # config: d_k must equal num_random_features (=64) for the reference broadcast
    batch, seq = 2, 8
    num_heads = 2
    hidden = 128
    intermediate = 256
    num_layers = 2
    num_random_features = 64
    eps = 1e-12

    root = jax.random.PRNGKey(0)
    keys = jax.random.split(root, num_layers + 1)
    x = jax.random.normal(keys[0], (batch, seq, hidden), dtype=jnp.float32)
    layers = [init_layer(keys[i + 1], hidden, num_heads, intermediate, num_random_features)
              for i in range(num_layers)]

    fwd = jax.jit(partial(custom_bert_model, num_heads=num_heads, eps=eps))
    out = fwd(x, layers)
    jax.block_until_ready(out)
    assert out.shape == (batch, seq, hidden)
    assert bool(jnp.all(jnp.isfinite(out)))
    print("KERNEL_OK")
</pallas_src>

<mosaic_0001>
module attributes {stable_mosaic.version = 11 : i64} {
  func.func @_derf_attention_kernel(%arg0: i32, %arg1: memref<8x384xf32, #tpu.memory_space<vmem>>, %arg2: memref<128x128xbf16, #tpu.memory_space<vmem>>, %arg3: memref<1x128xf32, #tpu.memory_space<vmem>>, %arg4: memref<128x128xbf16, #tpu.memory_space<vmem>>, %arg5: memref<128x128xbf16, #tpu.memory_space<vmem>>, %arg6: memref<8x128xbf16, #tpu.memory_space<vmem>>) attributes {dimension_semantics = [#tpu.dimension_semantics<parallel>], iteration_bounds = array<i64: 2>, scalar_prefetch = 0 : i64, scratch_operands = 0 : i64, tpu.core_type = #tpu.core_type<tc>, window_params = [{transform_indices = @transform_0, window_bounds = array<i64: 8, 384>}, {pipeline_mode = #tpu.pipeline_mode<synchronous>, transform_indices = @transform_1, window_bounds = array<i64: 128, 128>}, {pipeline_mode = #tpu.pipeline_mode<synchronous>, transform_indices = @transform_2, window_bounds = array<i64: 1, 128>}, {pipeline_mode = #tpu.pipeline_mode<synchronous>, transform_indices = @transform_3, window_bounds = array<i64: 128, 128>}, {pipeline_mode = #tpu.pipeline_mode<synchronous>, transform_indices = @transform_4, window_bounds = array<i64: 128, 128>}, {transform_indices = @transform_5, window_bounds = array<i64: 8, 128>}]} {
    %c0 = arith.constant 0 : index
    %c0_0 = arith.constant 0 : index
    %0 = vector.load %arg1[%c0, %c0_0] : memref<8x384xf32, #tpu.memory_space<vmem>>, vector<8x128xf32>
    %c0_1 = arith.constant 0 : index
    %c128 = arith.constant 128 : index
    %1 = vector.load %arg1[%c0_1, %c128] : memref<8x384xf32, #tpu.memory_space<vmem>>, vector<8x128xf32>
    %c0_2 = arith.constant 0 : index
    %c256 = arith.constant 256 : index
    %2 = vector.load %arg1[%c0_2, %c256] : memref<8x384xf32, #tpu.memory_space<vmem>>, vector<8x128xf32>
    %c0_3 = arith.constant 0 : index
    %c0_4 = arith.constant 0 : index
    %3 = vector.load %arg2[%c0_3, %c0_4] : memref<128x128xbf16, #tpu.memory_space<vmem>>, vector<128x128xbf16>
    %c0_5 = arith.constant 0 : index
    %c0_6 = arith.constant 0 : index
    %4 = vector.load %arg3[%c0_5, %c0_6] : memref<1x128xf32, #tpu.memory_space<vmem>>, vector<1x128xf32>
    %c0_7 = arith.constant 0 : index
    %c0_8 = arith.constant 0 : index
    %5 = vector.load %arg4[%c0_7, %c0_8] : memref<128x128xbf16, #tpu.memory_space<vmem>>, vector<128x128xbf16>
    %c0_9 = arith.constant 0 : index
    %c0_10 = arith.constant 0 : index
    %6 = vector.load %arg5[%c0_9, %c0_10] : memref<128x128xbf16, #tpu.memory_space<vmem>>, vector<128x128xbf16>
    %7 = tpu.concatenate %0, %1 in 0 : vector<8x128xf32>, vector<8x128xf32> -> vector<16x128xf32>
    %8 = arith.truncf %7 : vector<16x128xf32> to vector<16x128xbf16>
    %cst = arith.constant dense<0.000000e+00> : vector<16x128xf32>
    %9 = tpu.matmul %8, %3, %cst {dimension_numbers = #tpu.dot_dimension_numbers<[1], [0], [0], [1], [0, 0, 1, 1], [], []>} : vector<16x128xbf16>, vector<128x128xbf16>, vector<16x128xf32> -> vector<16x128xf32>
    %10 = vector.broadcast %4 : vector<1x128xf32> to vector<16x128xf32>
    %11 = arith.addf %9, %10 : vector<16x128xf32>
    %cst_11 = arith.constant dense<0xFF800000> : vector<16xf32>
    %12 = vector.multi_reduction <maximumf>, %11, %cst_11 [1] : vector<16x128xf32> to vector<16xf32>
    %13 = vector.shape_cast %12 : vector<16xf32> to vector<16x1xf32>
    %14 = vector.broadcast %13 : vector<16x1xf32> to vector<16x128xf32>
    %15 = arith.subf %11, %14 : vector<16x128xf32>
    %16 = math.exp %15 : vector<16x128xf32>
    %17 = arith.mulf %16, %16 : vector<16x128xf32>
    %18 = arith.truncf %17 : vector<16x128xf32> to vector<16x128xbf16>
    %cst_12 = arith.constant dense<0.000000e+00> : vector<16x128xf32>
    %19 = tpu.matmul %18, %5, %cst_12 {dimension_numbers = #tpu.dot_dimension_numbers<[1], [0], [0], [1], [0, 0, 1, 1], [], []>} : vector<16x128xbf16>, vector<128x128xbf16>, vector<16x128xf32> -> vector<16x128xf32>
    %20 = arith.truncf %19 : vector<16x128xf32> to vector<16x128xbf16>
    %cst_13 = arith.constant dense<0.000000e+00> : vector<16x128xf32>
    %21 = tpu.matmul %20, %6, %cst_13 {dimension_numbers = #tpu.dot_dimension_numbers<[1], [0], [0], [1], [0, 0, 1, 1], [], []>} : vector<16x128xbf16>, vector<128x128xbf16>, vector<16x128xf32> -> vector<16x128xf32>
    %22 = math.rsqrt %21 : vector<16x128xf32>
    %23 = arith.mulf %16, %22 : vector<16x128xf32>
    %24 = vector.extract_strided_slice %23 {offsets = [0, 0], sizes = [8, 128], strides = [1, 1]} : vector<16x128xf32> to vector<8x128xf32>
    %25 = vector.extract_strided_slice %23 {offsets = [8, 0], sizes = [8, 128], strides = [1, 1]} : vector<16x128xf32> to vector<8x128xf32>
    %cst_14 = arith.constant 0.000000e+00 : f32
    %26 = vector.broadcast %cst_14 : f32 to vector<8x128xf32>
    %cst_15 = arith.constant 0.000000e+00 : f32
    %27 = vector.broadcast %cst_15 : f32 to vector<8x128xf32>
    %28 = arith.mulf %24, %25 : vector<8x128xf32>
    %29 = arith.truncf %28 : vector<8x128xf32> to vector<8x128xbf16>
    %cst_16 = arith.constant dense<0.000000e+00> : vector<8x128xf32>
    %30 = tpu.matmul %29, %5, %cst_16 {dimension_numbers = #tpu.dot_dimension_numbers<[1], [0], [0], [1], [0, 0, 1, 1], [], []>} : vector<8x128xbf16>, vector<128x128xbf16>, vector<8x128xf32> -> vector<8x128xf32>
    %31 = math.exp %30 : vector<8x128xf32>
    %32 = arith.addf %27, %31 : vector<8x128xf32>
    %33 = arith.truncf %31 : vector<8x128xf32> to vector<8x128xbf16>
    %cst_17 = arith.constant dense<0.000000e+00> : vector<8x128xf32>
    %34 = tpu.matmul %33, %6, %cst_17 {dimension_numbers = #tpu.dot_dimension_numbers<[1], [0], [0], [1], [0, 0, 1, 1], [], []>} : vector<8x128xbf16>, vector<128x128xbf16>, vector<8x128xf32> -> vector<8x128xf32>
    %35 = arith.mulf %34, %2 : vector<8x128xf32>
    %36 = arith.addf %26, %35 : vector<8x128xf32>
    %c64_i32 = arith.constant 64 : i32
    %37 = tpu.dynamic_rotate %25 by %c64_i32 dim 1 : vector<8x128xf32>, i32 -> vector<8x128xf32>
    %c64_i32_18 = arith.constant 64 : i32
    %38 = tpu.dynamic_rotate %2 by %c64_i32_18 dim 1 : vector<8x128xf32>, i32 -> vector<8x128xf32>
    %39 = arith.mulf %24, %37 : vector<8x128xf32>
    %40 = arith.truncf %39 : vector<8x128xf32> to vector<8x128xbf16>
    %cst_19 = arith.constant dense<0.000000e+00> : vector<8x128xf32>
    %41 = tpu.matmul %40, %5, %cst_19 {dimension_numbers = #tpu.dot_dimension_numbers<[1], [0], [0], [1], [0, 0, 1, 1], [], []>} : vector<8x128xbf16>, vector<128x128xbf16>, vector<8x128xf32> -> vector<8x128xf32>
    %42 = math.exp %41 : vector<8x128xf32>
    %43 = arith.addf %32, %42 : vector<8x128xf32>
    %44 = arith.truncf %42 : vector<8x128xf32> to vector<8x128xbf16>
    %cst_20 = arith.constant dense<0.000000e+00> : vector<8x128xf32>
    %45 = tpu.matmul %44, %6, %cst_20 {dimension_numbers = #tpu.dot_dimension_numbers<[1], [0], [0], [1], [0, 0, 1, 1], [], []>} : vector<8x128xbf16>, vector<128x128xbf16>, vector<8x128xf32> -> vector<8x128xf32>
    %46 = arith.mulf %45, %38 : vector<8x128xf32>
    %47 = arith.addf %36, %46 : vector<8x128xf32>
    %48 = arith.truncf %43 : vector<8x128xf32> to vector<8x128xbf16>
    %cst_21 = arith.constant dense<0.000000e+00> : vector<8x128xf32>
    %49 = tpu.matmul %48, %6, %cst_21 {dimension_numbers = #tpu.dot_dimension_numbers<[1], [0], [0], [1], [0, 0, 1, 1], [], []>} : vector<8x128xbf16>, vector<128x128xbf16>, vector<8x128xf32> -> vector<8x128xf32>
    %50 = tpu.reciprocal %49 {approx = true} : vector<8x128xf32> -> vector<8x128xf32>
    %51 = arith.mulf %47, %50 : vector<8x128xf32>
    %52 = arith.truncf %51 : vector<8x128xf32> to vector<8x128xbf16>
    %c0_22 = arith.constant 0 : index
    %c0_23 = arith.constant 0 : index
    %53 = vector.load %arg6[%c0_22, %c0_23] : memref<8x128xbf16, #tpu.memory_space<vmem>>, vector<8x128xbf16>
    tpu.vector_store %arg6[%c0_22, %c0_23], %52 {strides = array<i32>} : memref<8x128xbf16, #tpu.memory_space<vmem>>, vector<8x128xbf16>,
    return
  }
  func.func @transform_0(%arg0: i32) -> (i32, i32) {
    %c0_i32 = arith.constant 0 : i32
    %c0_i32_0 = arith.constant 0 : i32
    return %arg0, %c0_i32 : i32, i32
  }
  func.func @transform_1(%arg0: i32) -> (i32, i32) {
    %c0_i32 = arith.constant 0 : i32
    %c0_i32_0 = arith.constant 0 : i32
    %c0_i32_1 = arith.constant 0 : i32
    return %c0_i32, %c0_i32_0 : i32, i32
  }
  func.func @transform_2(%arg0: i32) -> (i32, i32) {
    %c0_i32 = arith.constant 0 : i32
    %c0_i32_0 = arith.constant 0 : i32
    %c0_i32_1 = arith.constant 0 : i32
    return %c0_i32, %c0_i32_0 : i32, i32
  }
  func.func @transform_3(%arg0: i32) -> (i32, i32) {
    %c0_i32 = arith.constant 0 : i32
    %c0_i32_0 = arith.constant 0 : i32
    %c0_i32_1 = arith.constant 0 : i32
    return %c0_i32, %c0_i32_0 : i32, i32
  }
  func.func @transform_4(%arg0: i32) -> (i32, i32) {
    %c0_i32 = arith.constant 0 : i32
    %c0_i32_0 = arith.constant 0 : i32
    %c0_i32_1 = arith.constant 0 : i32
    return %c0_i32, %c0_i32_0 : i32, i32
  }
  func.func @transform_5(%arg0: i32) -> (i32, i32) {
    %c0_i32 = arith.constant 0 : i32
    %c0_i32_0 = arith.constant 0 : i32
    return %arg0, %c0_i32 : i32, i32
  }
}

module attributes {stable_mosaic.version = 11 : i64} {
  func.func @_matmul_bias_kernel(%arg0: i32, %arg1: i32, %arg2: memref<8x128xf32, #tpu.memory_space<vmem>>, %arg3: memref<128x384xbf16, #tpu.memory_space<vmem>>, %arg4: memref<1x384xf32, #tpu.memory_space<vmem>>, %arg5: memref<8x384xf32, #tpu.memory_space<vmem>>) attributes {dimension_semantics = [#tpu.dimension_semantics<parallel>, #tpu.dimension_semantics<parallel>], iteration_bounds = array<i64: 1, 2>, scalar_prefetch = 0 : i64, scratch_operands = 0 : i64, tpu.core_type = #tpu.core_type<tc>, window_params = [{transform_indices = @transform_0, window_bounds = array<i64: 8, 128>}, {transform_indices = @transform_1, window_bounds = array<i64: 128, 384>}, {transform_indices = @transform_2, window_bounds = array<i64: 1, 384>}, {transform_indices = @transform_3, window_bounds = array<i64: 8, 384>}]} {
    %c0 = arith.constant 0 : index
    %c0_0 = arith.constant 0 : index
    %0 = vector.load %arg2[%c0, %c0_0] : memref<8x128xf32, #tpu.memory_space<vmem>>, vector<8x128xf32>
    %1 = arith.truncf %0 : vector<8x128xf32> to vector<8x128xbf16>
    %c0_1 = arith.constant 0 : index
    %c0_2 = arith.constant 0 : index
    %2 = vector.load %arg3[%c0_1, %c0_2] : memref<128x384xbf16, #tpu.memory_space<vmem>>, vector<128x384xbf16>
    %cst = arith.constant dense<0.000000e+00> : vector<8x384xf32>
    %3 = tpu.matmul %1, %2, %cst {dimension_numbers = #tpu.dot_dimension_numbers<[1], [0], [0], [1], [0, 0, 1, 1], [], []>} : vector<8x128xbf16>, vector<128x384xbf16>, vector<8x384xf32> -> vector<8x384xf32>
    %c0_3 = arith.constant 0 : index
    %c0_4 = arith.constant 0 : index
    %4 = vector.load %arg4[%c0_3, %c0_4] : memref<1x384xf32, #tpu.memory_space<vmem>>, vector<1x384xf32>
    %5 = vector.broadcast %4 : vector<1x384xf32> to vector<8x384xf32>
    %6 = arith.addf %3, %5 : vector<8x384xf32>
    %c0_5 = arith.constant 0 : index
    %c0_6 = arith.constant 0 : index
    %7 = vector.load %arg5[%c0_5, %c0_6] : memref<8x384xf32, #tpu.memory_space<vmem>>, vector<8x384xf32>
    tpu.vector_store %arg5[%c0_5, %c0_6], %6 {strides = array<i32>} : memref<8x384xf32, #tpu.memory_space<vmem>>, vector<8x384xf32>,
    return
  }
  func.func @transform_0(%arg0: i32, %arg1: i32) -> (i32, i32) {
    %c0_i32 = arith.constant 0 : i32
    %c0_i32_0 = arith.constant 0 : i32
    return %arg1, %c0_i32 : i32, i32
  }
  func.func @transform_1(%arg0: i32, %arg1: i32) -> (i32, i32) {
    %c0_i32 = arith.constant 0 : i32
    %c0_i32_0 = arith.constant 0 : i32
    return %c0_i32, %arg0 : i32, i32
  }
  func.func @transform_2(%arg0: i32, %arg1: i32) -> (i32, i32) {
    %c0_i32 = arith.constant 0 : i32
    %c0_i32_0 = arith.constant 0 : i32
    return %c0_i32, %arg0 : i32, i32
  }
  func.func @transform_3(%arg0: i32, %arg1: i32) -> (i32, i32) {
    %c0_i32 = arith.constant 0 : i32
    return %arg1, %arg0 : i32, i32
  }
}

module attributes {stable_mosaic.version = 11 : i64} {
  func.func @_matmul_bias_kernel(%arg0: i32, %arg1: i32, %arg2: memref<8x128xf32, #tpu.memory_space<vmem>>, %arg3: memref<128x256xbf16, #tpu.memory_space<vmem>>, %arg4: memref<1x256xf32, #tpu.memory_space<vmem>>, %arg5: memref<8x256xbf16, #tpu.memory_space<vmem>>) attributes {dimension_semantics = [#tpu.dimension_semantics<parallel>, #tpu.dimension_semantics<parallel>], iteration_bounds = array<i64: 1, 2>, scalar_prefetch = 0 : i64, scratch_operands = 0 : i64, tpu.core_type = #tpu.core_type<tc>, window_params = [{transform_indices = @transform_0, window_bounds = array<i64: 8, 128>}, {transform_indices = @transform_1, window_bounds = array<i64: 128, 256>}, {transform_indices = @transform_2, window_bounds = array<i64: 1, 256>}, {transform_indices = @transform_3, window_bounds = array<i64: 8, 256>}]} {
    %c0 = arith.constant 0 : index
    %c0_0 = arith.constant 0 : index
    %0 = vector.load %arg2[%c0, %c0_0] : memref<8x128xf32, #tpu.memory_space<vmem>>, vector<8x128xf32>
    %1 = arith.truncf %0 : vector<8x128xf32> to vector<8x128xbf16>
    %c0_1 = arith.constant 0 : index
    %c0_2 = arith.constant 0 : index
    %2 = vector.load %arg3[%c0_1, %c0_2] : memref<128x256xbf16, #tpu.memory_space<vmem>>, vector<128x256xbf16>
    %cst = arith.constant dense<0.000000e+00> : vector<8x256xf32>
    %3 = tpu.matmul %1, %2, %cst {dimension_numbers = #tpu.dot_dimension_numbers<[1], [0], [0], [1], [0, 0, 1, 1], [], []>} : vector<8x128xbf16>, vector<128x256xbf16>, vector<8x256xf32> -> vector<8x256xf32>
    %c0_3 = arith.constant 0 : index
    %c0_4 = arith.constant 0 : index
    %4 = vector.load %arg4[%c0_3, %c0_4] : memref<1x256xf32, #tpu.memory_space<vmem>>, vector<1x256xf32>
    %5 = vector.broadcast %4 : vector<1x256xf32> to vector<8x256xf32>
    %6 = arith.addf %3, %5 : vector<8x256xf32>
    %7 = arith.truncf %6 : vector<8x256xf32> to vector<8x256xbf16>
    %c0_5 = arith.constant 0 : index
    %c0_6 = arith.constant 0 : index
    %8 = vector.load %arg5[%c0_5, %c0_6] : memref<8x256xbf16, #tpu.memory_space<vmem>>, vector<8x256xbf16>
    tpu.vector_store %arg5[%c0_5, %c0_6], %7 {strides = array<i32>} : memref<8x256xbf16, #tpu.memory_space<vmem>>, vector<8x256xbf16>,
    return
  }
  func.func @transform_0(%arg0: i32, %arg1: i32) -> (i32, i32) {
    %c0_i32 = arith.constant 0 : i32
    %c0_i32_0 = arith.constant 0 : i32
    return %arg1, %c0_i32 : i32, i32
  }
  func.func @transform_1(%arg0: i32, %arg1: i32) -> (i32, i32) {
    %c0_i32 = arith.constant 0 : i32
    %c0_i32_0 = arith.constant 0 : i32
    return %c0_i32, %arg0 : i32, i32
  }
  func.func @transform_2(%arg0: i32, %arg1: i32) -> (i32, i32) {
    %c0_i32 = arith.constant 0 : i32
    %c0_i32_0 = arith.constant 0 : i32
    return %c0_i32, %arg0 : i32, i32
  }
  func.func @transform_3(%arg0: i32, %arg1: i32) -> (i32, i32) {
    %c0_i32 = arith.constant 0 : i32
    return %arg1, %arg0 : i32, i32
  }
}

module attributes {stable_mosaic.version = 11 : i64} {
  func.func @_linear_add_ln_kernel(%arg0: i32, %arg1: i32, %arg2: memref<8x128xbf16, #tpu.memory_space<vmem>>, %arg3: memref<128x128xbf16, #tpu.memory_space<vmem>>, %arg4: memref<1x128xf32, #tpu.memory_space<vmem>>, %arg5: memref<8x128xf32, #tpu.memory_space<vmem>>, %arg6: memref<1x128xf32, #tpu.memory_space<vmem>>, %arg7: memref<1x128xf32, #tpu.memory_space<vmem>>, %arg8: memref<8x128xf32, #tpu.memory_space<vmem>>, %arg9: memref<8x128xf32, #tpu.memory_space<vmem>>) attributes {dimension_semantics = [#tpu.dimension_semantics<parallel>, #tpu.dimension_semantics<arbitrary>], iteration_bounds = array<i64: 2, 1>, scalar_prefetch = 0 : i64, scratch_operands = 1 : i64, tpu.core_type = #tpu.core_type<tc>, window_params = [{transform_indices = @transform_0, window_bounds = array<i64: 8, 128>}, {transform_indices = @transform_1, window_bounds = array<i64: 128, 128>}, {pipeline_mode = #tpu.pipeline_mode<synchronous>, transform_indices = @transform_2, window_bounds = array<i64: 1, 128>}, {transform_indices = @transform_3, window_bounds = array<i64: 8, 128>}, {pipeline_mode = #tpu.pipeline_mode<synchronous>, transform_indices = @transform_4, window_bounds = array<i64: 1, 128>}, {pipeline_mode = #tpu.pipeline_mode<synchronous>, transform_indices = @transform_5, window_bounds = array<i64: 1, 128>}, {transform_indices = @transform_6, window_bounds = array<i64: 8, 128>}]} {
    %c0_i32 = arith.constant 0 : i32
    %0 = arith.cmpi eq, %arg1, %c0_i32 : i32
    %1 = arith.extui %0 : i1 to i32
    %c0_i32_0 = arith.constant 0 : i32
    %2 = arith.cmpi ne, %1, %c0_i32_0 : i32
    scf.if %2 {
      %cst_10 = arith.constant 0.000000e+00 : f32
      %12 = vector.broadcast %cst_10 : f32 to vector<8x128xf32>
      %c0_11 = arith.constant 0 : index
      %c0_12 = arith.constant 0 : index
      %13 = vector.load %arg9[%c0_11, %c0_12] : memref<8x128xf32, #tpu.memory_space<vmem>>, vector<8x128xf32>
      tpu.vector_store %arg9[%c0_11, %c0_12], %12 {strides = array<i32>} : memref<8x128xf32, #tpu.memory_space<vmem>>, vector<8x128xf32>,
    } else {
    }
    %c0 = arith.constant 0 : index
    %c0_1 = arith.constant 0 : index
    %3 = vector.load %arg9[%c0, %c0_1] : memref<8x128xf32, #tpu.memory_space<vmem>>, vector<8x128xf32>
    %c0_2 = arith.constant 0 : index
    %c0_3 = arith.constant 0 : index
    %4 = vector.load %arg2[%c0_2, %c0_3] : memref<8x128xbf16, #tpu.memory_space<vmem>>, vector<8x128xbf16>
    %c0_4 = arith.constant 0 : index
    %c0_5 = arith.constant 0 : index
    %5 = vector.load %arg3[%c0_4, %c0_5] : memref<128x128xbf16, #tpu.memory_space<vmem>>, vector<128x128xbf16>
    %cst = arith.constant dense<0.000000e+00> : vector<8x128xf32>
    %6 = tpu.matmul %4, %5, %cst {dimension_numbers = #tpu.dot_dimension_numbers<[1], [0], [0], [1], [0, 0, 1, 1], [], []>} : vector<8x128xbf16>, vector<128x128xbf16>, vector<8x128xf32> -> vector<8x128xf32>
    %7 = arith.addf %3, %6 : vector<8x128xf32>
    %c0_6 = arith.constant 0 : index
    %c0_7 = arith.constant 0 : index
    %8 = vector.load %arg9[%c0_6, %c0_7] : memref<8x128xf32, #tpu.memory_space<vmem>>, vector<8x128xf32>
    tpu.vector_store %arg9[%c0_6, %c0_7], %7 {strides = array<i32>} : memref<8x128xf32, #tpu.memory_space<vmem>>, vector<8x128xf32>,
    %c0_i32_8 = arith.constant 0 : i32
    %9 = arith.cmpi eq, %arg1, %c0_i32_8 : i32
    %10 = arith.extui %9 : i1 to i32
    %c0_i32_9 = arith.constant 0 : i32
    %11 = arith.cmpi ne, %10, %c0_i32_9 : i32
    scf.if %11 {
      %c0_10 = arith.constant 0 : index
      %c0_11 = arith.constant 0 : index
      %12 = vector.load %arg9[%c0_10, %c0_11] : memref<8x128xf32, #tpu.memory_space<vmem>>, vector<8x128xf32>
      %c0_12 = arith.constant 0 : index
      %c0_13 = arith.constant 0 : index
      %13 = vector.load %arg4[%c0_12, %c0_13] : memref<1x128xf32, #tpu.memory_space<vmem>>, vector<1x128xf32>
      %14 = vector.broadcast %13 : vector<1x128xf32> to vector<8x128xf32>
      %15 = arith.addf %12, %14 : vector<8x128xf32>
      %c0_14 = arith.constant 0 : index
      %c0_15 = arith.constant 0 : index
      %16 = vector.load %arg5[%c0_14, %c0_15] : memref<8x128xf32, #tpu.memory_space<vmem>>, vector<8x128xf32>
      %17 = arith.addf %15, %16 : vector<8x128xf32>
      %cst_16 = arith.constant dense<0.000000e+00> : vector<8xf32>
      %18 = vector.multi_reduction <add>, %17, %cst_16 [1] : vector<8x128xf32> to vector<8xf32>
      %19 = vector.shape_cast %18 : vector<8xf32> to vector<8x1xf32>
      %cst_17 = arith.constant 1.280000e+02 : f32
      %20 = vector.broadcast %cst_17 : f32 to vector<8x1xf32>
      %21 = arith.divf %19, %20 : vector<8x1xf32>
      %22 = vector.broadcast %21 : vector<8x1xf32> to vector<8x128xf32>
      %23 = arith.subf %17, %22 : vector<8x128xf32>
      %24 = arith.mulf %23, %23 : vector<8x128xf32>
      %cst_18 = arith.constant dense<0.000000e+00> : vector<8xf32>
      %25 = vector.multi_reduction <add>, %24, %cst_18 [1] : vector<8x128xf32> to vector<8xf32>
      %26 = vector.shape_cast %25 : vector<8xf32> to vector<8x1xf32>
      %cst_19 = arith.constant 1.280000e+02 : f32
      %27 = vector.broadcast %cst_19 : f32 to vector<8x1xf32>
      %28 = arith.divf %26, %27 : vector<8x1xf32>
      %cst_20 = arith.constant 9.99999996E-13 : f32
      %29 = vector.broadcast %cst_20 : f32 to vector<8x1xf32>
      %30 = arith.addf %28, %29 : vector<8x1xf32>
      %31 = math.rsqrt %30 : vector<8x1xf32>
      %32 = vector.broadcast %31 : vector<8x1xf32> to vector<8x128xf32>
      %33 = arith.mulf %23, %32 : vector<8x128xf32>
      %c0_21 = arith.constant 0 : index
      %c0_22 = arith.constant 0 : index
      %34 = vector.load %arg6[%c0_21, %c0_22] : memref<1x128xf32, #tpu.memory_space<vmem>>, vector<1x128xf32>
      %35 = vector.broadcast %34 : vector<1x128xf32> to vector<8x128xf32>
      %36 = arith.mulf %33, %35 : vector<8x128xf32>
      %c0_23 = arith.constant 0 : index
      %c0_24 = arith.constant 0 : index
      %37 = vector.load %arg7[%c0_23, %c0_24] : memref<1x128xf32, #tpu.memory_space<vmem>>, vector<1x128xf32>
      %38 = vector.broadcast %37 : vector<1x128xf32> to vector<8x128xf32>
      %39 = arith.addf %36, %38 : vector<8x128xf32>
      %c0_25 = arith.constant 0 : index
      %c0_26 = arith.constant 0 : index
      %40 = vector.load %arg8[%c0_25, %c0_26] : memref<8x128xf32, #tpu.memory_space<vmem>>, vector<8x128xf32>
      tpu.vector_store %arg8[%c0_25, %c0_26], %39 {strides = array<i32>} : memref<8x128xf32, #tpu.memory_space<vmem>>, vector<8x128xf32>,
    } else {
    }
    return
  }
  func.func @transform_0(%arg0: i32, %arg1: i32) -> (i32, i32) {
    %c0_i32 = arith.constant 0 : i32
    return %arg0, %arg1 : i32, i32
  }
  func.func @transform_1(%arg0: i32, %arg1: i32) -> (i32, i32) {
    %c0_i32 = arith.constant 0 : i32
    %c0_i32_0 = arith.constant 0 : i32
    return %arg1, %c0_i32 : i32, i32
  }
  func.func @transform_2(%arg0: i32, %arg1: i32) -> (i32, i32) {
    %c0_i32 = arith.constant 0 : i32
    %c0_i32_0 = arith.constant 0 : i32
    %c0_i32_1 = arith.constant 0 : i32
    return %c0_i32, %c0_i32_0 : i32, i32
  }
  func.func @transform_3(%arg0: i32, %arg1: i32) -> (i32, i32) {
    %c0_i32 = arith.constant 0 : i32
    %c0_i32_0 = arith.constant 0 : i32
    return %arg0, %c0_i32 : i32, i32
  }
  func.func @transform_4(%arg0: i32, %arg1: i32) -> (i32, i32) {
    %c0_i32 = arith.constant 0 : i32
    %c0_i32_0 = arith.constant 0 : i32
    %c0_i32_1 = arith.constant 0 : i32
    return %c0_i32, %c0_i32_0 : i32, i32
  }
  func.func @transform_5(%arg0: i32, %arg1: i32) -> (i32, i32) {
    %c0_i32 = arith.constant 0 : i32
    %c0_i32_0 = arith.constant 0 : i32
    %c0_i32_1 = arith.constant 0 : i32
    return %c0_i32, %c0_i32_0 : i32, i32
  }
  func.func @transform_6(%arg0: i32, %arg1: i32) -> (i32, i32) {
    %c0_i32 = arith.constant 0 : i32
    %c0_i32_0 = arith.constant 0 : i32
    return %arg0, %c0_i32 : i32, i32
  }
}

module attributes {stable_mosaic.version = 11 : i64} {
  func.func @_linear_add_ln_kernel(%arg0: i32, %arg1: i32, %arg2: memref<8x256xbf16, #tpu.memory_space<vmem>>, %arg3: memref<256x128xbf16, #tpu.memory_space<vmem>>, %arg4: memref<1x128xf32, #tpu.memory_space<vmem>>, %arg5: memref<8x128xf32, #tpu.memory_space<vmem>>, %arg6: memref<1x128xf32, #tpu.memory_space<vmem>>, %arg7: memref<1x128xf32, #tpu.memory_space<vmem>>, %arg8: memref<8x128xf32, #tpu.memory_space<vmem>>, %arg9: memref<8x128xf32, #tpu.memory_space<vmem>>) attributes {dimension_semantics = [#tpu.dimension_semantics<parallel>, #tpu.dimension_semantics<arbitrary>], iteration_bounds = array<i64: 2, 1>, scalar_prefetch = 0 : i64, scratch_operands = 1 : i64, tpu.core_type = #tpu.core_type<tc>, window_params = [{transform_indices = @transform_0, window_bounds = array<i64: 8, 256>}, {transform_indices = @transform_1, window_bounds = array<i64: 256, 128>}, {pipeline_mode = #tpu.pipeline_mode<synchronous>, transform_indices = @transform_2, window_bounds = array<i64: 1, 128>}, {transform_indices = @transform_3, window_bounds = array<i64: 8, 128>}, {pipeline_mode = #tpu.pipeline_mode<synchronous>, transform_indices = @transform_4, window_bounds = array<i64: 1, 128>}, {pipeline_mode = #tpu.pipeline_mode<synchronous>, transform_indices = @transform_5, window_bounds = array<i64: 1, 128>}, {transform_indices = @transform_6, window_bounds = array<i64: 8, 128>}]} {
    %c0_i32 = arith.constant 0 : i32
    %0 = arith.cmpi eq, %arg1, %c0_i32 : i32
    %1 = arith.extui %0 : i1 to i32
    %c0_i32_0 = arith.constant 0 : i32
    %2 = arith.cmpi ne, %1, %c0_i32_0 : i32
    scf.if %2 {
      %cst_10 = arith.constant 0.000000e+00 : f32
      %12 = vector.broadcast %cst_10 : f32 to vector<8x128xf32>
      %c0_11 = arith.constant 0 : index
      %c0_12 = arith.constant 0 : index
      %13 = vector.load %arg9[%c0_11, %c0_12] : memref<8x128xf32, #tpu.memory_space<vmem>>, vector<8x128xf32>
      tpu.vector_store %arg9[%c0_11, %c0_12], %12 {strides = array<i32>} : memref<8x128xf32, #tpu.memory_space<vmem>>, vector<8x128xf32>,
    } else {
    }
    %c0 = arith.constant 0 : index
    %c0_1 = arith.constant 0 : index
    %3 = vector.load %arg9[%c0, %c0_1] : memref<8x128xf32, #tpu.memory_space<vmem>>, vector<8x128xf32>
    %c0_2 = arith.constant 0 : index
    %c0_3 = arith.constant 0 : index
    %4 = vector.load %arg2[%c0_2, %c0_3] : memref<8x256xbf16, #tpu.memory_space<vmem>>, vector<8x256xbf16>
    %c0_4 = arith.constant 0 : index
    %c0_5 = arith.constant 0 : index
    %5 = vector.load %arg3[%c0_4, %c0_5] : memref<256x128xbf16, #tpu.memory_space<vmem>>, vector<256x128xbf16>
    %cst = arith.constant dense<0.000000e+00> : vector<8x128xf32>
    %6 = tpu.matmul %4, %5, %cst {dimension_numbers = #tpu.dot_dimension_numbers<[1], [0], [0], [1], [0, 0, 1, 1], [], []>} : vector<8x256xbf16>, vector<256x128xbf16>, vector<8x128xf32> -> vector<8x128xf32>
    %7 = arith.addf %3, %6 : vector<8x128xf32>
    %c0_6 = arith.constant 0 : index
    %c0_7 = arith.constant 0 : index
    %8 = vector.load %arg9[%c0_6, %c0_7] : memref<8x128xf32, #tpu.memory_space<vmem>>, vector<8x128xf32>
    tpu.vector_store %arg9[%c0_6, %c0_7], %7 {strides = array<i32>} : memref<8x128xf32, #tpu.memory_space<vmem>>, vector<8x128xf32>,
    %c0_i32_8 = arith.constant 0 : i32
    %9 = arith.cmpi eq, %arg1, %c0_i32_8 : i32
    %10 = arith.extui %9 : i1 to i32
    %c0_i32_9 = arith.constant 0 : i32
    %11 = arith.cmpi ne, %10, %c0_i32_9 : i32
    scf.if %11 {
      %c0_10 = arith.constant 0 : index
      %c0_11 = arith.constant 0 : index
      %12 = vector.load %arg9[%c0_10, %c0_11] : memref<8x128xf32, #tpu.memory_space<vmem>>, vector<8x128xf32>
      %c0_12 = arith.constant 0 : index
      %c0_13 = arith.constant 0 : index
      %13 = vector.load %arg4[%c0_12, %c0_13] : memref<1x128xf32, #tpu.memory_space<vmem>>, vector<1x128xf32>
      %14 = vector.broadcast %13 : vector<1x128xf32> to vector<8x128xf32>
      %15 = arith.addf %12, %14 : vector<8x128xf32>
      %c0_14 = arith.constant 0 : index
      %c0_15 = arith.constant 0 : index
      %16 = vector.load %arg5[%c0_14, %c0_15] : memref<8x128xf32, #tpu.memory_space<vmem>>, vector<8x128xf32>
      %17 = arith.addf %15, %16 : vector<8x128xf32>
      %cst_16 = arith.constant dense<0.000000e+00> : vector<8xf32>
      %18 = vector.multi_reduction <add>, %17, %cst_16 [1] : vector<8x128xf32> to vector<8xf32>
      %19 = vector.shape_cast %18 : vector<8xf32> to vector<8x1xf32>
      %cst_17 = arith.constant 1.280000e+02 : f32
      %20 = vector.broadcast %cst_17 : f32 to vector<8x1xf32>
      %21 = arith.divf %19, %20 : vector<8x1xf32>
      %22 = vector.broadcast %21 : vector<8x1xf32> to vector<8x128xf32>
      %23 = arith.subf %17, %22 : vector<8x128xf32>
      %24 = arith.mulf %23, %23 : vector<8x128xf32>
      %cst_18 = arith.constant dense<0.000000e+00> : vector<8xf32>
      %25 = vector.multi_reduction <add>, %24, %cst_18 [1] : vector<8x128xf32> to vector<8xf32>
      %26 = vector.shape_cast %25 : vector<8xf32> to vector<8x1xf32>
      %cst_19 = arith.constant 1.280000e+02 : f32
      %27 = vector.broadcast %cst_19 : f32 to vector<8x1xf32>
      %28 = arith.divf %26, %27 : vector<8x1xf32>
      %cst_20 = arith.constant 9.99999996E-13 : f32
      %29 = vector.broadcast %cst_20 : f32 to vector<8x1xf32>
      %30 = arith.addf %28, %29 : vector<8x1xf32>
      %31 = math.rsqrt %30 : vector<8x1xf32>
      %32 = vector.broadcast %31 : vector<8x1xf32> to vector<8x128xf32>
      %33 = arith.mulf %23, %32 : vector<8x128xf32>
      %c0_21 = arith.constant 0 : index
      %c0_22 = arith.constant 0 : index
      %34 = vector.load %arg6[%c0_21, %c0_22] : memref<1x128xf32, #tpu.memory_space<vmem>>, vector<1x128xf32>
      %35 = vector.broadcast %34 : vector<1x128xf32> to vector<8x128xf32>
      %36 = arith.mulf %33, %35 : vector<8x128xf32>
      %c0_23 = arith.constant 0 : index
      %c0_24 = arith.constant 0 : index
      %37 = vector.load %arg7[%c0_23, %c0_24] : memref<1x128xf32, #tpu.memory_space<vmem>>, vector<1x128xf32>
      %38 = vector.broadcast %37 : vector<1x128xf32> to vector<8x128xf32>
      %39 = arith.addf %36, %38 : vector<8x128xf32>
      %c0_25 = arith.constant 0 : index
      %c0_26 = arith.constant 0 : index
      %40 = vector.load %arg8[%c0_25, %c0_26] : memref<8x128xf32, #tpu.memory_space<vmem>>, vector<8x128xf32>
      tpu.vector_store %arg8[%c0_25, %c0_26], %39 {strides = array<i32>} : memref<8x128xf32, #tpu.memory_space<vmem>>, vector<8x128xf32>,
    } else {
    }
    return
  }
  func.func @transform_0(%arg0: i32, %arg1: i32) -> (i32, i32) {
    %c0_i32 = arith.constant 0 : i32
    return %arg0, %arg1 : i32, i32
  }
  func.func @transform_1(%arg0: i32, %arg1: i32) -> (i32, i32) {
    %c0_i32 = arith.constant 0 : i32
    %c0_i32_0 = arith.constant 0 : i32
    return %arg1, %c0_i32 : i32, i32
  }
  func.func @transform_2(%arg0: i32, %arg1: i32) -> (i32, i32) {
    %c0_i32 = arith.constant 0 : i32
    %c0_i32_0 = arith.constant 0 : i32
    %c0_i32_1 = arith.constant 0 : i32
    return %c0_i32, %c0_i32_0 : i32, i32
  }
  func.func @transform_3(%arg0: i32, %arg1: i32) -> (i32, i32) {
    %c0_i32 = arith.constant 0 : i32
    %c0_i32_0 = arith.constant 0 : i32
    return %arg0, %c0_i32 : i32, i32
  }
  func.func @transform_4(%arg0: i32, %arg1: i32) -> (i32, i32) {
    %c0_i32 = arith.constant 0 : i32
    %c0_i32_0 = arith.constant 0 : i32
    %c0_i32_1 = arith.constant 0 : i32
    return %c0_i32, %c0_i32_0 : i32, i32
  }
  func.func @transform_5(%arg0: i32, %arg1: i32) -> (i32, i32) {
    %c0_i32 = arith.constant 0 : i32
    %c0_i32_0 = arith.constant 0 : i32
    %c0_i32_1 = arith.constant 0 : i32
    return %c0_i32, %c0_i32_0 : i32, i32
  }
  func.func @transform_6(%arg0: i32, %arg1: i32) -> (i32, i32) {
    %c0_i32 = arith.constant 0 : i32
    %c0_i32_0 = arith.constant 0 : i32
    return %arg0, %c0_i32 : i32, i32
  }
}

module attributes {stable_mosaic.version = 11 : i64} {
  func.func @_matmul_bias_kernel(%arg0: i32, %arg1: i32, %arg2: memref<8x128xf32, #tpu.memory_space<vmem>>, %arg3: memref<128x384xbf16, #tpu.memory_space<vmem>>, %arg4: memref<1x384xf32, #tpu.memory_space<vmem>>, %arg5: memref<8x384xf32, #tpu.memory_space<vmem>>) attributes {dimension_semantics = [#tpu.dimension_semantics<parallel>, #tpu.dimension_semantics<parallel>], iteration_bounds = array<i64: 1, 2>, scalar_prefetch = 0 : i64, scratch_operands = 0 : i64, tpu.core_type = #tpu.core_type<tc>, window_params = [{transform_indices = @transform_0, window_bounds = array<i64: 8, 128>}, {transform_indices = @transform_1, window_bounds = array<i64: 128, 384>}, {transform_indices = @transform_2, window_bounds = array<i64: 1, 384>}, {transform_indices = @transform_3, window_bounds = array<i64: 8, 384>}]} {
    %c0 = arith.constant 0 : index
    %c0_0 = arith.constant 0 : index
    %0 = vector.load %arg2[%c0, %c0_0] : memref<8x128xf32, #tpu.memory_space<vmem>>, vector<8x128xf32>
    %1 = arith.truncf %0 : vector<8x128xf32> to vector<8x128xbf16>
    %c0_1 = arith.constant 0 : index
    %c0_2 = arith.constant 0 : index
    %2 = vector.load %arg3[%c0_1, %c0_2] : memref<128x384xbf16, #tpu.memory_space<vmem>>, vector<128x384xbf16>
    %cst = arith.constant dense<0.000000e+00> : vector<8x384xf32>
    %3 = tpu.matmul %1, %2, %cst {dimension_numbers = #tpu.dot_dimension_numbers<[1], [0], [0], [1], [0, 0, 1, 1], [], []>} : vector<8x128xbf16>, vector<128x384xbf16>, vector<8x384xf32> -> vector<8x384xf32>
    %c0_3 = arith.constant 0 : index
    %c0_4 = arith.constant 0 : index
    %4 = vector.load %arg4[%c0_3, %c0_4] : memref<1x384xf32, #tpu.memory_space<vmem>>, vector<1x384xf32>
    %5 = vector.broadcast %4 : vector<1x384xf32> to vector<8x384xf32>
    %6 = arith.addf %3, %5 : vector<8x384xf32>
    %c0_5 = arith.constant 0 : index
    %c0_6 = arith.constant 0 : index
    %7 = vector.load %arg5[%c0_5, %c0_6] : memref<8x384xf32, #tpu.memory_space<vmem>>, vector<8x384xf32>
    tpu.vector_store %arg5[%c0_5, %c0_6], %6 {strides = array<i32>} : memref<8x384xf32, #tpu.memory_space<vmem>>, vector<8x384xf32>,
    return
  }
  func.func @transform_0(%arg0: i32, %arg1: i32) -> (i32, i32) {
    %c0_i32 = arith.constant 0 : i32
    %c0_i32_0 = arith.constant 0 : i32
    return %arg1, %c0_i32 : i32, i32
  }
  func.func @transform_1(%arg0: i32, %arg1: i32) -> (i32, i32) {
    %c0_i32 = arith.constant 0 : i32
    %c0_i32_0 = arith.constant 0 : i32
    return %c0_i32, %arg0 : i32, i32
  }
  func.func @transform_2(%arg0: i32, %arg1: i32) -> (i32, i32) {
    %c0_i32 = arith.constant 0 : i32
    %c0_i32_0 = arith.constant 0 : i32
    return %c0_i32, %arg0 : i32, i32
  }
  func.func @transform_3(%arg0: i32, %arg1: i32) -> (i32, i32) {
    %c0_i32 = arith.constant 0 : i32
    return %arg1, %arg0 : i32, i32
  }
}

module attributes {stable_mosaic.version = 11 : i64} {
  func.func @_linear_add_ln_kernel(%arg0: i32, %arg1: i32, %arg2: memref<8x256xbf16, #tpu.memory_space<vmem>>, %arg3: memref<256x128xbf16, #tpu.memory_space<vmem>>, %arg4: memref<1x128xf32, #tpu.memory_space<vmem>>, %arg5: memref<8x128xf32, #tpu.memory_space<vmem>>, %arg6: memref<1x128xf32, #tpu.memory_space<vmem>>, %arg7: memref<1x128xf32, #tpu.memory_space<vmem>>, %arg8: memref<8x128xf32, #tpu.memory_space<vmem>>, %arg9: memref<8x128xf32, #tpu.memory_space<vmem>>) attributes {dimension_semantics = [#tpu.dimension_semantics<parallel>, #tpu.dimension_semantics<arbitrary>], iteration_bounds = array<i64: 2, 1>, scalar_prefetch = 0 : i64, scratch_operands = 1 : i64, tpu.core_type = #tpu.core_type<tc>, window_params = [{transform_indices = @transform_0, window_bounds = array<i64: 8, 256>}, {transform_indices = @transform_1, window_bounds = array<i64: 256, 128>}, {pipeline_mode = #tpu.pipeline_mode<synchronous>, transform_indices = @transform_2, window_bounds = array<i64: 1, 128>}, {transform_indices = @transform_3, window_bounds = array<i64: 8, 128>}, {pipeline_mode = #tpu.pipeline_mode<synchronous>, transform_indices = @transform_4, window_bounds = array<i64: 1, 128>}, {pipeline_mode = #tpu.pipeline_mode<synchronous>, transform_indices = @transform_5, window_bounds = array<i64: 1, 128>}, {transform_indices = @transform_6, window_bounds = array<i64: 8, 128>}]} {
    %c0_i32 = arith.constant 0 : i32
    %0 = arith.cmpi eq, %arg1, %c0_i32 : i32
    %1 = arith.extui %0 : i1 to i32
    %c0_i32_0 = arith.constant 0 : i32
    %2 = arith.cmpi ne, %1, %c0_i32_0 : i32
    scf.if %2 {
      %cst_10 = arith.constant 0.000000e+00 : f32
      %12 = vector.broadcast %cst_10 : f32 to vector<8x128xf32>
      %c0_11 = arith.constant 0 : index
      %c0_12 = arith.constant 0 : index
      %13 = vector.load %arg9[%c0_11, %c0_12] : memref<8x128xf32, #tpu.memory_space<vmem>>, vector<8x128xf32>
      tpu.vector_store %arg9[%c0_11, %c0_12], %12 {strides = array<i32>} : memref<8x128xf32, #tpu.memory_space<vmem>>, vector<8x128xf32>,
    } else {
    }
    %c0 = arith.constant 0 : index
    %c0_1 = arith.constant 0 : index
    %3 = vector.load %arg9[%c0, %c0_1] : memref<8x128xf32, #tpu.memory_space<vmem>>, vector<8x128xf32>
    %c0_2 = arith.constant 0 : index
    %c0_3 = arith.constant 0 : index
    %4 = vector.load %arg2[%c0_2, %c0_3] : memref<8x256xbf16, #tpu.memory_space<vmem>>, vector<8x256xbf16>
    %c0_4 = arith.constant 0 : index
    %c0_5 = arith.constant 0 : index
    %5 = vector.load %arg3[%c0_4, %c0_5] : memref<256x128xbf16, #tpu.memory_space<vmem>>, vector<256x128xbf16>
    %cst = arith.constant dense<0.000000e+00> : vector<8x128xf32>
    %6 = tpu.matmul %4, %5, %cst {dimension_numbers = #tpu.dot_dimension_numbers<[1], [0], [0], [1], [0, 0, 1, 1], [], []>} : vector<8x256xbf16>, vector<256x128xbf16>, vector<8x128xf32> -> vector<8x128xf32>
    %7 = arith.addf %3, %6 : vector<8x128xf32>
    %c0_6 = arith.constant 0 : index
    %c0_7 = arith.constant 0 : index
    %8 = vector.load %arg9[%c0_6, %c0_7] : memref<8x128xf32, #tpu.memory_space<vmem>>, vector<8x128xf32>
    tpu.vector_store %arg9[%c0_6, %c0_7], %7 {strides = array<i32>} : memref<8x128xf32, #tpu.memory_space<vmem>>, vector<8x128xf32>,
    %c0_i32_8 = arith.constant 0 : i32
    %9 = arith.cmpi eq, %arg1, %c0_i32_8 : i32
    %10 = arith.extui %9 : i1 to i32
    %c0_i32_9 = arith.constant 0 : i32
    %11 = arith.cmpi ne, %10, %c0_i32_9 : i32
    scf.if %11 {
      %c0_10 = arith.constant 0 : index
      %c0_11 = arith.constant 0 : index
      %12 = vector.load %arg9[%c0_10, %c0_11] : memref<8x128xf32, #tpu.memory_space<vmem>>, vector<8x128xf32>
      %c0_12 = arith.constant 0 : index
      %c0_13 = arith.constant 0 : index
      %13 = vector.load %arg4[%c0_12, %c0_13] : memref<1x128xf32, #tpu.memory_space<vmem>>, vector<1x128xf32>
      %14 = vector.broadcast %13 : vector<1x128xf32> to vector<8x128xf32>
      %15 = arith.addf %12, %14 : vector<8x128xf32>
      %c0_14 = arith.constant 0 : index
      %c0_15 = arith.constant 0 : index
      %16 = vector.load %arg5[%c0_14, %c0_15] : memref<8x128xf32, #tpu.memory_space<vmem>>, vector<8x128xf32>
      %17 = arith.addf %15, %16 : vector<8x128xf32>
      %cst_16 = arith.constant dense<0.000000e+00> : vector<8xf32>
      %18 = vector.multi_reduction <add>, %17, %cst_16 [1] : vector<8x128xf32> to vector<8xf32>
      %19 = vector.shape_cast %18 : vector<8xf32> to vector<8x1xf32>
      %cst_17 = arith.constant 1.280000e+02 : f32
      %20 = vector.broadcast %cst_17 : f32 to vector<8x1xf32>
      %21 = arith.divf %19, %20 : vector<8x1xf32>
      %22 = vector.broadcast %21 : vector<8x1xf32> to vector<8x128xf32>
      %23 = arith.subf %17, %22 : vector<8x128xf32>
      %24 = arith.mulf %23, %23 : vector<8x128xf32>
      %cst_18 = arith.constant dense<0.000000e+00> : vector<8xf32>
      %25 = vector.multi_reduction <add>, %24, %cst_18 [1] : vector<8x128xf32> to vector<8xf32>
      %26 = vector.shape_cast %25 : vector<8xf32> to vector<8x1xf32>
      %cst_19 = arith.constant 1.280000e+02 : f32
      %27 = vector.broadcast %cst_19 : f32 to vector<8x1xf32>
      %28 = arith.divf %26, %27 : vector<8x1xf32>
      %cst_20 = arith.constant 9.99999996E-13 : f32
      %29 = vector.broadcast %cst_20 : f32 to vector<8x1xf32>
      %30 = arith.addf %28, %29 : vector<8x1xf32>
      %31 = math.rsqrt %30 : vector<8x1xf32>
      %32 = vector.broadcast %31 : vector<8x1xf32> to vector<8x128xf32>
      %33 = arith.mulf %23, %32 : vector<8x128xf32>
      %c0_21 = arith.constant 0 : index
      %c0_22 = arith.constant 0 : index
      %34 = vector.load %arg6[%c0_21, %c0_22] : memref<1x128xf32, #tpu.memory_space<vmem>>, vector<1x128xf32>
      %35 = vector.broadcast %34 : vector<1x128xf32> to vector<8x128xf32>
      %36 = arith.mulf %33, %35 : vector<8x128xf32>
      %c0_23 = arith.constant 0 : index
      %c0_24 = arith.constant 0 : index
      %37 = vector.load %arg7[%c0_23, %c0_24] : memref<1x128xf32, #tpu.memory_space<vmem>>, vector<1x128xf32>
      %38 = vector.broadcast %37 : vector<1x128xf32> to vector<8x128xf32>
      %39 = arith.addf %36, %38 : vector<8x128xf32>
      %c0_25 = arith.constant 0 : index
      %c0_26 = arith.constant 0 : index
      %40 = vector.load %arg8[%c0_25, %c0_26] : memref<8x128xf32, #tpu.memory_space<vmem>>, vector<8x128xf32>
      tpu.vector_store %arg8[%c0_25, %c0_26], %39 {strides = array<i32>} : memref<8x128xf32, #tpu.memory_space<vmem>>, vector<8x128xf32>,
    } else {
    }
    return
  }
  func.func @transform_0(%arg0: i32, %arg1: i32) -> (i32, i32) {
    %c0_i32 = arith.constant 0 : i32
    return %arg0, %arg1 : i32, i32
  }
  func.func @transform_1(%arg0: i32, %arg1: i32) -> (i32, i32) {
    %c0_i32 = arith.constant 0 : i32
    %c0_i32_0 = arith.constant 0 : i32
    return %arg1, %c0_i32 : i32, i32
  }
  func.func @transform_2(%arg0: i32, %arg1: i32) -> (i32, i32) {
    %c0_i32 = arith.constant 0 : i32
    %c0_i32_0 = arith.constant 0 : i32
    %c0_i32_1 = arith.constant 0 : i32
    return %c0_i32, %c0_i32_0 : i32, i32
  }
  func.func @transform_3(%arg0: i32, %arg1: i32) -> (i32, i32) {
    %c0_i32 = arith.constant 0 : i32
    %c0_i32_0 = arith.constant 0 : i32
    return %arg0, %c0_i32 : i32, i32
  }
  func.func @transform_4(%arg0: i32, %arg1: i32) -> (i32, i32) {
    %c0_i32 = arith.constant 0 : i32
    %c0_i32_0 = arith.constant 0 : i32
    %c0_i32_1 = arith.constant 0 : i32
    return %c0_i32, %c0_i32_0 : i32, i32
  }
  func.func @transform_5(%arg0: i32, %arg1: i32) -> (i32, i32) {
    %c0_i32 = arith.constant 0 : i32
    %c0_i32_0 = arith.constant 0 : i32
    %c0_i32_1 = arith.constant 0 : i32
    return %c0_i32, %c0_i32_0 : i32, i32
  }
  func.func @transform_6(%arg0: i32, %arg1: i32) -> (i32, i32) {
    %c0_i32 = arith.constant 0 : i32
    %c0_i32_0 = arith.constant 0 : i32
    return %arg0, %c0_i32 : i32, i32
  }
}

</mosaic_0001>

<llo_original>
// kernel: custom_bert_model.10
$region0: #{custom_bert_model.10}
  #allocation0 [shape = 'u32[]', space=smem, size = 0x4, offset = 0x4, fixed_abs, tag = 'smem constant byte address 0x4 - core index']
  #allocation1 [shape = 'u32[144,128]{1,0:T(1,128)}', space=vmem, size = 0x12000, scoped, tag = 'internal scratch']
  %s0 = inlined_call_operand.hbm [shape: f32[16,128], index: 0, kind: input, shape index: {}]
  %s1 = inlined_call_operand.hbm [shape: bf16[128,384], index: 1, kind: input, shape index: {}]
  %s2 = inlined_call_operand.vmem [shape: f32[1,384], index: 2, kind: input, shape index: {}]
  %s3 = inlined_call_operand.vmem [shape: f32[16,384], index: 3, kind: output, shape index: {}]
  %s4 = sld [smem:[#allocation0]]
  $region53: #{custom_bert_model.10} parent=0
    _
  %s6 = ssub.s32 1, %s4
  %s7 = scalar_select 0, %s6, %s4
  $region1: #{custom_bert_model.10} parent=0
    #allocation2 [shape = 'u8[8192]{0}', space=vmem, size = 0x2000, scoped, tag = 'input window, operand 0']
    #allocation3 [shape = 's32[2]{0}', space=sflag, size = 0x8, scoped, tag = 'scoped memory for custom_bert_model.10']
    #allocation4 [shape = 'u8[98304]{0}', space=vmem, size = 0x18000, scoped, tag = 'input window, operand 1, single buffered']
    #allocation5 [shape = 's32[1]{0}', space=sflag, size = 0x4, scoped, tag = 'scoped memory for custom_bert_model.10']
    %8 = vsyncpa [#allocation3], 0
    %s9 = scalar_lea.sflag [#allocation3], 1
    %10 = vsyncpa %s9, 0
    %11 = vsyncpa [#allocation5], 0
    loop: start=0, step=1, limit=4
    $region2: #{custom_bert_model.10} parent=1 // loop_pre_header
      _
    $region3: #{custom_bert_model.10} parent=1 // loop_header
      %s13 = sphi 0, %s17
      %p14 = scmp.ge.s32.totalorder %s13, 4
      %s20 = sphi 0, %s32
      %s21 = sphi 0, %s28
      %s22 = sphi 0, %s20
      %s23 = sphi 0, %s21
      %s24 = sphi 0, %s22
      %s25 = sphi 0, %s23
      %s35 = sphi 0, %s37
      %s38 = sphi 0, %s35
      %s39 = sphi 0, %s38
      %s55 = sphi 0, %s39
      %s61 = sphi 0, %s63
      %s64 = sphi 0, %s61
      %s65 = sphi 0, %s64
      %s81 = sphi 0, %s65
      %s87 = sphi 0, %s89
      %s90 = sphi 0, %s87
      %s91 = sphi 0, %s90
      %s107 = sphi 0, %s91
      %s115 = sphi 0, %s117
      %s118 = sphi 0, %s115
      %s119 = sphi 0, %s118
      %s135 = sphi 0, %s119
    $region4: #{custom_bert_model.10} parent=1 // loop_header_branch
      %16 = sbr.rel (%p14) target = $region8
    $region5: #{custom_bert_model.10} parent=1 // loop_body
      %s18 = ssub.s32 %s13, 1
      %s19 = ssub.s32 %s13, 2
      %s26 = sadd.s32 1, %s21
      %p27 = scmp.ge.s32.totalorder %s26, 2
      %s28 = scalar_select %p27, 0, %s26
      %s29 = sadd.s32 1, %s20
      %s30 = scalar_select %p27, %s29, %s20
      %p31 = scmp.ge.s32.totalorder %s30, 1
      %s32 = scalar_select %p31, 0, %s30
      %s33 = ssub.s32 %s21, %s28
      %p34 = scmp.eq.s32.totalorder %s33, 0
      %s36 = sadd.s32 %s35, 1
      %s37 = scalar_select %p34, %s35, %s36
      %p40 = pneg %p34
      %p41 = scmp.eq.s32.totalorder %s13, 1
      %p42 = por %p40, %p41
      %p43 = scmp.ne.s32.totalorder %s35, %s38
      %p44 = scmp.eq.s32.totalorder %s13, 0
      %p45 = por %p43, %p44
      %p46 = scmp.ne.s32.totalorder %s35, %s38
      %p47 = scmp.eq.s32.totalorder %s18, 1
      %p48 = por %p46, %p47
      %p49 = scmp.ne.s32.totalorder %s38, %s39
      %p50 = scmp.eq.s32.totalorder %s18, 0
      %p51 = por %p49, %p50
      %p52 = scmp.ne.s32.totalorder %s38, %s39
      %p53 = scmp.eq.s32.totalorder %s19, 1
      %p54 = por %p52, %p53
      %p56 = scmp.ne.s32.totalorder %s39, %s55
      %p57 = scmp.eq.s32.totalorder %s19, 0
      %p58 = por %p56, %p57
      %s59 = ssub.s32 %s20, %s32
      %p60 = scmp.eq.s32.totalorder %s59, 0
      %s62 = sadd.s32 %s61, 1
      %s63 = scalar_select %p60, %s61, %s62
      %p66 = pneg %p60
      %p67 = scmp.eq.s32.totalorder %s13, 1
      %p68 = por %p66, %p67
      %p69 = scmp.ne.s32.totalorder %s61, %s64
      %p70 = scmp.eq.s32.totalorder %s13, 0
      %p71 = por %p69, %p70
      %p72 = scmp.ne.s32.totalorder %s61, %s64
      %p73 = scmp.eq.s32.totalorder %s18, 1
      %p74 = por %p72, %p73
      %p75 = scmp.ne.s32.totalorder %s64, %s65
      %p76 = scmp.eq.s32.totalorder %s18, 0
      %p77 = por %p75, %p76
      %p78 = scmp.ne.s32.totalorder %s64, %s65
      %p79 = scmp.eq.s32.totalorder %s19, 1
      %p80 = por %p78, %p79
      %p82 = scmp.ne.s32.totalorder %s65, %s81
      %p83 = scmp.eq.s32.totalorder %s19, 0
      %p84 = por %p82, %p83
      %s85 = ssub.s32 %s20, %s32
      %p86 = scmp.eq.s32.totalorder %s85, 0
      %s88 = sadd.s32 %s87, 1
      %s89 = scalar_select %p86, %s87, %s88
      %p92 = pneg %p86
      %p93 = scmp.eq.s32.totalorder %s13, 1
      %p94 = por %p92, %p93
      %p95 = scmp.ne.s32.totalorder %s87, %s90
      %p96 = scmp.eq.s32.totalorder %s13, 0
      %p97 = por %p95, %p96
      %p98 = scmp.ne.s32.totalorder %s87, %s90
      %p99 = scmp.eq.s32.totalorder %s18, 1
      %p100 = por %p98, %p99
      %p101 = scmp.ne.s32.totalorder %s90, %s91
      %p102 = scmp.eq.s32.totalorder %s18, 0
      %p103 = por %p101, %p102
      %p104 = scmp.ne.s32.totalorder %s90, %s91
      %p105 = scmp.eq.s32.totalorder %s19, 1
      %p106 = por %p104, %p105
      %p108 = scmp.ne.s32.totalorder %s91, %s107
      %p109 = scmp.eq.s32.totalorder %s19, 0
      %p110 = por %p108, %p109
      %s111 = ssub.s32 %s21, %s28
      %s112 = ssub.s32 %s20, %s32
      %s113 = sor.u32 %s111, %s112
      %p114 = scmp.eq.s32.totalorder %s113, 0
      %s116 = sadd.s32 %s115, 1
      %s117 = scalar_select %p114, %s115, %s116
      %p120 = pneg %p114
      %p121 = scmp.eq.s32.totalorder %s13, 1
      %p122 = por %p120, %p121
      %p123 = scmp.ne.s32.totalorder %s115, %s118
      %p124 = scmp.eq.s32.totalorder %s13, 0
      %p125 = por %p123, %p124
      %p126 = scmp.ne.s32.totalorder %s115, %s118
      %p127 = scmp.eq.s32.totalorder %s18, 1
      %p128 = por %p126, %p127
      %p129 = scmp.ne.s32.totalorder %s118, %s119
      %p130 = scmp.eq.s32.totalorder %s18, 0
      %p131 = por %p129, %p130
      %p132 = scmp.ne.s32.totalorder %s118, %s119
      %p133 = scmp.eq.s32.totalorder %s19, 1
      %p134 = por %p132, %p133
      %p136 = scmp.ne.s32.totalorder %s119, %s135
      %p137 = scmp.eq.s32.totalorder %s19, 0
      %p138 = por %p136, %p137
      %p139 = scmp.le.s32.totalorder 1, %s13
      %p140 = scmp.lt.s32.totalorder %s13, 3
      %p141 = pnand %p139, %p140
      %p142 = pneg %p141
      // Predicated region
      $region9: #{custom_bert_model.10} parent=5 // pred_check
        _
      $region10: #{custom_bert_model.10} parent=5 // pred_check_branch
        %144 = sbr.rel (%p141) target = $region12
      $region11: #{custom_bert_model.10} parent=5 // pred_region
        %s145 = ssub.s32 %s13, 1
        // Predicated region
        $region13: #{custom_bert_model.10} parent=11 // pred_check
          %p146 = pneg %p77
        $region14: #{custom_bert_model.10} parent=11 // pred_check_branch
          %148 = sbr.rel (%p146) target = $region16
        $region15: #{custom_bert_model.10} parent=11 // pred_region
          %s149 = smul.u32 3, %s22
          %s151 = ssub.s32 3072, 3072
          %152 = vsyncadd [#allocation5], %s151
          %s153 = smul.addr %s149, 64
          %s154 = scalar_lea.hbm %s1, %s153
          %s155 = sshll.u32 [#allocation4], 4
          %s156 = int_to_ptr.vmem [resolvable:$true] %s155
          %161 = dma.hbm_to_vmem [thread:$0]  %s154, 3072, %s156, [#allocation5], 192, 192, 12
        $region16: #{custom_bert_model.10} parent=11 // pred_fallthru
          _
        // Predicated region
        $region17: #{custom_bert_model.10} parent=11 // pred_check
          %p162 = pneg %p103
        $region18: #{custom_bert_model.10} parent=11 // pred_check_branch
          %164 = sbr.rel (%p162) target = $region20
        $region19: #{custom_bert_model.10} parent=11 // pred_region
          %s165 = smul.u32 3, %s22
          %p166 = scmp.lt.s32.totalorder %s165, 2
          %s167 = scalar_select %p166, %s165, 2
          %s168 = scalar_lea.vmem %s2, %s167
          %s169 = smul.u32 3, %s22
        $region20: #{custom_bert_model.10} parent=11 // pred_fallthru
          _
      $region12: #{custom_bert_model.10} parent=5 // pred_fallthru
        _
      %p170 = scmp.lt.s32.totalorder %s13, 2
      // Predicated region
      $region21: #{custom_bert_model.10} parent=5 // pred_check
        %p171 = pneg %p170
      $region22: #{custom_bert_model.10} parent=5 // pred_check_branch
        %173 = sbr.rel (%p171) target = $region24
      $region23: #{custom_bert_model.10} parent=5 // pred_region
        // Predicated region
        $region25: #{custom_bert_model.10} parent=23 // pred_check
          %p174 = pneg %p45
        $region26: #{custom_bert_model.10} parent=23 // pred_check_branch
          %176 = sbr.rel (%p174) target = $region28
        $region27: #{custom_bert_model.10} parent=23 // pred_region
          %s177 = sand.u32 %s35, 1
          %s178 = scalar_lea.sflag [#allocation3], %s177
          %s179 = sand.u32 %s35, 1
          %s180 = smul.addr %s179, 8
          %s181 = scalar_lea.vmem [#allocation2], %s180
          %s183 = ssub.s32 128, 128
          %184 = vsyncadd %s178, %s183
          %s185 = smul.addr %s21, 128
          %s186 = scalar_lea.hbm %s0, %s185
          %s188 = sshll.u32 %s181, 4
          %s189 = int_to_ptr.vmem [resolvable:$true] %s188
          %191 = dma.hbm_to_vmem [thread:$0]  %s186, 128, %s189, %s178
        $region28: #{custom_bert_model.10} parent=23 // pred_fallthru
          _
      $region24: #{custom_bert_model.10} parent=5 // pred_fallthru
        _
      %p192 = scmp.le.s32.totalorder 1, %s13
      %p193 = scmp.lt.s32.totalorder %s13, 3
      %p194 = pnand %p192, %p193
      %p195 = pneg %p194
      // Predicated region
      $region29: #{custom_bert_model.10} parent=5 // pred_check
        _
      $region30: #{custom_bert_model.10} parent=5 // pred_check_branch
        %197 = sbr.rel (%p194) target = $region32
      $region31: #{custom_bert_model.10} parent=5 // pred_region
        %s198 = ssub.s32 %s13, 1
        %s199 = sand.u32 %s38, 1
        %s200 = scalar_lea.sflag [#allocation3], %s199
        %s201 = sand.u32 %s38, 1
        %s202 = smul.addr %s201, 8
        %s203 = scalar_lea.vmem [#allocation2], %s202
        // Predicated region
        $region33: #{custom_bert_model.10} parent=31 // pred_check
          %p204 = pneg %p51
        $region34: #{custom_bert_model.10} parent=31 // pred_check_branch
          %206 = sbr.rel (%p204) target = $region36
        $region35: #{custom_bert_model.10} parent=31 // pred_region
          %207 = dma.done %s200, 128
        $region36: #{custom_bert_model.10} parent=31 // pred_fallthru
          _
        // Predicated region
        $region37: #{custom_bert_model.10} parent=31 // pred_check
          %p208 = pneg %p77
        $region38: #{custom_bert_model.10} parent=31 // pred_check_branch
          %210 = sbr.rel (%p208) target = $region40
        $region39: #{custom_bert_model.10} parent=31 // pred_region
          %211 = dma.done [#allocation5], 3072
        $region40: #{custom_bert_model.10} parent=31 // pred_fallthru
          _
        %s212 = sand.u32 %s38, 1
        %s213 = scalar_lea.sflag [#allocation3], %s212
        %s214 = sand.u32 %s38, 1
        %s215 = smul.addr %s214, 8
        %s216 = scalar_lea.vmem [#allocation2], %s215
        %p217 = pneg %p51
        %p218 = pneg %p48
        %p219 = pneg %p77
        %p220 = pneg %p74
        %s221 = smul.u32 3, %s22
        %p222 = scmp.lt.s32.totalorder %s221, 2
        %s223 = scalar_select %p222, %s221, 2
        %s224 = scalar_lea.vmem %s2, %s223
        %p225 = pneg %p103
        %p226 = pneg %p100
        %p227 = pneg %p131
        %p228 = pneg %p128
        %s229 = smul.u32 3, %s22
        %p230 = scmp.lt.s32.totalorder %s23, 1
        %s231 = scalar_select %p230, %s23, 1
        %p232 = scmp.lt.s32.totalorder %s229, 2
        %s233 = scalar_select %p232, %s229, 2
        %s234 = smul.addr %s231, 3
        %s235 = sadd.s32 %s233, %s234
        %s236 = smul.addr %s235, 8
        %s237 = scalar_lea.vmem %s3, %s236
        %s238 = smul.u32 3, %s22
        %s239 = smul.u32 3, %s22
        %p240 = scmp.lt.s32.totalorder %s239, 2
        %s241 = scalar_select %p240, %s239, 2
        %s242 = scalar_lea.vmem %s2, %s241
        %s243 = smul.u32 3, %s22
        %s244 = smul.u32 3, %s22
        %p245 = scmp.lt.s32.totalorder %s23, 1
        %s246 = scalar_select %p245, %s23, 1
        %p247 = scmp.lt.s32.totalorder %s244, 2
        %s248 = scalar_select %p247, %s244, 2
        %s249 = smul.addr %s246, 3
        %s250 = sadd.s32 %s248, %s249
        %s251 = smul.addr %s250, 8
        %s252 = scalar_lea.vmem %s3, %s251
        %s253 = smul.u32 3, %s22
        %v255 = vld [vmem:[%s203] sm:$0xff]
        %v256 = vpack.c.bf16 %v255, %v255
        %v257 = vld [vmem:[#allocation4] sm:$0xff]
        %v258 = vld [vmem:[#allocation4 + $0x8] sm:$0xf]
        %v259 = vld [vmem:[#allocation4 + $0xc] sm:$0xff]
        %v260 = vld [vmem:[#allocation4 + $0x14] sm:$0xf]
        %v261 = vld [vmem:[#allocation4 + $0x18] sm:$0xff]
        %v262 = vld [vmem:[#allocation4 + $0x20] sm:$0xf]
        %v263 = vld [vmem:[#allocation4 + $0x24] sm:$0xff]
        %v264 = vld [vmem:[#allocation4 + $0x2c] sm:$0xf]
        %v265 = vld [vmem:[#allocation4 + $0x30] sm:$0xff]
        %v266 = vld [vmem:[#allocation4 + $0x38] sm:$0xf]
        %v267 = vld [vmem:[#allocation4 + $0x3c] sm:$0xff]
        %v268 = vld [vmem:[#allocation4 + $0x44] sm:$0xf]
        %v269 = vld [vmem:[#allocation4 + $0x48] sm:$0xff]
        %v270 = vld [vmem:[#allocation4 + $0x50] sm:$0xf]
        %v271 = vld [vmem:[#allocation4 + $0x54] sm:$0xff]
        %v272 = vld [vmem:[#allocation4 + $0x5c] sm:$0xf]
        %v273 = vld [vmem:[#allocation4 + $0x60] sm:$0xff]
        %v274 = vld [vmem:[#allocation4 + $0x68] sm:$0xf]
        %v275 = vld [vmem:[#allocation4 + $0x6c] sm:$0xff]
        %v276 = vld [vmem:[#allocation4 + $0x74] sm:$0xf]
        %v277 = vld [vmem:[#allocation4 + $0x78] sm:$0xff]
        %v278 = vld [vmem:[#allocation4 + $0x80] sm:$0xf]
        %v279 = vld [vmem:[#allocation4 + $0x84] sm:$0xff]
        %v280 = vld [vmem:[#allocation4 + $0x8c] sm:$0xf]
        %v281 = vld [vmem:[#allocation4 + $0x90] sm:$0xff]
        %v282 = vld [vmem:[#allocation4 + $0x98] sm:$0xf]
        %v283 = vld [vmem:[#allocation4 + $0x9c] sm:$0xff]
        %v284 = vld [vmem:[#allocation4 + $0xa4] sm:$0xf]
        %v285 = vld [vmem:[#allocation4 + $0xa8] sm:$0xff]
        %v286 = vld [vmem:[#allocation4 + $0xb0] sm:$0xf]
        %v287 = vld [vmem:[#allocation4 + $0xb4] sm:$0xff]
        %v288 = vld [vmem:[#allocation4 + $0xbc] sm:$0xf]
        %v289 = vld [vmem:[%s242] sm:$0x7]
        %v291 = vlaneseq
        %v292 = vshrl.u32 %v291, 7
        %v293 = vsub.s32 0, %v292
        %v294 = vrot.slane %v289, %v293
        %v295 = vlaneseq
        %v296 = vshrl.u32 %v295, 7
        %v297 = vsub.s32 1, %v296
        %v298 = vrot.slane %v289, %v297
        %v299 = vlaneseq
        %v300 = vshrl.u32 %v299, 7
        %v301 = vsub.s32 2, %v300
        %v302 = vrot.slane %v289, %v301
        %v338 = vunpack.c.l.b16 %v257
        %v339 = vunpack.c.h.b16 %v257
        %v340 = vunpack.c.l.b16 %v258
        %v341 = vunpack.c.l.b16 %v259
        %v342 = vunpack.c.h.b16 %v259
        %v343 = vunpack.c.l.b16 %v260
        %v344 = vunpack.c.l.b16 %v261
        %v345 = vunpack.c.h.b16 %v261
        %v346 = vunpack.c.l.b16 %v262
        %v347 = vunpack.c.l.b16 %v263
        %v348 = vunpack.c.h.b16 %v263
        %v349 = vunpack.c.l.b16 %v264
        %v350 = vunpack.c.l.b16 %v265
        %v351 = vunpack.c.h.b16 %v265
        %v352 = vunpack.c.l.b16 %v266
        %v353 = vunpack.c.l.b16 %v267
        %v354 = vunpack.c.h.b16 %v267
        %v355 = vunpack.c.l.b16 %v268
        %v356 = vunpack.c.l.b16 %v269
        %v357 = vunpack.c.h.b16 %v269
        %v358 = vunpack.c.l.b16 %v270
        %v359 = vunpack.c.l.b16 %v271
        %v360 = vunpack.c.h.b16 %v271
        %v361 = vunpack.c.l.b16 %v272
        %v362 = vunpack.c.l.b16 %v273
        %v363 = vunpack.c.h.b16 %v273
        %v364 = vunpack.c.l.b16 %v274
        %v365 = vunpack.c.l.b16 %v275
        %v366 = vunpack.c.h.b16 %v275
        %v367 = vunpack.c.l.b16 %v276
        %v368 = vunpack.c.l.b16 %v277
        %v369 = vunpack.c.h.b16 %v277
        %v370 = vunpack.c.l.b16 %v278
        %v371 = vunpack.c.l.b16 %v279
        %v372 = vunpack.c.h.b16 %v279
        %v373 = vunpack.c.l.b16 %v280
        %v374 = vunpack.c.l.b16 %v281
        %v375 = vunpack.c.h.b16 %v281
        %v376 = vunpack.c.l.b16 %v282
        %v377 = vunpack.c.l.b16 %v283
        %v378 = vunpack.c.h.b16 %v283
        %v379 = vunpack.c.l.b16 %v284
        %v380 = vunpack.c.l.b16 %v285
        %v381 = vunpack.c.h.b16 %v285
        %v382 = vunpack.c.l.b16 %v286
        %v383 = vunpack.c.l.b16 %v287
        %v384 = vunpack.c.h.b16 %v287
        %v385 = vunpack.c.l.b16 %v288
        %v386 = vpack.c.b16 %v341, %v338
        %v387 = vpack.c.b16 %v342, %v339
        %v388 = vpack.c.b16 %v343, %v340
        %v389 = vpack.c.b16 %v347, %v344
        %v390 = vpack.c.b16 %v348, %v345
        %v391 = vpack.c.b16 %v349, %v346
        %v392 = vpack.c.b16 %v353, %v350
        %v393 = vpack.c.b16 %v354, %v351
        %v394 = vpack.c.b16 %v355, %v352
        %v395 = vpack.c.b16 %v359, %v356
        %v396 = vpack.c.b16 %v360, %v357
        %v397 = vpack.c.b16 %v361, %v358
        %v398 = vpack.c.b16 %v365, %v362
        %v399 = vpack.c.b16 %v366, %v363
        %v400 = vpack.c.b16 %v367, %v364
        %v401 = vpack.c.b16 %v371, %v368
        %v402 = vpack.c.b16 %v372, %v369
        %v403 = vpack.c.b16 %v373, %v370
        %v404 = vpack.c.b16 %v377, %v374
        %v405 = vpack.c.b16 %v378, %v375
        %v406 = vpack.c.b16 %v379, %v376
        %v407 = vpack.c.b16 %v383, %v380
        %v408 = vpack.c.b16 %v384, %v381
        %v409 = vpack.c.b16 %v385, %v382
        %434 = vmatprep.subr.bf16.mxu0 %v387
        %435 = vmatpush1.bf16.msra.mxu0 %v386
        %436 = vmatprep.subr.bf16.mxu0 %v390
        %437 = vmatpush1.bf16.msra.mxu0 %v389
        %438 = vmatprep.subr.bf16.mxu0 %v393
        %439 = vmatpush1.bf16.msra.mxu0 %v392
        %440 = vmatprep.subr.bf16.mxu0 %v396
        %441 = vmatpush1.bf16.msra.mxu0 %v395
        %442 = vmatprep.subr.bf16.mxu0 %v399
        %443 = vmatpush1.bf16.msra.mxu0 %v398
        %444 = vmatprep.subr.bf16.mxu0 %v402
        %445 = vmatpush1.bf16.msra.mxu0 %v401
        %446 = vmatprep.subr.bf16.mxu0 %v405
        %447 = vmatpush1.bf16.msra.mxu0 %v404
        %448 = vmatprep.subr.bf16.mxu0 %v408
        %449 = vmatpush1.bf16.msra.mxu0 %v407
        %450 = vmatprep.subr.bf16.mxu0 0
        %451 = vmatpush1.bf16.msra.mxu0 0
        %452 = vmatprep.subr.bf16.mxu0 0
        %453 = vmatpush1.bf16.msra.mxu0 0
        %454 = vmatprep.subr.bf16.mxu0 0
        %455 = vmatpush1.bf16.msra.mxu0 0
        %456 = vmatprep.subr.bf16.mxu0 0
        %457 = vmatpush1.bf16.msra.mxu0 0
        %458 = vmatprep.subr.bf16.mxu0 0
        %459 = vmatpush1.bf16.msra.mxu0 0
        %460 = vmatprep.subr.bf16.mxu0 0
        %461 = vmatpush1.bf16.msra.mxu0 0
        %462 = vmatprep.subr.bf16.mxu0 0
        %463 = vmatpush1.bf16.msra.mxu0 0
        %464 = vmatprep.subr.bf16.mxu0 0
        %465 = vmatpush1.bf16.msra.mxu0 0
        %466 = vmatprep.mubr.bf16.mxu0 0
        %467 = vmatmul.mubr.bf16.gmra.mrb[0].mxu0 %v256
        %v468 = vpop.f32.mrb[0].mxu0
        %v469 = vadd.f32 %v294, %v468
        %v470 = vpop.f32.mrb[0].mxu0
        %v471 = vadd.f32 %v298, %v470
        %v472 = vpop.f32.mrb[0].mxu0
        %v473 = vpop.f32.mrb[0].mxu0
        %474 = vdwg.mxu0
        %475 = vmatprep.subr.bf16.mxu0 0
        %476 = vmatpush1.bf16.msra.mxu0 %v388
        %477 = vmatprep.subr.bf16.mxu0 0
        %478 = vmatpush1.bf16.msra.mxu0 %v391
        %479 = vmatprep.subr.bf16.mxu0 0
        %480 = vmatpush1.bf16.msra.mxu0 %v394
        %481 = vmatprep.subr.bf16.mxu0 0
        %482 = vmatpush1.bf16.msra.mxu0 %v397
        %483 = vmatprep.subr.bf16.mxu0 0
        %484 = vmatpush1.bf16.msra.mxu0 %v400
        %485 = vmatprep.subr.bf16.mxu0 0
        %486 = vmatpush1.bf16.msra.mxu0 %v403
        %487 = vmatprep.subr.bf16.mxu0 0
        %488 = vmatpush1.bf16.msra.mxu0 %v406
        %489 = vmatprep.subr.bf16.mxu0 0
        %490 = vmatpush1.bf16.msra.mxu0 %v409
        %491 = vmatprep.subr.bf16.mxu0 0
        %492 = vmatpush1.bf16.msra.mxu0 0
        %493 = vmatprep.subr.bf16.mxu0 0
        %494 = vmatpush1.bf16.msra.mxu0 0
        %495 = vmatprep.subr.bf16.mxu0 0
        %496 = vmatpush1.bf16.msra.mxu0 0
        %497 = vmatprep.subr.bf16.mxu0 0
        %498 = vmatpush1.bf16.msra.mxu0 0
        %499 = vmatprep.subr.bf16.mxu0 0
        %500 = vmatpush1.bf16.msra.mxu0 0
        %501 = vmatprep.subr.bf16.mxu0 0
        %502 = vmatpush1.bf16.msra.mxu0 0
        %503 = vmatprep.subr.bf16.mxu0 0
        %504 = vmatpush1.bf16.msra.mxu0 0
        %505 = vmatprep.subr.bf16.mxu0 0
        %506 = vmatpush1.bf16.msra.mxu0 0
        %507 = vmatprep.mubr.bf16.mxu0 0
        %508 = vmatmul.mubr.bf16.gmra.mrb[0].mxu0 %v256
        %v509 = vpop.f32.mrb[0].mxu0
        %v510 = vadd.f32 %v302, %v509
        %v511 = vpop.f32.mrb[0].mxu0
        %v512 = vpop.f32.mrb[0].mxu0
        %v513 = vpop.f32.mrb[0].mxu0
        %514 = vdwg.mxu0
        %515 = vst [vmem:[%s252] sm:$0xff] %v469
        %516 = vst [vmem:[%s252 + $0x8] sm:$0xff] %v471
        %517 = vst [vmem:[%s252 + $0x10] sm:$0xff] %v510
        %s518 = smul.u32 3, %s22
        %p519 = scmp.lt.s32.totalorder %s23, 1
        %s520 = scalar_select %p519, %s23, 1
        %p521 = scmp.lt.s32.totalorder %s518, 2
        %s522 = scalar_select %p521, %s518, 2
        %s523 = smul.addr %s520, 3
        %s524 = sadd.s32 %s522, %s523
        %s525 = smul.addr %s524, 8
        %s526 = scalar_lea.vmem %s3, %s525
        // Predicated region
        $region41: #{custom_bert_model.10} parent=31 // pred_check
          %p527 = pneg %p128
        $region42: #{custom_bert_model.10} parent=31 // pred_check_branch
          %529 = sbr.rel (%p527) target = $region44
        $region43: #{custom_bert_model.10} parent=31 // pred_region
          %s530 = smul.u32 3, %s22
        $region44: #{custom_bert_model.10} parent=31 // pred_fallthru
          _
      $region32: #{custom_bert_model.10} parent=5 // pred_fallthru
        _
      %p531 = scmp.le.s32.totalorder 2, %s13
      // Predicated region
      $region45: #{custom_bert_model.10} parent=5 // pred_check
        %p532 = pneg %p531
      $region46: #{custom_bert_model.10} parent=5 // pred_check_branch
        %534 = sbr.rel (%p532) target = $region48
      $region47: #{custom_bert_model.10} parent=5 // pred_region
        %s535 = ssub.s32 %s13, 2
        // Predicated region
        $region49: #{custom_bert_model.10} parent=47 // pred_check
          %p536 = pneg %p134
        $region50: #{custom_bert_model.10} parent=47 // pred_check_branch
          %538 = sbr.rel (%p536) target = $region52
        $region51: #{custom_bert_model.10} parent=47 // pred_region
          %s539 = smul.u32 3, %s24
          %p540 = scmp.lt.s32.totalorder %s25, 1
          %s541 = scalar_select %p540, %s25, 1
          %p542 = scmp.lt.s32.totalorder %s539, 2
          %s543 = scalar_select %p542, %s539, 2
          %s544 = smul.addr %s541, 3
          %s545 = sadd.s32 %s543, %s544
          %s546 = smul.addr %s545, 8
          %s547 = scalar_lea.vmem %s3, %s546
        $region52: #{custom_bert_model.10} parent=47 // pred_fallthru
          _
      $region48: #{custom_bert_model.10} parent=5 // pred_fallthru
        _
    $region6: #{custom_bert_model.10} parent=1 // loop_footer
      %s17 = sadd.s32 1, %s13
    $region7: #{custom_bert_model.10} parent=1 // loop_footer_branch
      %12 = sbr.rel target = $region3
    $region8: #{custom_bert_model.10} parent=1 // loop_exit
      _
    %548 = vsyncpa [#allocation3], 1
    %s549 = scalar_lea.sflag [#allocation3], 1
    %550 = vsyncpa %s549, 1
    %551 = vsyncpa [#allocation5], 1

// kernel: custom_bert_model.13
$region0: #{custom_bert_model.13}
  #allocation0 [shape = 'u32[]', space=smem, size = 0x4, offset = 0x4, fixed_abs, tag = 'smem constant byte address 0x4 - core index']
  #allocation1 [shape = 'u32[144,128]{1,0:T(1,128)}', space=vmem, size = 0x12000, scoped, tag = 'internal scratch']
  %s0 = inlined_call_operand.vmem [shape: f32[16,128], index: 0, kind: input, shape index: {}]
  %s1 = inlined_call_operand.vmem [shape: bf16[128,256], index: 1, kind: input, shape index: {}]
  %s2 = inlined_call_operand.vmem [shape: f32[1,256], index: 2, kind: input, shape index: {}]
  %s3 = inlined_call_operand.vmem [shape: bf16[16,256], index: 3, kind: output, shape index: {}]
  %s4 = sld [smem:[#allocation0]]
  $region45: #{custom_bert_model.13} parent=0
    _
  %s6 = ssub.s32 1, %s4
  %s7 = scalar_select 0, %s6, %s4
  loop: start=0, step=1, limit=4
  $region2: #{custom_bert_model.13} parent=0 // loop_pre_header
    _
  $region3: #{custom_bert_model.13} parent=0 // loop_header
    %s9 = sphi 0, %s13
    %p10 = scmp.ge.s32.totalorder %s9, 4
    %s16 = sphi 0, %s28
    %s17 = sphi 0, %s24
    %s18 = sphi 0, %s16
    %s19 = sphi 0, %s17
    %s20 = sphi 0, %s18
    %s21 = sphi 0, %s19
    %s31 = sphi 0, %s33
    %s34 = sphi 0, %s31
    %s35 = sphi 0, %s34
    %s51 = sphi 0, %s35
    %s57 = sphi 0, %s59
    %s60 = sphi 0, %s57
    %s61 = sphi 0, %s60
    %s77 = sphi 0, %s61
    %s83 = sphi 0, %s85
    %s86 = sphi 0, %s83
    %s87 = sphi 0, %s86
    %s103 = sphi 0, %s87
    %s111 = sphi 0, %s113
    %s114 = sphi 0, %s111
    %s115 = sphi 0, %s114
    %s131 = sphi 0, %s115
  $region4: #{custom_bert_model.13} parent=0 // loop_header_branch
    %12 = sbr.rel (%p10) target = $region8
  $region5: #{custom_bert_model.13} parent=0 // loop_body
    %s14 = ssub.s32 %s9, 1
    %s15 = ssub.s32 %s9, 2
    %s22 = sadd.s32 1, %s17
    %p23 = scmp.ge.s32.totalorder %s22, 2
    %s24 = scalar_select %p23, 0, %s22
    %s25 = sadd.s32 1, %s16
    %s26 = scalar_select %p23, %s25, %s16
    %p27 = scmp.ge.s32.totalorder %s26, 1
    %s28 = scalar_select %p27, 0, %s26
    %s29 = ssub.s32 %s17, %s24
    %p30 = scmp.eq.s32.totalorder %s29, 0
    %s32 = sadd.s32 %s31, 1
    %s33 = scalar_select %p30, %s31, %s32
    %p36 = pneg %p30
    %p37 = scmp.eq.s32.totalorder %s9, 1
    %p38 = por %p36, %p37
    %p39 = scmp.ne.s32.totalorder %s31, %s34
    %p40 = scmp.eq.s32.totalorder %s9, 0
    %p41 = por %p39, %p40
    %p42 = scmp.ne.s32.totalorder %s31, %s34
    %p43 = scmp.eq.s32.totalorder %s14, 1
    %p44 = por %p42, %p43
    %p45 = scmp.ne.s32.totalorder %s34, %s35
    %p46 = scmp.eq.s32.totalorder %s14, 0
    %p47 = por %p45, %p46
    %p48 = scmp.ne.s32.totalorder %s34, %s35
    %p49 = scmp.eq.s32.totalorder %s15, 1
    %p50 = por %p48, %p49
    %p52 = scmp.ne.s32.totalorder %s35, %s51
    %p53 = scmp.eq.s32.totalorder %s15, 0
    %p54 = por %p52, %p53
    %s55 = ssub.s32 %s16, %s28
    %p56 = scmp.eq.s32.totalorder %s55, 0
    %s58 = sadd.s32 %s57, 1
    %s59 = scalar_select %p56, %s57, %s58
    %p62 = pneg %p56
    %p63 = scmp.eq.s32.totalorder %s9, 1
    %p64 = por %p62, %p63
    %p65 = scmp.ne.s32.totalorder %s57, %s60
    %p66 = scmp.eq.s32.totalorder %s9, 0
    %p67 = por %p65, %p66
    %p68 = scmp.ne.s32.totalorder %s57, %s60
    %p69 = scmp.eq.s32.totalorder %s14, 1
    %p70 = por %p68, %p69
    %p71 = scmp.ne.s32.totalorder %s60, %s61
    %p72 = scmp.eq.s32.totalorder %s14, 0
    %p73 = por %p71, %p72
    %p74 = scmp.ne.s32.totalorder %s60, %s61
    %p75 = scmp.eq.s32.totalorder %s15, 1
    %p76 = por %p74, %p75
    %p78 = scmp.ne.s32.totalorder %s61, %s77
    %p79 = scmp.eq.s32.totalorder %s15, 0
    %p80 = por %p78, %p79
    %s81 = ssub.s32 %s16, %s28
    %p82 = scmp.eq.s32.totalorder %s81, 0
    %s84 = sadd.s32 %s83, 1
    %s85 = scalar_select %p82, %s83, %s84
    %p88 = pneg %p82
    %p89 = scmp.eq.s32.totalorder %s9, 1
    %p90 = por %p88, %p89
    %p91 = scmp.ne.s32.totalorder %s83, %s86
    %p92 = scmp.eq.s32.totalorder %s9, 0
    %p93 = por %p91, %p92
    %p94 = scmp.ne.s32.totalorder %s83, %s86
    %p95 = scmp.eq.s32.totalorder %s14, 1
    %p96 = por %p94, %p95
    %p97 = scmp.ne.s32.totalorder %s86, %s87
    %p98 = scmp.eq.s32.totalorder %s14, 0
    %p99 = por %p97, %p98
    %p100 = scmp.ne.s32.totalorder %s86, %s87
    %p101 = scmp.eq.s32.totalorder %s15, 1
    %p102 = por %p100, %p101
    %p104 = scmp.ne.s32.totalorder %s87, %s103
    %p105 = scmp.eq.s32.totalorder %s15, 0
    %p106 = por %p104, %p105
    %s107 = ssub.s32 %s17, %s24
    %s108 = ssub.s32 %s16, %s28
    %s109 = sor.u32 %s107, %s108
    %p110 = scmp.eq.s32.totalorder %s109, 0
    %s112 = sadd.s32 %s111, 1
    %s113 = scalar_select %p110, %s111, %s112
    %p116 = pneg %p110
    %p117 = scmp.eq.s32.totalorder %s9, 1
    %p118 = por %p116, %p117
    %p119 = scmp.ne.s32.totalorder %s111, %s114
    %p120 = scmp.eq.s32.totalorder %s9, 0
    %p121 = por %p119, %p120
    %p122 = scmp.ne.s32.totalorder %s111, %s114
    %p123 = scmp.eq.s32.totalorder %s14, 1
    %p124 = por %p122, %p123
    %p125 = scmp.ne.s32.totalorder %s114, %s115
    %p126 = scmp.eq.s32.totalorder %s14, 0
    %p127 = por %p125, %p126
    %p128 = scmp.ne.s32.totalorder %s114, %s115
    %p129 = scmp.eq.s32.totalorder %s15, 1
    %p130 = por %p128, %p129
    %p132 = scmp.ne.s32.totalorder %s115, %s131
    %p133 = scmp.eq.s32.totalorder %s15, 0
    %p134 = por %p132, %p133
    %p135 = scmp.le.s32.totalorder 1, %s9
    %p136 = scmp.lt.s32.totalorder %s9, 3
    %p137 = pnand %p135, %p136
    %p138 = pneg %p137
    // Predicated region
    $region9: #{custom_bert_model.13} parent=5 // pred_check
      _
    $region10: #{custom_bert_model.13} parent=5 // pred_check_branch
      %140 = sbr.rel (%p137) target = $region12
    $region11: #{custom_bert_model.13} parent=5 // pred_region
      %s141 = ssub.s32 %s9, 1
      // Predicated region
      $region13: #{custom_bert_model.13} parent=11 // pred_check
        %p142 = pneg %p73
      $region14: #{custom_bert_model.13} parent=11 // pred_check_branch
        %144 = sbr.rel (%p142) target = $region16
      $region15: #{custom_bert_model.13} parent=11 // pred_region
        %s145 = smul.u32 2, %s18
        %p146 = scmp.lt.s32.totalorder %s145, 1
        %s147 = scalar_select %p146, %s145, 1
        %s148 = smul.addr %s147, 4
        %s149 = scalar_lea.vmem %s1, %s148
        %s150 = smul.u32 2, %s18
      $region16: #{custom_bert_model.13} parent=11 // pred_fallthru
        _
      // Predicated region
      $region17: #{custom_bert_model.13} parent=11 // pred_check
        %p151 = pneg %p99
      $region18: #{custom_bert_model.13} parent=11 // pred_check_branch
        %153 = sbr.rel (%p151) target = $region20
      $region19: #{custom_bert_model.13} parent=11 // pred_region
        %s154 = smul.u32 2, %s18
        %p155 = scmp.lt.s32.totalorder %s154, 1
        %s156 = scalar_select %p155, %s154, 1
        %s157 = scalar_lea.vmem %s2, %s156
        %s158 = smul.u32 2, %s18
      $region20: #{custom_bert_model.13} parent=11 // pred_fallthru
        _
    $region12: #{custom_bert_model.13} parent=5 // pred_fallthru
      _
    %p159 = scmp.lt.s32.totalorder %s9, 2
    // Predicated region
    $region21: #{custom_bert_model.13} parent=5 // pred_check
      %p160 = pneg %p159
    $region22: #{custom_bert_model.13} parent=5 // pred_check_branch
      %162 = sbr.rel (%p160) target = $region24
    $region23: #{custom_bert_model.13} parent=5 // pred_region
      // Predicated region
      $region25: #{custom_bert_model.13} parent=23 // pred_check
        %p163 = pneg %p41
      $region26: #{custom_bert_model.13} parent=23 // pred_check_branch
        %165 = sbr.rel (%p163) target = $region28
      $region27: #{custom_bert_model.13} parent=23 // pred_region
        %p166 = scmp.lt.s32.totalorder %s17, 1
        %s167 = scalar_select %p166, %s17, 1
        %s168 = smul.addr %s167, 8
        %s169 = scalar_lea.vmem %s0, %s168
      $region28: #{custom_bert_model.13} parent=23 // pred_fallthru
        _
    $region24: #{custom_bert_model.13} parent=5 // pred_fallthru
      _
    %p170 = scmp.le.s32.totalorder 1, %s9
    %p171 = scmp.lt.s32.totalorder %s9, 3
    %p172 = pnand %p170, %p171
    %p173 = pneg %p172
    // Predicated region
    $region29: #{custom_bert_model.13} parent=5 // pred_check
      _
    $region30: #{custom_bert_model.13} parent=5 // pred_check_branch
      %175 = sbr.rel (%p172) target = $region32
    $region31: #{custom_bert_model.13} parent=5 // pred_region
      %s176 = ssub.s32 %s9, 1
      %p177 = scmp.lt.s32.totalorder %s19, 1
      %s178 = scalar_select %p177, %s19, 1
      %s179 = smul.addr %s178, 8
      %s180 = scalar_lea.vmem %s0, %s179
      %p181 = pneg %p47
      %p182 = pneg %p44
      %s183 = smul.u32 2, %s18
      %p184 = scmp.lt.s32.totalorder %s183, 1
      %s185 = scalar_select %p184, %s183, 1
      %s186 = smul.addr %s185, 4
      %s187 = scalar_lea.vmem %s1, %s186
      %p188 = pneg %p73
      %p189 = pneg %p70
      %s190 = smul.u32 2, %s18
      %p191 = scmp.lt.s32.totalorder %s190, 1
      %s192 = scalar_select %p191, %s190, 1
      %s193 = scalar_lea.vmem %s2, %s192
      %p194 = pneg %p99
      %p195 = pneg %p96
      %p196 = pneg %p127
      %p197 = pneg %p124
      %s198 = smul.u32 2, %s18
      %p199 = scmp.lt.s32.totalorder %s19, 1
      %s200 = scalar_select %p199, %s19, 1
      %p201 = scmp.lt.s32.totalorder %s198, 1
      %s202 = scalar_select %p201, %s198, 1
      %s203 = smul.addr %s200, 2
      %s204 = sadd.s32 %s202, %s203
      %s205 = smul.addr %s204, 4
      %s206 = scalar_lea.vmem %s3, %s205
      %p207 = scmp.lt.s32.totalorder %s19, 1
      %s208 = scalar_select %p207, %s19, 1
      %s209 = smul.addr %s208, 8
      %s210 = scalar_lea.vmem %s0, %s209
      %s211 = smul.u32 2, %s18
      %p212 = scmp.lt.s32.totalorder %s211, 1
      %s213 = scalar_select %p212, %s211, 1
      %s214 = smul.addr %s213, 4
      %s215 = scalar_lea.vmem %s1, %s214
      %s216 = smul.u32 2, %s18
      %s217 = smul.u32 2, %s18
      %p218 = scmp.lt.s32.totalorder %s217, 1
      %s219 = scalar_select %p218, %s217, 1
      %s220 = scalar_lea.vmem %s2, %s219
      %s221 = smul.u32 2, %s18
      %s222 = smul.u32 2, %s18
      %p223 = scmp.lt.s32.totalorder %s19, 1
      %s224 = scalar_select %p223, %s19, 1
      %p225 = scmp.lt.s32.totalorder %s222, 1
      %s226 = scalar_select %p225, %s222, 1
      %s227 = smul.addr %s224, 2
      %s228 = sadd.s32 %s226, %s227
      %s229 = smul.addr %s228, 4
      %s230 = scalar_lea.vmem %s3, %s229
      %s231 = smul.u32 2, %s18
      %v233 = vld [vmem:[%s210] sm:$0xff]
      %v234 = vpack.c.bf16 %v233, %v233
      %v235 = vld [vmem:[%s215] sm:$0xff]
      %v236 = vld [vmem:[%s215 + $0x8] sm:$0xff]
      %v237 = vld [vmem:[%s215 + $0x10] sm:$0xff]
      %v238 = vld [vmem:[%s215 + $0x18] sm:$0xff]
      %v239 = vld [vmem:[%s215 + $0x20] sm:$0xff]
      %v240 = vld [vmem:[%s215 + $0x28] sm:$0xff]
      %v241 = vld [vmem:[%s215 + $0x30] sm:$0xff]
      %v242 = vld [vmem:[%s215 + $0x38] sm:$0xff]
      %v243 = vld [vmem:[%s215 + $0x40] sm:$0xff]
      %v244 = vld [vmem:[%s215 + $0x48] sm:$0xff]
      %v245 = vld [vmem:[%s215 + $0x50] sm:$0xff]
      %v246 = vld [vmem:[%s215 + $0x58] sm:$0xff]
      %v247 = vld [vmem:[%s215 + $0x60] sm:$0xff]
      %v248 = vld [vmem:[%s215 + $0x68] sm:$0xff]
      %v249 = vld [vmem:[%s215 + $0x70] sm:$0xff]
      %v250 = vld [vmem:[%s215 + $0x78] sm:$0xff]
      %v251 = vld [vmem:[%s220] sm:$0x3]
      %v253 = vlaneseq
      %v254 = vshrl.u32 %v253, 7
      %v255 = vsub.s32 0, %v254
      %v256 = vrot.slane %v251, %v255
      %v257 = vlaneseq
      %v258 = vshrl.u32 %v257, 7
      %v259 = vsub.s32 1, %v258
      %v260 = vrot.slane %v251, %v259
      %v279 = vunpack.c.l.b16 %v235
      %v280 = vunpack.c.h.b16 %v235
      %v281 = vunpack.c.l.b16 %v236
      %v282 = vunpack.c.h.b16 %v236
      %v283 = vunpack.c.l.b16 %v237
      %v284 = vunpack.c.h.b16 %v237
      %v285 = vunpack.c.l.b16 %v238
      %v286 = vunpack.c.h.b16 %v238
      %v287 = vunpack.c.l.b16 %v239
      %v288 = vunpack.c.h.b16 %v239
      %v289 = vunpack.c.l.b16 %v240
      %v290 = vunpack.c.h.b16 %v240
      %v291 = vunpack.c.l.b16 %v241
      %v292 = vunpack.c.h.b16 %v241
      %v293 = vunpack.c.l.b16 %v242
      %v294 = vunpack.c.h.b16 %v242
      %v295 = vunpack.c.l.b16 %v243
      %v296 = vunpack.c.h.b16 %v243
      %v297 = vunpack.c.l.b16 %v244
      %v298 = vunpack.c.h.b16 %v244
      %v299 = vunpack.c.l.b16 %v245
      %v300 = vunpack.c.h.b16 %v245
      %v301 = vunpack.c.l.b16 %v246
      %v302 = vunpack.c.h.b16 %v246
      %v303 = vunpack.c.l.b16 %v247
      %v304 = vunpack.c.h.b16 %v247
      %v305 = vunpack.c.l.b16 %v248
      %v306 = vunpack.c.h.b16 %v248
      %v307 = vunpack.c.l.b16 %v249
      %v308 = vunpack.c.h.b16 %v249
      %v309 = vunpack.c.l.b16 %v250
      %v310 = vunpack.c.h.b16 %v250
      %v311 = vpack.c.b16 %v281, %v279
      %v312 = vpack.c.b16 %v282, %v280
      %v313 = vpack.c.b16 %v285, %v283
      %v314 = vpack.c.b16 %v286, %v284
      %v315 = vpack.c.b16 %v289, %v287
      %v316 = vpack.c.b16 %v290, %v288
      %v317 = vpack.c.b16 %v293, %v291
      %v318 = vpack.c.b16 %v294, %v292
      %v319 = vpack.c.b16 %v297, %v295
      %v320 = vpack.c.b16 %v298, %v296
      %v321 = vpack.c.b16 %v301, %v299
      %v322 = vpack.c.b16 %v302, %v300
      %v323 = vpack.c.b16 %v305, %v303
      %v324 = vpack.c.b16 %v306, %v304
      %v325 = vpack.c.b16 %v309, %v307
      %v326 = vpack.c.b16 %v310, %v308
      %343 = vmatprep.subr.bf16.mxu0 %v312
      %344 = vmatpush1.bf16.msra.mxu0 %v311
      %345 = vmatprep.subr.bf16.mxu0 %v314
      %346 = vmatpush1.bf16.msra.mxu0 %v313
      %347 = vmatprep.subr.bf16.mxu0 %v316
      %348 = vmatpush1.bf16.msra.mxu0 %v315
      %349 = vmatprep.subr.bf16.mxu0 %v318
      %350 = vmatpush1.bf16.msra.mxu0 %v317
      %351 = vmatprep.subr.bf16.mxu0 %v320
      %352 = vmatpush1.bf16.msra.mxu0 %v319
      %353 = vmatprep.subr.bf16.mxu0 %v322
      %354 = vmatpush1.bf16.msra.mxu0 %v321
      %355 = vmatprep.subr.bf16.mxu0 %v324
      %356 = vmatpush1.bf16.msra.mxu0 %v323
      %357 = vmatprep.subr.bf16.mxu0 %v326
      %358 = vmatpush1.bf16.msra.mxu0 %v325
      %359 = vmatprep.subr.bf16.mxu0 0
      %360 = vmatpush1.bf16.msra.mxu0 0
      %361 = vmatprep.subr.bf16.mxu0 0
      %362 = vmatpush1.bf16.msra.mxu0 0
      %363 = vmatprep.subr.bf16.mxu0 0
      %364 = vmatpush1.bf16.msra.mxu0 0
      %365 = vmatprep.subr.bf16.mxu0 0
      %366 = vmatpush1.bf16.msra.mxu0 0
      %367 = vmatprep.subr.bf16.mxu0 0
      %368 = vmatpush1.bf16.msra.mxu0 0
      %369 = vmatprep.subr.bf16.mxu0 0
      %370 = vmatpush1.bf16.msra.mxu0 0
      %371 = vmatprep.subr.bf16.mxu0 0
      %372 = vmatpush1.bf16.msra.mxu0 0
      %373 = vmatprep.subr.bf16.mxu0 0
      %374 = vmatpush1.bf16.msra.mxu0 0
      %375 = vmatprep.mubr.bf16.mxu0 0
      %376 = vmatmul.mubr.bf16.gmra.mrb[0].mxu0 %v234
      %v377 = vpop.f32.mrb[0].mxu0
      %v378 = vadd.f32 %v256, %v377
      %v379 = vpop.f32.mrb[0].mxu0
      %v380 = vadd.f32 %v260, %v379
      %v381 = vpop.f32.mrb[0].mxu0
      %v382 = vpop.f32.mrb[0].mxu0
      %383 = vdwg.mxu0
      %v384 = vpack.c.bf16 %v378, %v378
      %v385 = vpack.c.bf16 %v380, %v380
      %v388 = vunpack.c.l.b16 %v384
      %v389 = vunpack.c.l.b16 %v385
      %v390 = vpack.c.b16 %v389, %v388
      %392 = vst [vmem:[%s230] sm:$0xff] %v390
      %s393 = smul.u32 2, %s18
      %p394 = scmp.lt.s32.totalorder %s19, 1
      %s395 = scalar_select %p394, %s19, 1
      %p396 = scmp.lt.s32.totalorder %s393, 1
      %s397 = scalar_select %p396, %s393, 1
      %s398 = smul.addr %s395, 2
      %s399 = sadd.s32 %s397, %s398
      %s400 = smul.addr %s399, 4
      %s401 = scalar_lea.vmem %s3, %s400
      // Predicated region
      $region33: #{custom_bert_model.13} parent=31 // pred_check
        %p402 = pneg %p124
      $region34: #{custom_bert_model.13} parent=31 // pred_check_branch
        %404 = sbr.rel (%p402) target = $region36
      $region35: #{custom_bert_model.13} parent=31 // pred_region
        %s405 = smul.u32 2, %s18
      $region36: #{custom_bert_model.13} parent=31 // pred_fallthru
        _
    $region32: #{custom_bert_model.13} parent=5 // pred_fallthru
      _
    %p406 = scmp.le.s32.totalorder 2, %s9
    // Predicated region
    $region37: #{custom_bert_model.13} parent=5 // pred_check
      %p407 = pneg %p406
    $region38: #{custom_bert_model.13} parent=5 // pred_check_branch
      %409 = sbr.rel (%p407) target = $region40
    $region39: #{custom_bert_model.13} parent=5 // pred_region
      %s410 = ssub.s32 %s9, 2
      // Predicated region
      $region41: #{custom_bert_model.13} parent=39 // pred_check
        %p411 = pneg %p130
      $region42: #{custom_bert_model.13} parent=39 // pred_check_branch
        %413 = sbr.rel (%p411) target = $region44
      $region43: #{custom_bert_model.13} parent=39 // pred_region
        %s414 = smul.u32 2, %s20
        %p415 = scmp.lt.s32.totalorder %s21, 1
        %s416 = scalar_select %p415, %s21, 1
        %p417 = scmp.lt.s32.totalorder %s414, 1
        %s418 = scalar_select %p417, %s414, 1
        %s419 = smul.addr %s416, 2
        %s420 = sadd.s32 %s418, %s419
        %s421 = smul.addr %s420, 4
        %s422 = scalar_lea.vmem %s3, %s421
      $region44: #{custom_bert_model.13} parent=39 // pred_fallthru
        _
    $region40: #{custom_bert_model.13} parent=5 // pred_fallthru
      _
  $region6: #{custom_bert_model.13} parent=0 // loop_footer
    %s13 = sadd.s32 1, %s9
  $region7: #{custom_bert_model.13} parent=0 // loop_footer_branch
    %8 = sbr.rel target = $region3
  $region8: #{custom_bert_model.13} parent=0 // loop_exit
    _

// kernel: custom_bert_model.11
$region0: #{custom_bert_model.11}
  #allocation0 [shape = 'u32[]', space=smem, size = 0x4, offset = 0x4, fixed_abs, tag = 'smem constant byte address 0x4 - core index']
  #allocation1 [shape = 'u32[144,128]{1,0:T(1,128)}', space=vmem, size = 0x12000, scoped, tag = 'internal scratch']
  %s0 = inlined_call_operand.vmem [shape: f32[16,384], index: 0, kind: input, shape index: {}]
  %s1 = inlined_call_operand.vmem [shape: bf16[128,128], index: 1, kind: input, shape index: {}]
  %s2 = inlined_call_operand.vmem [shape: f32[1,128], index: 2, kind: input, shape index: {}]
  %s3 = inlined_call_operand.vmem [shape: bf16[128,128], index: 3, kind: input, shape index: {}]
  %s4 = inlined_call_operand.vmem [shape: bf16[128,128], index: 4, kind: input, shape index: {}]
  %s5 = inlined_call_operand.vmem [shape: bf16[16,128], index: 5, kind: output, shape index: {}]
  %s6 = sld [smem:[#allocation0]]
  $region53: #{custom_bert_model.11} parent=0
    _
  %s8 = ssub.s32 1, %s6
  %s9 = scalar_select 0, %s8, %s6
  loop: start=0, step=1, limit=4
  $region2: #{custom_bert_model.11} parent=0 // loop_pre_header
    _
  $region3: #{custom_bert_model.11} parent=0 // loop_header
    %s11 = sphi 0, %s15
    %p12 = scmp.ge.s32.totalorder %s11, 4
    %s21 = sphi 0, %s23
    %s24 = sphi 0, %s21
    %s25 = sphi 0, %s24
    %s41 = sphi 0, %s25
    %s45 = sphi 0, %s45
    %s47 = sphi 0, %s45
    %s48 = sphi 0, %s47
    %s62 = sphi 0, %s48
    %s66 = sphi 0, %s66
    %s68 = sphi 0, %s66
    %s69 = sphi 0, %s68
    %s83 = sphi 0, %s69
    %s87 = sphi 0, %s87
    %s89 = sphi 0, %s87
    %s90 = sphi 0, %s89
    %s104 = sphi 0, %s90
    %s108 = sphi 0, %s108
    %s110 = sphi 0, %s108
    %s111 = sphi 0, %s110
    %s125 = sphi 0, %s111
    %s131 = sphi 0, %s133
    %s134 = sphi 0, %s131
    %s135 = sphi 0, %s134
    %s151 = sphi 0, %s135
  $region4: #{custom_bert_model.11} parent=0 // loop_header_branch
    %14 = sbr.rel (%p12) target = $region8
  $region5: #{custom_bert_model.11} parent=0 // loop_body
    %s16 = ssub.s32 %s11, 1
    %s17 = ssub.s32 %s11, 2
    %s18 = sadd.s32 %s11, 1
    %s19 = ssub.s32 %s11, %s18
    %p20 = scmp.eq.s32.totalorder %s19, 0
    %s22 = sadd.s32 %s21, 1
    %s23 = scalar_select %p20, %s21, %s22
    %p26 = pneg %p20
    %p27 = scmp.eq.s32.totalorder %s11, 1
    %p28 = por %p26, %p27
    %p29 = scmp.ne.s32.totalorder %s21, %s24
    %p30 = scmp.eq.s32.totalorder %s11, 0
    %p31 = por %p29, %p30
    %p32 = scmp.ne.s32.totalorder %s21, %s24
    %p33 = scmp.eq.s32.totalorder %s16, 1
    %p34 = por %p32, %p33
    %p35 = scmp.ne.s32.totalorder %s24, %s25
    %p36 = scmp.eq.s32.totalorder %s16, 0
    %p37 = por %p35, %p36
    %p38 = scmp.ne.s32.totalorder %s24, %s25
    %p39 = scmp.eq.s32.totalorder %s17, 1
    %p40 = por %p38, %p39
    %p42 = scmp.ne.s32.totalorder %s25, %s41
    %p43 = scmp.eq.s32.totalorder %s17, 0
    %p44 = por %p42, %p43
    %s46 = sadd.s32 %s45, 1
    %p49 = scmp.eq.s32.totalorder %s11, 1
    %p50 = scmp.ne.s32.totalorder %s45, %s47
    %p51 = scmp.eq.s32.totalorder %s11, 0
    %p52 = por %p50, %p51
    %p53 = scmp.ne.s32.totalorder %s45, %s47
    %p54 = scmp.eq.s32.totalorder %s16, 1
    %p55 = por %p53, %p54
    %p56 = scmp.ne.s32.totalorder %s47, %s48
    %p57 = scmp.eq.s32.totalorder %s16, 0
    %p58 = por %p56, %p57
    %p59 = scmp.ne.s32.totalorder %s47, %s48
    %p60 = scmp.eq.s32.totalorder %s17, 1
    %p61 = por %p59, %p60
    %p63 = scmp.ne.s32.totalorder %s48, %s62
    %p64 = scmp.eq.s32.totalorder %s17, 0
    %p65 = por %p63, %p64
    %s67 = sadd.s32 %s66, 1
    %p70 = scmp.eq.s32.totalorder %s11, 1
    %p71 = scmp.ne.s32.totalorder %s66, %s68
    %p72 = scmp.eq.s32.totalorder %s11, 0
    %p73 = por %p71, %p72
    %p74 = scmp.ne.s32.totalorder %s66, %s68
    %p75 = scmp.eq.s32.totalorder %s16, 1
    %p76 = por %p74, %p75
    %p77 = scmp.ne.s32.totalorder %s68, %s69
    %p78 = scmp.eq.s32.totalorder %s16, 0
    %p79 = por %p77, %p78
    %p80 = scmp.ne.s32.totalorder %s68, %s69
    %p81 = scmp.eq.s32.totalorder %s17, 1
    %p82 = por %p80, %p81
    %p84 = scmp.ne.s32.totalorder %s69, %s83
    %p85 = scmp.eq.s32.totalorder %s17, 0
    %p86 = por %p84, %p85
    %s88 = sadd.s32 %s87, 1
    %p91 = scmp.eq.s32.totalorder %s11, 1
    %p92 = scmp.ne.s32.totalorder %s87, %s89
    %p93 = scmp.eq.s32.totalorder %s11, 0
    %p94 = por %p92, %p93
    %p95 = scmp.ne.s32.totalorder %s87, %s89
    %p96 = scmp.eq.s32.totalorder %s16, 1
    %p97 = por %p95, %p96
    %p98 = scmp.ne.s32.totalorder %s89, %s90
    %p99 = scmp.eq.s32.totalorder %s16, 0
    %p100 = por %p98, %p99
    %p101 = scmp.ne.s32.totalorder %s89, %s90
    %p102 = scmp.eq.s32.totalorder %s17, 1
    %p103 = por %p101, %p102
    %p105 = scmp.ne.s32.totalorder %s90, %s104
    %p106 = scmp.eq.s32.totalorder %s17, 0
    %p107 = por %p105, %p106
    %s109 = sadd.s32 %s108, 1
    %p112 = scmp.eq.s32.totalorder %s11, 1
    %p113 = scmp.ne.s32.totalorder %s108, %s110
    %p114 = scmp.eq.s32.totalorder %s11, 0
    %p115 = por %p113, %p114
    %p116 = scmp.ne.s32.totalorder %s108, %s110
    %p117 = scmp.eq.s32.totalorder %s16, 1
    %p118 = por %p116, %p117
    %p119 = scmp.ne.s32.totalorder %s110, %s111
    %p120 = scmp.eq.s32.totalorder %s16, 0
    %p121 = por %p119, %p120
    %p122 = scmp.ne.s32.totalorder %s110, %s111
    %p123 = scmp.eq.s32.totalorder %s17, 1
    %p124 = por %p122, %p123
    %p126 = scmp.ne.s32.totalorder %s111, %s125
    %p127 = scmp.eq.s32.totalorder %s17, 0
    %p128 = por %p126, %p127
    %s129 = ssub.s32 %s11, %s18
    %p130 = scmp.eq.s32.totalorder %s129, 0
    %s132 = sadd.s32 %s131, 1
    %s133 = scalar_select %p130, %s131, %s132
    %p136 = pneg %p130
    %p137 = scmp.eq.s32.totalorder %s11, 1
    %p138 = por %p136, %p137
    %p139 = scmp.ne.s32.totalorder %s131, %s134
    %p140 = scmp.eq.s32.totalorder %s11, 0
    %p141 = por %p139, %p140
    %p142 = scmp.ne.s32.totalorder %s131, %s134
    %p143 = scmp.eq.s32.totalorder %s16, 1
    %p144 = por %p142, %p143
    %p145 = scmp.ne.s32.totalorder %s134, %s135
    %p146 = scmp.eq.s32.totalorder %s16, 0
    %p147 = por %p145, %p146
    %p148 = scmp.ne.s32.totalorder %s134, %s135
    %p149 = scmp.eq.s32.totalorder %s17, 1
    %p150 = por %p148, %p149
    %p152 = scmp.ne.s32.totalorder %s135, %s151
    %p153 = scmp.eq.s32.totalorder %s17, 0
    %p154 = por %p152, %p153
    %p155 = scmp.le.s32.totalorder 1, %s11
    %p156 = scmp.lt.s32.totalorder %s11, 3
    %p157 = pnand %p155, %p156
    %p158 = pneg %p157
    // Predicated region
    $region9: #{custom_bert_model.11} parent=5 // pred_check
      _
    $region10: #{custom_bert_model.11} parent=5 // pred_check_branch
      %160 = sbr.rel (%p157) target = $region12
    $region11: #{custom_bert_model.11} parent=5 // pred_region
      %s161 = ssub.s32 %s11, 1
      // Predicated region
      $region13: #{custom_bert_model.11} parent=11 // pred_check
        %p162 = pneg %p58
      $region14: #{custom_bert_model.11} parent=11 // pred_check_branch
        %164 = sbr.rel (%p162) target = $region16
      $region15: #{custom_bert_model.11} parent=11 // pred_region
        _
      $region16: #{custom_bert_model.11} parent=11 // pred_fallthru
        _
      // Predicated region
      $region17: #{custom_bert_model.11} parent=11 // pred_check
        %p165 = pneg %p79
      $region18: #{custom_bert_model.11} parent=11 // pred_check_branch
        %167 = sbr.rel (%p165) target = $region20
      $region19: #{custom_bert_model.11} parent=11 // pred_region
        _
      $region20: #{custom_bert_model.11} parent=11 // pred_fallthru
        _
      // Predicated region
      $region21: #{custom_bert_model.11} parent=11 // pred_check
        %p168 = pneg %p100
      $region22: #{custom_bert_model.11} parent=11 // pred_check_branch
        %170 = sbr.rel (%p168) target = $region24
      $region23: #{custom_bert_model.11} parent=11 // pred_region
        _
      $region24: #{custom_bert_model.11} parent=11 // pred_fallthru
        _
      // Predicated region
      $region25: #{custom_bert_model.11} parent=11 // pred_check
        %p171 = pneg %p121
      $region26: #{custom_bert_model.11} parent=11 // pred_check_branch
        %173 = sbr.rel (%p171) target = $region28
      $region27: #{custom_bert_model.11} parent=11 // pred_region
        _
      $region28: #{custom_bert_model.11} parent=11 // pred_fallthru
        _
    $region12: #{custom_bert_model.11} parent=5 // pred_fallthru
      _
    %p174 = scmp.lt.s32.totalorder %s11, 2
    // Predicated region
    $region29: #{custom_bert_model.11} parent=5 // pred_check
      %p175 = pneg %p174
    $region30: #{custom_bert_model.11} parent=5 // pred_check_branch
      %177 = sbr.rel (%p175) target = $region32
    $region31: #{custom_bert_model.11} parent=5 // pred_region
      // Predicated region
      $region33: #{custom_bert_model.11} parent=31 // pred_check
        %p178 = pneg %p31
      $region34: #{custom_bert_model.11} parent=31 // pred_check_branch
        %180 = sbr.rel (%p178) target = $region36
      $region35: #{custom_bert_model.11} parent=31 // pred_region
        %p181 = scmp.lt.s32.totalorder %s11, 1
        %s182 = scalar_select %p181, %s11, 1
        %s183 = smul.addr %s182, 3
        %s184 = smul.addr %s183, 8
        %s185 = scalar_lea.vmem %s0, %s184
      $region36: #{custom_bert_model.11} parent=31 // pred_fallthru
        _
    $region32: #{custom_bert_model.11} parent=5 // pred_fallthru
      _
    %p186 = scmp.le.s32.totalorder 1, %s11
    %p187 = scmp.lt.s32.totalorder %s11, 3
    %p188 = pnand %p186, %p187
    %p189 = pneg %p188
    // Predicated region
    $region37: #{custom_bert_model.11} parent=5 // pred_check
      _
    $region38: #{custom_bert_model.11} parent=5 // pred_check_branch
      %191 = sbr.rel (%p188) target = $region40
    $region39: #{custom_bert_model.11} parent=5 // pred_region
      %s192 = ssub.s32 %s11, 1
      %p193 = scmp.lt.s32.totalorder %s16, 1
      %s194 = scalar_select %p193, %s16, 1
      %s195 = smul.addr %s194, 3
      %s196 = smul.addr %s195, 8
      %s197 = scalar_lea.vmem %s0, %s196
      %p198 = pneg %p37
      %p199 = pneg %p34
      %p200 = pneg %p58
      %p201 = pneg %p55
      %p202 = pneg %p79
      %p203 = pneg %p76
      %p204 = pneg %p100
      %p205 = pneg %p97
      %p206 = pneg %p121
      %p207 = pneg %p118
      %p208 = pneg %p147
      %p209 = pneg %p144
      %p210 = scmp.lt.s32.totalorder %s16, 1
      %s211 = scalar_select %p210, %s16, 1
      %s212 = smul.addr %s211, 4
      %s213 = scalar_lea.vmem %s5, %s212
      %p214 = scmp.lt.s32.totalorder %s16, 1
      %s215 = scalar_select %p214, %s16, 1
      %s216 = smul.addr %s215, 3
      %s217 = smul.addr %s216, 8
      %s218 = scalar_lea.vmem %s0, %s217
      %p219 = scmp.lt.s32.totalorder %s16, 1
      %s220 = scalar_select %p219, %s16, 1
      %s221 = smul.addr %s220, 4
      %s222 = scalar_lea.vmem %s5, %s221
      %v224 = vld [vmem:[%s218] sm:$0xff]
      %v225 = vld [vmem:[%s218 + $0x8] sm:$0xff]
      %v226 = vld [vmem:[%s218 + $0x10] sm:$0xff]
      %v227 = vld [vmem:[%s1] sm:$0xf]
      %v228 = vld [vmem:[%s1 + $0x4] sm:$0xf]
      %v229 = vld [vmem:[%s1 + $0x8] sm:$0xf]
      %v230 = vld [vmem:[%s1 + $0xc] sm:$0xf]
      %v231 = vld [vmem:[%s1 + $0x10] sm:$0xf]
      %v232 = vld [vmem:[%s1 + $0x14] sm:$0xf]
      %v233 = vld [vmem:[%s1 + $0x18] sm:$0xf]
      %v234 = vld [vmem:[%s1 + $0x1c] sm:$0xf]
      %v235 = vld [vmem:[%s1 + $0x20] sm:$0xf]
      %v236 = vld [vmem:[%s1 + $0x24] sm:$0xf]
      %v237 = vld [vmem:[%s1 + $0x28] sm:$0xf]
      %v238 = vld [vmem:[%s1 + $0x2c] sm:$0xf]
      %v239 = vld [vmem:[%s1 + $0x30] sm:$0xf]
      %v240 = vld [vmem:[%s1 + $0x34] sm:$0xf]
      %v241 = vld [vmem:[%s1 + $0x38] sm:$0xf]
      %v242 = vld [vmem:[%s1 + $0x3c] sm:$0xf]
      %v243 = vld [vmem:[%s2] sm:$0x1]
      %v244 = vld [vmem:[%s3] sm:$0xf]
      %v245 = vld [vmem:[%s3 + $0x4] sm:$0xf]
      %v246 = vld [vmem:[%s3 + $0x8] sm:$0xf]
      %v247 = vld [vmem:[%s3 + $0xc] sm:$0xf]
      %v248 = vld [vmem:[%s3 + $0x10] sm:$0xf]
      %v249 = vld [vmem:[%s3 + $0x14] sm:$0xf]
      %v250 = vld [vmem:[%s3 + $0x18] sm:$0xf]
      %v251 = vld [vmem:[%s3 + $0x1c] sm:$0xf]
      %v252 = vld [vmem:[%s3 + $0x20] sm:$0xf]
      %v253 = vld [vmem:[%s3 + $0x24] sm:$0xf]
      %v254 = vld [vmem:[%s3 + $0x28] sm:$0xf]
      %v255 = vld [vmem:[%s3 + $0x2c] sm:$0xf]
      %v256 = vld [vmem:[%s3 + $0x30] sm:$0xf]
      %v257 = vld [vmem:[%s3 + $0x34] sm:$0xf]
      %v258 = vld [vmem:[%s3 + $0x38] sm:$0xf]
      %v259 = vld [vmem:[%s3 + $0x3c] sm:$0xf]
      %v260 = vld [vmem:[%s4] sm:$0xf]
      %v261 = vld [vmem:[%s4 + $0x4] sm:$0xf]
      %v262 = vld [vmem:[%s4 + $0x8] sm:$0xf]
      %v263 = vld [vmem:[%s4 + $0xc] sm:$0xf]
      %v264 = vld [vmem:[%s4 + $0x10] sm:$0xf]
      %v265 = vld [vmem:[%s4 + $0x14] sm:$0xf]
      %v266 = vld [vmem:[%s4 + $0x18] sm:$0xf]
      %v267 = vld [vmem:[%s4 + $0x1c] sm:$0xf]
      %v268 = vld [vmem:[%s4 + $0x20] sm:$0xf]
      %v269 = vld [vmem:[%s4 + $0x24] sm:$0xf]
      %v270 = vld [vmem:[%s4 + $0x28] sm:$0xf]
      %v271 = vld [vmem:[%s4 + $0x2c] sm:$0xf]
      %v272 = vld [vmem:[%s4 + $0x30] sm:$0xf]
      %v273 = vld [vmem:[%s4 + $0x34] sm:$0xf]
      %v274 = vld [vmem:[%s4 + $0x38] sm:$0xf]
      %v275 = vld [vmem:[%s4 + $0x3c] sm:$0xf]
      %v276 = vpack.c.bf16 %v225, %v224
      %v278 = vlaneseq
      %v279 = vshrl.u32 %v278, 7
      %v280 = vsub.s32 0, %v279
      %v281 = vrot.slane %v243, %v280
      %v299 = vunpack.c.l.b16 %v227
      %v300 = vunpack.c.l.b16 %v228
      %v301 = vunpack.c.l.b16 %v229
      %v302 = vunpack.c.l.b16 %v230
      %v303 = vunpack.c.l.b16 %v231
      %v304 = vunpack.c.l.b16 %v232
      %v305 = vunpack.c.l.b16 %v233
      %v306 = vunpack.c.l.b16 %v234
      %v307 = vunpack.c.l.b16 %v235
      %v308 = vunpack.c.l.b16 %v236
      %v309 = vunpack.c.l.b16 %v237
      %v310 = vunpack.c.l.b16 %v238
      %v311 = vunpack.c.l.b16 %v239
      %v312 = vunpack.c.l.b16 %v240
      %v313 = vunpack.c.l.b16 %v241
      %v314 = vunpack.c.l.b16 %v242
      %v315 = vpack.c.b16 %v300, %v299
      %v316 = vpack.c.b16 %v302, %v301
      %v317 = vpack.c.b16 %v304, %v303
      %v318 = vpack.c.b16 %v306, %v305
      %v319 = vpack.c.b16 %v308, %v307
      %v320 = vpack.c.b16 %v310, %v309
      %v321 = vpack.c.b16 %v312, %v311
      %v322 = vpack.c.b16 %v314, %v313
      %331 = vmatprep.subr.bf16.mxu0 0
      %332 = vmatpush1.bf16.msra.mxu0 %v315
      %333 = vmatprep.subr.bf16.mxu0 0
      %334 = vmatpush1.bf16.msra.mxu0 %v316
      %335 = vmatprep.subr.bf16.mxu0 0
      %336 = vmatpush1.bf16.msra.mxu0 %v317
      %337 = vmatprep.subr.bf16.mxu0 0
      %338 = vmatpush1.bf16.msra.mxu0 %v318
      %339 = vmatprep.subr.bf16.mxu0 0
      %340 = vmatpush1.bf16.msra.mxu0 %v319
      %341 = vmatprep.subr.bf16.mxu0 0
      %342 = vmatpush1.bf16.msra.mxu0 %v320
      %343 = vmatprep.subr.bf16.mxu0 0
      %344 = vmatpush1.bf16.msra.mxu0 %v321
      %345 = vmatprep.subr.bf16.mxu0 0
      %346 = vmatpush1.bf16.msra.mxu0 %v322
      %347 = vmatprep.subr.bf16.mxu0 0
      %348 = vmatpush1.bf16.msra.mxu0 0
      %349 = vmatprep.subr.bf16.mxu0 0
      %350 = vmatpush1.bf16.msra.mxu0 0
      %351 = vmatprep.subr.bf16.mxu0 0
      %352 = vmatpush1.bf16.msra.mxu0 0
      %353 = vmatprep.subr.bf16.mxu0 0
      %354 = vmatpush1.bf16.msra.mxu0 0
      %355 = vmatprep.subr.bf16.mxu0 0
      %356 = vmatpush1.bf16.msra.mxu0 0
      %357 = vmatprep.subr.bf16.mxu0 0
      %358 = vmatpush1.bf16.msra.mxu0 0
      %359 = vmatprep.subr.bf16.mxu0 0
      %360 = vmatpush1.bf16.msra.mxu0 0
      %361 = vmatprep.subr.bf16.mxu0 0
      %362 = vmatpush1.bf16.msra.mxu0 0
      %363 = vmatprep.mubr.bf16.mxu0 0
      %364 = vmatmul.mubr.bf16.gmra.mrb[0].mxu0 %v276
      %v365 = vpop.f32.mrb[0].mxu0
      %v366 = vadd.f32 %v281, %v365
      %v367 = vpop.f32.mrb[0].mxu0
      %v368 = vpop.f32.mrb[0].mxu0
      %v369 = vadd.f32 %v281, %v368
      %v370 = vpop.f32.mrb[0].mxu0
      %371 = vdwg.mxu0
      %372 = vmax.xlane.f32.xlu0 %v366
      %v373 = vpop.xlane.xlu0 %372
      %374 = vmax.xlane.f32.xlu0 %v369
      %v375 = vpop.xlane.xlu0 %374
      %v376 = vsub.f32 %v366, %v373
      %v377 = vsub.f32 %v369, %v375
      %v378 = vmul.f32 %v376, 1.442695
      %v379 = vpow.pop %v378
      %v380 = vmul.f32 %v377, 1.442695
      %v381 = vpow.pop %v380
      %v382 = vmul.f32 %v379, %v379
      %v383 = vmul.f32 %v381, %v381
      %v384 = vpack.c.bf16 %v383, %v382
      %v401 = vunpack.c.l.b16 %v244
      %v402 = vunpack.c.l.b16 %v245
      %v403 = vunpack.c.l.b16 %v246
      %v404 = vunpack.c.l.b16 %v247
      %v405 = vunpack.c.l.b16 %v248
      %v406 = vunpack.c.l.b16 %v249
      %v407 = vunpack.c.l.b16 %v250
      %v408 = vunpack.c.l.b16 %v251
      %v409 = vunpack.c.l.b16 %v252
      %v410 = vunpack.c.l.b16 %v253
      %v411 = vunpack.c.l.b16 %v254
      %v412 = vunpack.c.l.b16 %v255
      %v413 = vunpack.c.l.b16 %v256
      %v414 = vunpack.c.l.b16 %v257
      %v415 = vunpack.c.l.b16 %v258
      %v416 = vunpack.c.l.b16 %v259
      %v417 = vpack.c.b16 %v402, %v401
      %v418 = vpack.c.b16 %v404, %v403
      %v419 = vpack.c.b16 %v406, %v405
      %v420 = vpack.c.b16 %v408, %v407
      %v421 = vpack.c.b16 %v410, %v409
      %v422 = vpack.c.b16 %v412, %v411
      %v423 = vpack.c.b16 %v414, %v413
      %v424 = vpack.c.b16 %v416, %v415
      %433 = vmatprep.subr.bf16.mxu0 0
      %434 = vmatpush1.bf16.msra.mxu0 %v417
      %435 = vmatprep.subr.bf16.mxu0 0
      %436 = vmatpush1.bf16.msra.mxu0 %v418
      %437 = vmatprep.subr.bf16.mxu0 0
      %438 = vmatpush1.bf16.msra.mxu0 %v419
      %439 = vmatprep.subr.bf16.mxu0 0
      %440 = vmatpush1.bf16.msra.mxu0 %v420
      %441 = vmatprep.subr.bf16.mxu0 0
      %442 = vmatpush1.bf16.msra.mxu0 %v421
      %443 = vmatprep.subr.bf16.mxu0 0
      %444 = vmatpush1.bf16.msra.mxu0 %v422
      %445 = vmatprep.subr.bf16.mxu0 0
      %446 = vmatpush1.bf16.msra.mxu0 %v423
      %447 = vmatprep.subr.bf16.mxu0 0
      %448 = vmatpush1.bf16.msra.mxu0 %v424
      %449 = vmatprep.subr.bf16.mxu0 0
      %450 = vmatpush1.bf16.msra.mxu0 0
      %451 = vmatprep.subr.bf16.mxu0 0
      %452 = vmatpush1.bf16.msra.mxu0 0
      %453 = vmatprep.subr.bf16.mxu0 0
      %454 = vmatpush1.bf16.msra.mxu0 0
      %455 = vmatprep.subr.bf16.mxu0 0
      %456 = vmatpush1.bf16.msra.mxu0 0
      %457 = vmatprep.subr.bf16.mxu0 0
      %458 = vmatpush1.bf16.msra.mxu0 0
      %459 = vmatprep.subr.bf16.mxu0 0
      %460 = vmatpush1.bf16.msra.mxu0 0
      %461 = vmatprep.subr.bf16.mxu0 0
      %462 = vmatpush1.bf16.msra.mxu0 0
      %463 = vmatprep.subr.bf16.mxu0 0
      %464 = vmatpush1.bf16.msra.mxu0 0
      %465 = vmatprep.mubr.bf16.mxu0 0
      %466 = vmatmul.mubr.bf16.gmra.mrb[0].mxu0 %v384
      %v467 = vpop.f32.mrb[0].mxu0
      %v468 = vadd.f32 0.0, %v467
      %v469 = vpop.f32.mrb[0].mxu0
      %v470 = vpop.f32.mrb[0].mxu0
      %v471 = vadd.f32 0.0, %v470
      %v472 = vpop.f32.mrb[0].mxu0
      %473 = vdwg.mxu0
      %v474 = vpack.c.bf16 %v471, %v468
      %v491 = vunpack.c.l.b16 %v260
      %v492 = vunpack.c.l.b16 %v261
      %v493 = vunpack.c.l.b16 %v262
      %v494 = vunpack.c.l.b16 %v263
      %v495 = vunpack.c.l.b16 %v264
      %v496 = vunpack.c.l.b16 %v265
      %v497 = vunpack.c.l.b16 %v266
      %v498 = vunpack.c.l.b16 %v267
      %v499 = vunpack.c.l.b16 %v268
      %v500 = vunpack.c.l.b16 %v269
      %v501 = vunpack.c.l.b16 %v270
      %v502 = vunpack.c.l.b16 %v271
      %v503 = vunpack.c.l.b16 %v272
      %v504 = vunpack.c.l.b16 %v273
      %v505 = vunpack.c.l.b16 %v274
      %v506 = vunpack.c.l.b16 %v275
      %v507 = vpack.c.b16 %v492, %v491
      %v508 = vpack.c.b16 %v494, %v493
      %v509 = vpack.c.b16 %v496, %v495
      %v510 = vpack.c.b16 %v498, %v497
      %v511 = vpack.c.b16 %v500, %v499
      %v512 = vpack.c.b16 %v502, %v501
      %v513 = vpack.c.b16 %v504, %v503
      %v514 = vpack.c.b16 %v506, %v505
      %523 = vmatprep.subr.bf16.mxu0 0
      %524 = vmatpush1.bf16.msra.mxu0 %v507
      %525 = vmatprep.subr.bf16.mxu0 0
      %526 = vmatpush1.bf16.msra.mxu0 %v508
      %527 = vmatprep.subr.bf16.mxu0 0
      %528 = vmatpush1.bf16.msra.mxu0 %v509
      %529 = vmatprep.subr.bf16.mxu0 0
      %530 = vmatpush1.bf16.msra.mxu0 %v510
      %531 = vmatprep.subr.bf16.mxu0 0
      %532 = vmatpush1.bf16.msra.mxu0 %v511
      %533 = vmatprep.subr.bf16.mxu0 0
      %534 = vmatpush1.bf16.msra.mxu0 %v512
      %535 = vmatprep.subr.bf16.mxu0 0
      %536 = vmatpush1.bf16.msra.mxu0 %v513
      %537 = vmatprep.subr.bf16.mxu0 0
      %538 = vmatpush1.bf16.msra.mxu0 %v514
      %539 = vmatprep.subr.bf16.mxu0 0
      %540 = vmatpush1.bf16.msra.mxu0 0
      %541 = vmatprep.subr.bf16.mxu0 0
      %542 = vmatpush1.bf16.msra.mxu0 0
      %543 = vmatprep.subr.bf16.mxu0 0
      %544 = vmatpush1.bf16.msra.mxu0 0
      %545 = vmatprep.subr.bf16.mxu0 0
      %546 = vmatpush1.bf16.msra.mxu0 0
      %547 = vmatprep.subr.bf16.mxu0 0
      %548 = vmatpush1.bf16.msra.mxu0 0
      %549 = vmatprep.subr.bf16.mxu0 0
      %550 = vmatpush1.bf16.msra.mxu0 0
      %551 = vmatprep.subr.bf16.mxu0 0
      %552 = vmatpush1.bf16.msra.mxu0 0
      %553 = vmatprep.subr.bf16.mxu0 0
      %554 = vmatpush1.bf16.msra.mxu0 0
      %555 = vmatprep.mubr.bf16.mxu0 0
      %556 = vmatmul.mubr.bf16.gmra.mrb[0].mxu0 %v474
      %v557 = vpop.f32.mrb[0].mxu0
      %v558 = vadd.f32 0.0, %v557
      %v559 = vpop.f32.mrb[0].mxu0
      %v560 = vpop.f32.mrb[0].mxu0
      %v561 = vadd.f32 0.0, %v560
      %v562 = vpop.f32.mrb[0].mxu0
      %563 = vdwg.mxu0
      %v564 = vrsqrt.pop %v558
      %v565 = vrsqrt.pop %v561
      %v566 = vmul.f32 %v379, %v564
      %v567 = vmul.f32 %v381, %v565
      %v568 = vmul.f32 %v566, %v567
      %v569 = vpack.c.bf16 %v568, %v568
      %570 = vmatprep.subr.bf16.mxu0 0
      %571 = vmatpush1.bf16.msra.mxu0 %v417
      %572 = vmatprep.subr.bf16.mxu0 0
      %573 = vmatpush1.bf16.msra.mxu0 %v418
      %574 = vmatprep.subr.bf16.mxu0 0
      %575 = vmatpush1.bf16.msra.mxu0 %v419
      %576 = vmatprep.subr.bf16.mxu0 0
      %577 = vmatpush1.bf16.msra.mxu0 %v420
      %578 = vmatprep.subr.bf16.mxu0 0
      %579 = vmatpush1.bf16.msra.mxu0 %v421
      %580 = vmatprep.subr.bf16.mxu0 0
      %581 = vmatpush1.bf16.msra.mxu0 %v422
      %582 = vmatprep.subr.bf16.mxu0 0
      %583 = vmatpush1.bf16.msra.mxu0 %v423
      %584 = vmatprep.subr.bf16.mxu0 0
      %585 = vmatpush1.bf16.msra.mxu0 %v424
      %586 = vmatprep.subr.bf16.mxu0 0
      %587 = vmatpush1.bf16.msra.mxu0 0
      %588 = vmatprep.subr.bf16.mxu0 0
      %589 = vmatpush1.bf16.msra.mxu0 0
      %590 = vmatprep.subr.bf16.mxu0 0
      %591 = vmatpush1.bf16.msra.mxu0 0
      %592 = vmatprep.subr.bf16.mxu0 0
      %593 = vmatpush1.bf16.msra.mxu0 0
      %594 = vmatprep.subr.bf16.mxu0 0
      %595 = vmatpush1.bf16.msra.mxu0 0
      %596 = vmatprep.subr.bf16.mxu0 0
      %597 = vmatpush1.bf16.msra.mxu0 0
      %598 = vmatprep.subr.bf16.mxu0 0
      %599 = vmatpush1.bf16.msra.mxu0 0
      %600 = vmatprep.subr.bf16.mxu0 0
      %601 = vmatpush1.bf16.msra.mxu0 0
      %602 = vmatprep.mubr.bf16.mxu0 0
      %603 = vmatmul.mubr.bf16.gmra.mrb[0].mxu0 %v569
      %v604 = vpop.f32.mrb[0].mxu0
      %v605 = vadd.f32 0.0, %v604
      %v606 = vpop.f32.mrb[0].mxu0
      %v607 = vpop.f32.mrb[0].mxu0
      %v608 = vpop.f32.mrb[0].mxu0
      %609 = vdwg.mxu0
      %v610 = vmul.f32 %v605, 1.442695
      %v611 = vpow.pop %v610
      %v612 = vadd.f32 %v611, 0.0
      %v613 = vpack.c.bf16 %v611, %v611
      %614 = vmatprep.subr.bf16.mxu0 0
      %615 = vmatpush1.bf16.msra.mxu0 %v507
      %616 = vmatprep.subr.bf16.mxu0 0
      %617 = vmatpush1.bf16.msra.mxu0 %v508
      %618 = vmatprep.subr.bf16.mxu0 0
      %619 = vmatpush1.bf16.msra.mxu0 %v509
      %620 = vmatprep.subr.bf16.mxu0 0
      %621 = vmatpush1.bf16.msra.mxu0 %v510
      %622 = vmatprep.subr.bf16.mxu0 0
      %623 = vmatpush1.bf16.msra.mxu0 %v511
      %624 = vmatprep.subr.bf16.mxu0 0
      %625 = vmatpush1.bf16.msra.mxu0 %v512
      %626 = vmatprep.subr.bf16.mxu0 0
      %627 = vmatpush1.bf16.msra.mxu0 %v513
      %628 = vmatprep.subr.bf16.mxu0 0
      %629 = vmatpush1.bf16.msra.mxu0 %v514
      %630 = vmatprep.subr.bf16.mxu0 0
      %631 = vmatpush1.bf16.msra.mxu0 0
      %632 = vmatprep.subr.bf16.mxu0 0
      %633 = vmatpush1.bf16.msra.mxu0 0
      %634 = vmatprep.subr.bf16.mxu0 0
      %635 = vmatpush1.bf16.msra.mxu0 0
      %636 = vmatprep.subr.bf16.mxu0 0
      %637 = vmatpush1.bf16.msra.mxu0 0
      %638 = vmatprep.subr.bf16.mxu0 0
      %639 = vmatpush1.bf16.msra.mxu0 0
      %640 = vmatprep.subr.bf16.mxu0 0
      %641 = vmatpush1.bf16.msra.mxu0 0
      %642 = vmatprep.subr.bf16.mxu0 0
      %643 = vmatpush1.bf16.msra.mxu0 0
      %644 = vmatprep.subr.bf16.mxu0 0
      %645 = vmatpush1.bf16.msra.mxu0 0
      %646 = vmatprep.mubr.bf16.mxu0 0
      %647 = vmatmul.mubr.bf16.gmra.mrb[0].mxu0 %v613
      %v648 = vpop.f32.mrb[0].mxu0
      %v649 = vadd.f32 0.0, %v648
      %v650 = vpop.f32.mrb[0].mxu0
      %v651 = vpop.f32.mrb[0].mxu0
      %v652 = vpop.f32.mrb[0].mxu0
      %653 = vdwg.mxu0
      %v654 = vmul.f32 %v649, %v226
      %v655 = vadd.f32 %v654, 0.0
      %656 = vrot.lane.b32.xlu0 %v567, 64
      %v657 = vpop.permute.xlu0 %656
      %658 = vrot.lane.b32.xlu0 %v226, 64
      %v659 = vpop.permute.xlu0 %658
      %v660 = vmul.f32 %v566, %v657
      %v661 = vpack.c.bf16 %v660, %v660
      %662 = vmatprep.subr.bf16.mxu0 0
      %663 = vmatpush1.bf16.msra.mxu0 %v417
      %664 = vmatprep.subr.bf16.mxu0 0
      %665 = vmatpush1.bf16.msra.mxu0 %v418
      %666 = vmatprep.subr.bf16.mxu0 0
      %667 = vmatpush1.bf16.msra.mxu0 %v419
      %668 = vmatprep.subr.bf16.mxu0 0
      %669 = vmatpush1.bf16.msra.mxu0 %v420
      %670 = vmatprep.subr.bf16.mxu0 0
      %671 = vmatpush1.bf16.msra.mxu0 %v421
      %672 = vmatprep.subr.bf16.mxu0 0
      %673 = vmatpush1.bf16.msra.mxu0 %v422
      %674 = vmatprep.subr.bf16.mxu0 0
      %675 = vmatpush1.bf16.msra.mxu0 %v423
      %676 = vmatprep.subr.bf16.mxu0 0
      %677 = vmatpush1.bf16.msra.mxu0 %v424
      %678 = vmatprep.subr.bf16.mxu0 0
      %679 = vmatpush1.bf16.msra.mxu0 0
      %680 = vmatprep.subr.bf16.mxu0 0
      %681 = vmatpush1.bf16.msra.mxu0 0
      %682 = vmatprep.subr.bf16.mxu0 0
      %683 = vmatpush1.bf16.msra.mxu0 0
      %684 = vmatprep.subr.bf16.mxu0 0
      %685 = vmatpush1.bf16.msra.mxu0 0
      %686 = vmatprep.subr.bf16.mxu0 0
      %687 = vmatpush1.bf16.msra.mxu0 0
      %688 = vmatprep.subr.bf16.mxu0 0
      %689 = vmatpush1.bf16.msra.mxu0 0
      %690 = vmatprep.subr.bf16.mxu0 0
      %691 = vmatpush1.bf16.msra.mxu0 0
      %692 = vmatprep.subr.bf16.mxu0 0
      %693 = vmatpush1.bf16.msra.mxu0 0
      %694 = vmatprep.mubr.bf16.mxu0 0
      %695 = vmatmul.mubr.bf16.gmra.mrb[0].mxu0 %v661
      %v696 = vpop.f32.mrb[0].mxu0
      %v697 = vadd.f32 0.0, %v696
      %v698 = vpop.f32.mrb[0].mxu0
      %v699 = vpop.f32.mrb[0].mxu0
      %v700 = vpop.f32.mrb[0].mxu0
      %701 = vdwg.mxu0
      %v702 = vmul.f32 %v697, 1.442695
      %v703 = vpow.pop %v702
      %v704 = vadd.f32 %v612, %v703
      %v705 = vpack.c.bf16 %v703, %v703
      %706 = vmatprep.subr.bf16.mxu0 0
      %707 = vmatpush1.bf16.msra.mxu0 %v507
      %708 = vmatprep.subr.bf16.mxu0 0
      %709 = vmatpush1.bf16.msra.mxu0 %v508
      %710 = vmatprep.subr.bf16.mxu0 0
      %711 = vmatpush1.bf16.msra.mxu0 %v509
      %712 = vmatprep.subr.bf16.mxu0 0
      %713 = vmatpush1.bf16.msra.mxu0 %v510
      %714 = vmatprep.subr.bf16.mxu0 0
      %715 = vmatpush1.bf16.msra.mxu0 %v511
      %716 = vmatprep.subr.bf16.mxu0 0
      %717 = vmatpush1.bf16.msra.mxu0 %v512
      %718 = vmatprep.subr.bf16.mxu0 0
      %719 = vmatpush1.bf16.msra.mxu0 %v513
      %720 = vmatprep.subr.bf16.mxu0 0
      %721 = vmatpush1.bf16.msra.mxu0 %v514
      %722 = vmatprep.subr.bf16.mxu0 0
      %723 = vmatpush1.bf16.msra.mxu0 0
      %724 = vmatprep.subr.bf16.mxu0 0
      %725 = vmatpush1.bf16.msra.mxu0 0
      %726 = vmatprep.subr.bf16.mxu0 0
      %727 = vmatpush1.bf16.msra.mxu0 0
      %728 = vmatprep.subr.bf16.mxu0 0
      %729 = vmatpush1.bf16.msra.mxu0 0
      %730 = vmatprep.subr.bf16.mxu0 0
      %731 = vmatpush1.bf16.msra.mxu0 0
      %732 = vmatprep.subr.bf16.mxu0 0
      %733 = vmatpush1.bf16.msra.mxu0 0
      %734 = vmatprep.subr.bf16.mxu0 0
      %735 = vmatpush1.bf16.msra.mxu0 0
      %736 = vmatprep.subr.bf16.mxu0 0
      %737 = vmatpush1.bf16.msra.mxu0 0
      %738 = vmatprep.mubr.bf16.mxu0 0
      %739 = vmatmul.mubr.bf16.gmra.mrb[0].mxu0 %v705
      %v740 = vpop.f32.mrb[0].mxu0
      %v741 = vadd.f32 0.0, %v740
      %v742 = vpop.f32.mrb[0].mxu0
      %v743 = vpop.f32.mrb[0].mxu0
      %v744 = vpop.f32.mrb[0].mxu0
      %745 = vdwg.mxu0
      %v746 = vmul.f32 %v741, %v659
      %v747 = vadd.f32 %v655, %v746
      %v748 = vpack.c.bf16 %v704, %v704
      %749 = vmatprep.subr.bf16.mxu0 0
      %750 = vmatpush1.bf16.msra.mxu0 %v507
      %751 = vmatprep.subr.bf16.mxu0 0
      %752 = vmatpush1.bf16.msra.mxu0 %v508
      %753 = vmatprep.subr.bf16.mxu0 0
      %754 = vmatpush1.bf16.msra.mxu0 %v509
      %755 = vmatprep.subr.bf16.mxu0 0
      %756 = vmatpush1.bf16.msra.mxu0 %v510
      %757 = vmatprep.subr.bf16.mxu0 0
      %758 = vmatpush1.bf16.msra.mxu0 %v511
      %759 = vmatprep.subr.bf16.mxu0 0
      %760 = vmatpush1.bf16.msra.mxu0 %v512
      %761 = vmatprep.subr.bf16.mxu0 0
      %762 = vmatpush1.bf16.msra.mxu0 %v513
      %763 = vmatprep.subr.bf16.mxu0 0
      %764 = vmatpush1.bf16.msra.mxu0 %v514
      %765 = vmatprep.subr.bf16.mxu0 0
      %766 = vmatpush1.bf16.msra.mxu0 0
      %767 = vmatprep.subr.bf16.mxu0 0
      %768 = vmatpush1.bf16.msra.mxu0 0
      %769 = vmatprep.subr.bf16.mxu0 0
      %770 = vmatpush1.bf16.msra.mxu0 0
      %771 = vmatprep.subr.bf16.mxu0 0
      %772 = vmatpush1.bf16.msra.mxu0 0
      %773 = vmatprep.subr.bf16.mxu0 0
      %774 = vmatpush1.bf16.msra.mxu0 0
      %775 = vmatprep.subr.bf16.mxu0 0
      %776 = vmatpush1.bf16.msra.mxu0 0
      %777 = vmatprep.subr.bf16.mxu0 0
      %778 = vmatpush1.bf16.msra.mxu0 0
      %779 = vmatprep.subr.bf16.mxu0 0
      %780 = vmatpush1.bf16.msra.mxu0 0
      %781 = vmatprep.mubr.bf16.mxu0 0
      %782 = vmatmul.mubr.bf16.gmra.mrb[0].mxu0 %v748
      %v783 = vpop.f32.mrb[0].mxu0
      %v784 = vadd.f32 0.0, %v783
      %v785 = vpop.f32.mrb[0].mxu0
      %v786 = vpop.f32.mrb[0].mxu0
      %v787 = vpop.f32.mrb[0].mxu0
      %788 = vdwg.mxu0
      %v789 = vrcp.pop %v784
      %v790 = vmul.f32 %v747, %v789
      %v791 = vpack.c.bf16 %v790, %v790
      %792 = vst [vmem:[%s222] sm:$0xf] %v791
      %p793 = scmp.lt.s32.totalorder %s16, 1
      %s794 = scalar_select %p793, %s16, 1
      %s795 = smul.addr %s794, 4
      %s796 = scalar_lea.vmem %s5, %s795
      // Predicated region
      $region41: #{custom_bert_model.11} parent=39 // pred_check
        %p797 = pneg %p144
      $region42: #{custom_bert_model.11} parent=39 // pred_check_branch
        %799 = sbr.rel (%p797) target = $region44
      $region43: #{custom_bert_model.11} parent=39 // pred_region
        _
      $region44: #{custom_bert_model.11} parent=39 // pred_fallthru
        _
    $region40: #{custom_bert_model.11} parent=5 // pred_fallthru
      _
    %p800 = scmp.le.s32.totalorder 2, %s11
    // Predicated region
    $region45: #{custom_bert_model.11} parent=5 // pred_check
      %p801 = pneg %p800
    $region46: #{custom_bert_model.11} parent=5 // pred_check_branch
      %803 = sbr.rel (%p801) target = $region48
    $region47: #{custom_bert_model.11} parent=5 // pred_region
      %s804 = ssub.s32 %s11, 2
      // Predicated region
      $region49: #{custom_bert_model.11} parent=47 // pred_check
        %p805 = pneg %p150
      $region50: #{custom_bert_model.11} parent=47 // pred_check_branch
        %807 = sbr.rel (%p805) target = $region52
      $region51: #{custom_bert_model.11} parent=47 // pred_region
        %p808 = scmp.lt.s32.totalorder %s17, 1
        %s809 = scalar_select %p808, %s17, 1
        %s810 = smul.addr %s809, 4
        %s811 = scalar_lea.vmem %s5, %s810
      $region52: #{custom_bert_model.11} parent=47 // pred_fallthru
        _
    $region48: #{custom_bert_model.11} parent=5 // pred_fallthru
      _
  $region6: #{custom_bert_model.11} parent=0 // loop_footer
    %s15 = sadd.s32 1, %s11
  $region7: #{custom_bert_model.11} parent=0 // loop_footer_branch
    %10 = sbr.rel target = $region3
  $region8: #{custom_bert_model.11} parent=0 // loop_exit
    _

// kernel: custom_bert_model.12
$region0: #{custom_bert_model.12}
  #allocation0 [shape = 'u32[]', space=smem, size = 0x4, offset = 0x4, fixed_abs, tag = 'smem constant byte address 0x4 - core index']
  #allocation1 [shape = 'u32[144,128]{1,0:T(1,128)}', space=vmem, size = 0x12000, scoped, tag = 'internal scratch']
  #allocation2 [shape = 'f32[8,128]{1,0:T(8,128)}', space=vmem, size = 0x1000, scoped, tag = 'scratch operand']
  %s0 = inlined_call_operand.vmem [shape: bf16[16,128], index: 0, kind: input, shape index: {}]
  %s1 = inlined_call_operand.vmem [shape: bf16[128,128], index: 1, kind: input, shape index: {}]
  %s2 = inlined_call_operand.vmem [shape: f32[1,128], index: 2, kind: input, shape index: {}]
  %s3 = inlined_call_operand.vmem [shape: f32[16,128], index: 3, kind: input, shape index: {}]
  %s4 = inlined_call_operand.vmem [shape: f32[1,128], index: 4, kind: input, shape index: {}]
  %s5 = inlined_call_operand.vmem [shape: f32[1,128], index: 5, kind: input, shape index: {}]
  %s6 = inlined_call_operand.vmem [shape: f32[16,128], index: 6, kind: output, shape index: {}]
  %s7 = sld [smem:[#allocation0]]
  $region65: #{custom_bert_model.12} parent=0
    _
  %s9 = ssub.s32 1, %s7
  %s10 = scalar_select 0, %s9, %s7
  loop: start=0, step=1, limit=4
  $region2: #{custom_bert_model.12} parent=0 // loop_pre_header
    _
  $region3: #{custom_bert_model.12} parent=0 // loop_header
    %s12 = sphi 0, %s16
    %p13 = scmp.ge.s32.totalorder %s12, 4
    %s19 = sphi 0, %s31
    %s20 = sphi 0, %s27
    %s21 = sphi 0, %s19
    %s22 = sphi 0, %s20
    %s23 = sphi 0, %s21
    %s24 = sphi 0, %s22
    %s36 = sphi 0, %s38
    %s39 = sphi 0, %s36
    %s40 = sphi 0, %s39
    %s56 = sphi 0, %s40
    %s62 = sphi 0, %s64
    %s65 = sphi 0, %s62
    %s66 = sphi 0, %s65
    %s82 = sphi 0, %s66
    %s86 = sphi 0, %s86
    %s88 = sphi 0, %s86
    %s89 = sphi 0, %s88
    %s103 = sphi 0, %s89
    %s109 = sphi 0, %s111
    %s112 = sphi 0, %s109
    %s113 = sphi 0, %s112
    %s129 = sphi 0, %s113
    %s133 = sphi 0, %s133
    %s135 = sphi 0, %s133
    %s136 = sphi 0, %s135
    %s150 = sphi 0, %s136
    %s154 = sphi 0, %s154
    %s156 = sphi 0, %s154
    %s157 = sphi 0, %s156
    %s171 = sphi 0, %s157
    %s177 = sphi 0, %s179
    %s180 = sphi 0, %s177
    %s181 = sphi 0, %s180
    %s197 = sphi 0, %s181
  $region4: #{custom_bert_model.12} parent=0 // loop_header_branch
    %15 = sbr.rel (%p13) target = $region8
  $region5: #{custom_bert_model.12} parent=0 // loop_body
    %s17 = ssub.s32 %s12, 1
    %s18 = ssub.s32 %s12, 2
    %s25 = sadd.s32 1, %s20
    %p26 = scmp.ge.s32.totalorder %s25, 1
    %s27 = scalar_select %p26, 0, %s25
    %s28 = sadd.s32 1, %s19
    %s29 = scalar_select %p26, %s28, %s19
    %p30 = scmp.ge.s32.totalorder %s29, 2
    %s31 = scalar_select %p30, 0, %s29
    %s32 = ssub.s32 %s19, %s31
    %s33 = ssub.s32 %s20, %s27
    %s34 = sor.u32 %s32, %s33
    %p35 = scmp.eq.s32.totalorder %s34, 0
    %s37 = sadd.s32 %s36, 1
    %s38 = scalar_select %p35, %s36, %s37
    %p41 = pneg %p35
    %p42 = scmp.eq.s32.totalorder %s12, 1
    %p43 = por %p41, %p42
    %p44 = scmp.ne.s32.totalorder %s36, %s39
    %p45 = scmp.eq.s32.totalorder %s12, 0
    %p46 = por %p44, %p45
    %p47 = scmp.ne.s32.totalorder %s36, %s39
    %p48 = scmp.eq.s32.totalorder %s17, 1
    %p49 = por %p47, %p48
    %p50 = scmp.ne.s32.totalorder %s39, %s40
    %p51 = scmp.eq.s32.totalorder %s17, 0
    %p52 = por %p50, %p51
    %p53 = scmp.ne.s32.totalorder %s39, %s40
    %p54 = scmp.eq.s32.totalorder %s18, 1
    %p55 = por %p53, %p54
    %p57 = scmp.ne.s32.totalorder %s40, %s56
    %p58 = scmp.eq.s32.totalorder %s18, 0
    %p59 = por %p57, %p58
    %s60 = ssub.s32 %s20, %s27
    %p61 = scmp.eq.s32.totalorder %s60, 0
    %s63 = sadd.s32 %s62, 1
    %s64 = scalar_select %p61, %s62, %s63
    %p67 = pneg %p61
    %p68 = scmp.eq.s32.totalorder %s12, 1
    %p69 = por %p67, %p68
    %p70 = scmp.ne.s32.totalorder %s62, %s65
    %p71 = scmp.eq.s32.totalorder %s12, 0
    %p72 = por %p70, %p71
    %p73 = scmp.ne.s32.totalorder %s62, %s65
    %p74 = scmp.eq.s32.totalorder %s17, 1
    %p75 = por %p73, %p74
    %p76 = scmp.ne.s32.totalorder %s65, %s66
    %p77 = scmp.eq.s32.totalorder %s17, 0
    %p78 = por %p76, %p77
    %p79 = scmp.ne.s32.totalorder %s65, %s66
    %p80 = scmp.eq.s32.totalorder %s18, 1
    %p81 = por %p79, %p80
    %p83 = scmp.ne.s32.totalorder %s66, %s82
    %p84 = scmp.eq.s32.totalorder %s18, 0
    %p85 = por %p83, %p84
    %s87 = sadd.s32 %s86, 1
    %p90 = scmp.eq.s32.totalorder %s12, 1
    %p91 = scmp.ne.s32.totalorder %s86, %s88
    %p92 = scmp.eq.s32.totalorder %s12, 0
    %p93 = por %p91, %p92
    %p94 = scmp.ne.s32.totalorder %s86, %s88
    %p95 = scmp.eq.s32.totalorder %s17, 1
    %p96 = por %p94, %p95
    %p97 = scmp.ne.s32.totalorder %s88, %s89
    %p98 = scmp.eq.s32.totalorder %s17, 0
    %p99 = por %p97, %p98
    %p100 = scmp.ne.s32.totalorder %s88, %s89
    %p101 = scmp.eq.s32.totalorder %s18, 1
    %p102 = por %p100, %p101
    %p104 = scmp.ne.s32.totalorder %s89, %s103
    %p105 = scmp.eq.s32.totalorder %s18, 0
    %p106 = por %p104, %p105
    %s107 = ssub.s32 %s19, %s31
    %p108 = scmp.eq.s32.totalorder %s107, 0
    %s110 = sadd.s32 %s109, 1
    %s111 = scalar_select %p108, %s109, %s110
    %p114 = pneg %p108
    %p115 = scmp.eq.s32.totalorder %s12, 1
    %p116 = por %p114, %p115
    %p117 = scmp.ne.s32.totalorder %s109, %s112
    %p118 = scmp.eq.s32.totalorder %s12, 0
    %p119 = por %p117, %p118
    %p120 = scmp.ne.s32.totalorder %s109, %s112
    %p121 = scmp.eq.s32.totalorder %s17, 1
    %p122 = por %p120, %p121
    %p123 = scmp.ne.s32.totalorder %s112, %s113
    %p124 = scmp.eq.s32.totalorder %s17, 0
    %p125 = por %p123, %p124
    %p126 = scmp.ne.s32.totalorder %s112, %s113
    %p127 = scmp.eq.s32.totalorder %s18, 1
    %p128 = por %p126, %p127
    %p130 = scmp.ne.s32.totalorder %s113, %s129
    %p131 = scmp.eq.s32.totalorder %s18, 0
    %p132 = por %p130, %p131
    %s134 = sadd.s32 %s133, 1
    %p137 = scmp.eq.s32.totalorder %s12, 1
    %p138 = scmp.ne.s32.totalorder %s133, %s135
    %p139 = scmp.eq.s32.totalorder %s12, 0
    %p140 = por %p138, %p139
    %p141 = scmp.ne.s32.totalorder %s133, %s135
    %p142 = scmp.eq.s32.totalorder %s17, 1
    %p143 = por %p141, %p142
    %p144 = scmp.ne.s32.totalorder %s135, %s136
    %p145 = scmp.eq.s32.totalorder %s17, 0
    %p146 = por %p144, %p145
    %p147 = scmp.ne.s32.totalorder %s135, %s136
    %p148 = scmp.eq.s32.totalorder %s18, 1
    %p149 = por %p147, %p148
    %p151 = scmp.ne.s32.totalorder %s136, %s150
    %p152 = scmp.eq.s32.totalorder %s18, 0
    %p153 = por %p151, %p152
    %s155 = sadd.s32 %s154, 1
    %p158 = scmp.eq.s32.totalorder %s12, 1
    %p159 = scmp.ne.s32.totalorder %s154, %s156
    %p160 = scmp.eq.s32.totalorder %s12, 0
    %p161 = por %p159, %p160
    %p162 = scmp.ne.s32.totalorder %s154, %s156
    %p163 = scmp.eq.s32.totalorder %s17, 1
    %p164 = por %p162, %p163
    %p165 = scmp.ne.s32.totalorder %s156, %s157
    %p166 = scmp.eq.s32.totalorder %s17, 0
    %p167 = por %p165, %p166
    %p168 = scmp.ne.s32.totalorder %s156, %s157
    %p169 = scmp.eq.s32.totalorder %s18, 1
    %p170 = por %p168, %p169
    %p172 = scmp.ne.s32.totalorder %s157, %s171
    %p173 = scmp.eq.s32.totalorder %s18, 0
    %p174 = por %p172, %p173
    %s175 = ssub.s32 %s19, %s31
    %p176 = scmp.eq.s32.totalorder %s175, 0
    %s178 = sadd.s32 %s177, 1
    %s179 = scalar_select %p176, %s177, %s178
    %p182 = pneg %p176
    %p183 = scmp.eq.s32.totalorder %s12, 1
    %p184 = por %p182, %p183
    %p185 = scmp.ne.s32.totalorder %s177, %s180
    %p186 = scmp.eq.s32.totalorder %s12, 0
    %p187 = por %p185, %p186
    %p188 = scmp.ne.s32.totalorder %s177, %s180
    %p189 = scmp.eq.s32.totalorder %s17, 1
    %p190 = por %p188, %p189
    %p191 = scmp.ne.s32.totalorder %s180, %s181
    %p192 = scmp.eq.s32.totalorder %s17, 0
    %p193 = por %p191, %p192
    %p194 = scmp.ne.s32.totalorder %s180, %s181
    %p195 = scmp.eq.s32.totalorder %s18, 1
    %p196 = por %p194, %p195
    %p198 = scmp.ne.s32.totalorder %s181, %s197
    %p199 = scmp.eq.s32.totalorder %s18, 0
    %p200 = por %p198, %p199
    %p201 = scmp.le.s32.totalorder 1, %s12
    %p202 = scmp.lt.s32.totalorder %s12, 3
    %p203 = pnand %p201, %p202
    %p204 = pneg %p203
    // Predicated region
    $region9: #{custom_bert_model.12} parent=5 // pred_check
      _
    $region10: #{custom_bert_model.12} parent=5 // pred_check_branch
      %206 = sbr.rel (%p203) target = $region12
    $region11: #{custom_bert_model.12} parent=5 // pred_region
      %s207 = ssub.s32 %s12, 1
      // Predicated region
      $region13: #{custom_bert_model.12} parent=11 // pred_check
        %p208 = pneg %p78
      $region14: #{custom_bert_model.12} parent=11 // pred_check_branch
        %210 = sbr.rel (%p208) target = $region16
      $region15: #{custom_bert_model.12} parent=11 // pred_region
        %s211 = smul.u32 16, %s22
        %p212 = scmp.lt.s32.totalorder %s211, 15
        %s213 = scalar_select %p212, %s211, 15
        %s214 = smul.addr %s213, 4
        %s215 = scalar_lea.vmem %s1, %s214
        %s216 = smul.u32 16, %s22
      $region16: #{custom_bert_model.12} parent=11 // pred_fallthru
        _
      // Predicated region
      $region17: #{custom_bert_model.12} parent=11 // pred_check
        %p217 = pneg %p99
      $region18: #{custom_bert_model.12} parent=11 // pred_check_branch
        %219 = sbr.rel (%p217) target = $region20
      $region19: #{custom_bert_model.12} parent=11 // pred_region
        _
      $region20: #{custom_bert_model.12} parent=11 // pred_fallthru
        _
      // Predicated region
      $region21: #{custom_bert_model.12} parent=11 // pred_check
        %p220 = pneg %p146
      $region22: #{custom_bert_model.12} parent=11 // pred_check_branch
        %222 = sbr.rel (%p220) target = $region24
      $region23: #{custom_bert_model.12} parent=11 // pred_region
        _
      $region24: #{custom_bert_model.12} parent=11 // pred_fallthru
        _
      // Predicated region
      $region25: #{custom_bert_model.12} parent=11 // pred_check
        %p223 = pneg %p167
      $region26: #{custom_bert_model.12} parent=11 // pred_check_branch
        %225 = sbr.rel (%p223) target = $region28
      $region27: #{custom_bert_model.12} parent=11 // pred_region
        _
      $region28: #{custom_bert_model.12} parent=11 // pred_fallthru
        _
    $region12: #{custom_bert_model.12} parent=5 // pred_fallthru
      _
    %p226 = scmp.lt.s32.totalorder %s12, 2
    // Predicated region
    $region29: #{custom_bert_model.12} parent=5 // pred_check
      %p227 = pneg %p226
    $region30: #{custom_bert_model.12} parent=5 // pred_check_branch
      %229 = sbr.rel (%p227) target = $region32
    $region31: #{custom_bert_model.12} parent=5 // pred_region
      // Predicated region
      $region33: #{custom_bert_model.12} parent=31 // pred_check
        %p230 = pneg %p46
      $region34: #{custom_bert_model.12} parent=31 // pred_check_branch
        %232 = sbr.rel (%p230) target = $region36
      $region35: #{custom_bert_model.12} parent=31 // pred_region
        %p233 = scmp.lt.s32.totalorder %s19, 1
        %s234 = scalar_select %p233, %s19, 1
        %p235 = scmp.lt.s32.totalorder %s20, 0
        %s236 = scalar_select %p235, %s20, 0
        %s237 = sadd.s32 %s236, %s234
        %s238 = smul.addr %s237, 4
        %s239 = scalar_lea.vmem %s0, %s238
      $region36: #{custom_bert_model.12} parent=31 // pred_fallthru
        _
      // Predicated region
      $region37: #{custom_bert_model.12} parent=31 // pred_check
        %p240 = pneg %p119
      $region38: #{custom_bert_model.12} parent=31 // pred_check_branch
        %242 = sbr.rel (%p240) target = $region40
      $region39: #{custom_bert_model.12} parent=31 // pred_region
        %p243 = scmp.lt.s32.totalorder %s19, 1
        %s244 = scalar_select %p243, %s19, 1
        %s245 = smul.addr %s244, 8
        %s246 = scalar_lea.vmem %s3, %s245
      $region40: #{custom_bert_model.12} parent=31 // pred_fallthru
        _
    $region32: #{custom_bert_model.12} parent=5 // pred_fallthru
      _
    %p247 = scmp.le.s32.totalorder 1, %s12
    %p248 = scmp.lt.s32.totalorder %s12, 3
    %p249 = pnand %p247, %p248
    %p250 = pneg %p249
    // Predicated region
    $region41: #{custom_bert_model.12} parent=5 // pred_check
      _
    $region42: #{custom_bert_model.12} parent=5 // pred_check_branch
      %252 = sbr.rel (%p249) target = $region44
    $region43: #{custom_bert_model.12} parent=5 // pred_region
      %s253 = ssub.s32 %s12, 1
      %p254 = scmp.lt.s32.totalorder %s21, 1
      %s255 = scalar_select %p254, %s21, 1
      %p256 = scmp.lt.s32.totalorder %s22, 0
      %s257 = scalar_select %p256, %s22, 0
      %s258 = sadd.s32 %s257, %s255
      %s259 = smul.addr %s258, 4
      %s260 = scalar_lea.vmem %s0, %s259
      %p261 = pneg %p52
      %p262 = pneg %p49
      %s263 = smul.u32 16, %s22
      %p264 = scmp.lt.s32.totalorder %s263, 15
      %s265 = scalar_select %p264, %s263, 15
      %s266 = smul.addr %s265, 4
      %s267 = scalar_lea.vmem %s1, %s266
      %p268 = pneg %p78
      %p269 = pneg %p75
      %p270 = pneg %p99
      %p271 = pneg %p96
      %p272 = scmp.lt.s32.totalorder %s21, 1
      %s273 = scalar_select %p272, %s21, 1
      %s274 = smul.addr %s273, 8
      %s275 = scalar_lea.vmem %s3, %s274
      %p276 = pneg %p125
      %p277 = pneg %p122
      %p278 = pneg %p146
      %p279 = pneg %p143
      %p280 = pneg %p167
      %p281 = pneg %p164
      %p282 = pneg %p193
      %p283 = pneg %p190
      %p284 = scmp.lt.s32.totalorder %s21, 1
      %s285 = scalar_select %p284, %s21, 1
      %s286 = smul.addr %s285, 8
      %s287 = scalar_lea.vmem %s6, %s286
      %p288 = scmp.lt.s32.totalorder %s21, 1
      %s289 = scalar_select %p288, %s21, 1
      %p290 = scmp.lt.s32.totalorder %s22, 0
      %s291 = scalar_select %p290, %s22, 0
      %s292 = sadd.s32 %s291, %s289
      %s293 = smul.addr %s292, 4
      %s294 = scalar_lea.vmem %s0, %s293
      %s295 = smul.u32 16, %s22
      %p296 = scmp.lt.s32.totalorder %s295, 15
      %s297 = scalar_select %p296, %s295, 15
      %s298 = smul.addr %s297, 4
      %s299 = scalar_lea.vmem %s1, %s298
      %s300 = smul.u32 16, %s22
      %p301 = scmp.lt.s32.totalorder %s21, 1
      %s302 = scalar_select %p301, %s21, 1
      %s303 = smul.addr %s302, 8
      %s304 = scalar_lea.vmem %s3, %s303
      %p305 = scmp.lt.s32.totalorder %s21, 1
      %s306 = scalar_select %p305, %s21, 1
      %s307 = smul.addr %s306, 8
      %s308 = scalar_lea.vmem %s6, %s307
      %p310 = scmp.eq.s32.totalorder %s22, 0
      // Predicated region
      $region45: #{custom_bert_model.12} parent=43 // pred_check
        %p311 = pneg %p310
      $region46: #{custom_bert_model.12} parent=43 // pred_check_branch
        %313 = sbr.rel (%p311) target = $region48
      $region47: #{custom_bert_model.12} parent=43 // pred_region
        %314 = vst [vmem:[#allocation2] sm:$0xff] 0.0
      $region48: #{custom_bert_model.12} parent=43 // pred_fallthru
        _
      %v315 = vld [vmem:[#allocation2] sm:$0xff]
      %v316 = vld [vmem:[%s294] sm:$0xf]
      %v317 = vld [vmem:[%s299] sm:$0xf]
      %v318 = vld [vmem:[%s299 + $0x4] sm:$0xf]
      %v319 = vld [vmem:[%s299 + $0x8] sm:$0xf]
      %v320 = vld [vmem:[%s299 + $0xc] sm:$0xf]
      %v321 = vld [vmem:[%s299 + $0x10] sm:$0xf]
      %v322 = vld [vmem:[%s299 + $0x14] sm:$0xf]
      %v323 = vld [vmem:[%s299 + $0x18] sm:$0xf]
      %v324 = vld [vmem:[%s299 + $0x1c] sm:$0xf]
      %v325 = vld [vmem:[%s299 + $0x20] sm:$0xf]
      %v326 = vld [vmem:[%s299 + $0x24] sm:$0xf]
      %v327 = vld [vmem:[%s299 + $0x28] sm:$0xf]
      %v328 = vld [vmem:[%s299 + $0x2c] sm:$0xf]
      %v329 = vld [vmem:[%s299 + $0x30] sm:$0xf]
      %v330 = vld [vmem:[%s299 + $0x34] sm:$0xf]
      %v331 = vld [vmem:[%s299 + $0x38] sm:$0xf]
      %v332 = vld [vmem:[%s299 + $0x3c] sm:$0xf]
      %v349 = vunpack.c.l.b16 %v317
      %v350 = vunpack.c.l.b16 %v318
      %v351 = vunpack.c.l.b16 %v319
      %v352 = vunpack.c.l.b16 %v320
      %v353 = vunpack.c.l.b16 %v321
      %v354 = vunpack.c.l.b16 %v322
      %v355 = vunpack.c.l.b16 %v323
      %v356 = vunpack.c.l.b16 %v324
      %v357 = vunpack.c.l.b16 %v325
      %v358 = vunpack.c.l.b16 %v326
      %v359 = vunpack.c.l.b16 %v327
      %v360 = vunpack.c.l.b16 %v328
      %v361 = vunpack.c.l.b16 %v329
      %v362 = vunpack.c.l.b16 %v330
      %v363 = vunpack.c.l.b16 %v331
      %v364 = vunpack.c.l.b16 %v332
      %v365 = vpack.c.b16 %v350, %v349
      %v366 = vpack.c.b16 %v352, %v351
      %v367 = vpack.c.b16 %v354, %v353
      %v368 = vpack.c.b16 %v356, %v355
      %v369 = vpack.c.b16 %v358, %v357
      %v370 = vpack.c.b16 %v360, %v359
      %v371 = vpack.c.b16 %v362, %v361
      %v372 = vpack.c.b16 %v364, %v363
      %381 = vmatprep.subr.bf16.mxu0 0
      %382 = vmatpush1.bf16.msra.mxu0 %v365
      %383 = vmatprep.subr.bf16.mxu0 0
      %384 = vmatpush1.bf16.msra.mxu0 %v366
      %385 = vmatprep.subr.bf16.mxu0 0
      %386 = vmatpush1.bf16.msra.mxu0 %v367
      %387 = vmatprep.subr.bf16.mxu0 0
      %388 = vmatpush1.bf16.msra.mxu0 %v368
      %389 = vmatprep.subr.bf16.mxu0 0
      %390 = vmatpush1.bf16.msra.mxu0 %v369
      %391 = vmatprep.subr.bf16.mxu0 0
      %392 = vmatpush1.bf16.msra.mxu0 %v370
      %393 = vmatprep.subr.bf16.mxu0 0
      %394 = vmatpush1.bf16.msra.mxu0 %v371
      %395 = vmatprep.subr.bf16.mxu0 0
      %396 = vmatpush1.bf16.msra.mxu0 %v372
      %397 = vmatprep.subr.bf16.mxu0 0
      %398 = vmatpush1.bf16.msra.mxu0 0
      %399 = vmatprep.subr.bf16.mxu0 0
      %400 = vmatpush1.bf16.msra.mxu0 0
      %401 = vmatprep.subr.bf16.mxu0 0
      %402 = vmatpush1.bf16.msra.mxu0 0
      %403 = vmatprep.subr.bf16.mxu0 0
      %404 = vmatpush1.bf16.msra.mxu0 0
      %405 = vmatprep.subr.bf16.mxu0 0
      %406 = vmatpush1.bf16.msra.mxu0 0
      %407 = vmatprep.subr.bf16.mxu0 0
      %408 = vmatpush1.bf16.msra.mxu0 0
      %409 = vmatprep.subr.bf16.mxu0 0
      %410 = vmatpush1.bf16.msra.mxu0 0
      %411 = vmatprep.subr.bf16.mxu0 0
      %412 = vmatpush1.bf16.msra.mxu0 0
      %413 = vmatprep.mubr.bf16.mxu0 0
      %414 = vmatmul.mubr.bf16.gmra.mrb[0].mxu0 %v316
      %v415 = vpop.f32.mrb[0].mxu0
      %v416 = vadd.f32 0.0, %v415
      %v417 = vpop.f32.mrb[0].mxu0
      %v418 = vpop.f32.mrb[0].mxu0
      %v419 = vpop.f32.mrb[0].mxu0
      %420 = vdwg.mxu0
      %v421 = vadd.f32 %v315, %v416
      %422 = vst [vmem:[#allocation2] sm:$0xff] %v421
      // Predicated region
      $region49: #{custom_bert_model.12} parent=43 // pred_check
        %p423 = pneg %p310
      $region50: #{custom_bert_model.12} parent=43 // pred_check_branch
        %425 = sbr.rel (%p423) target = $region52
      $region51: #{custom_bert_model.12} parent=43 // pred_region
        %v426 = vld [vmem:[#allocation2] sm:$0xff]
        %v427 = vld [vmem:[%s2] sm:$0x1]
        %v429 = vlaneseq
        %v430 = vshrl.u32 %v429, 7
        %v431 = vsub.s32 0, %v430
        %v432 = vrot.slane %v427, %v431
        %v434 = vadd.f32 %v426, %v432
        %v435 = vld [vmem:[%s304] sm:$0xff]
        %v436 = vadd.f32 %v434, %v435
        %437 = vadd.xlane.f32.xlu0 %v436
        %v438 = vpop.xlane.xlu0 %437
        %v439 = vrcp.pop 128.0
        %v440 = vmul.f32 %v438, %v439
        %v441 = vsub.f32 %v436, %v440
        %v442 = vmul.f32 %v441, %v441
        %443 = vadd.xlane.f32.xlu0 %v442
        %v444 = vpop.xlane.xlu0 %443
        %v445 = vmul.f32 %v444, %v439
        %v446 = vadd.f32 %v445, 1e-12
        %v447 = vrsqrt.pop %v446
        %v448 = vmul.f32 %v441, %v447
        %v449 = vld [vmem:[%s4] sm:$0x1]
        %v451 = vlaneseq
        %v452 = vshrl.u32 %v451, 7
        %v453 = vsub.s32 0, %v452
        %v454 = vrot.slane %v449, %v453
        %v456 = vmul.f32 %v448, %v454
        %v457 = vld [vmem:[%s5] sm:$0x1]
        %v459 = vlaneseq
        %v460 = vshrl.u32 %v459, 7
        %v461 = vsub.s32 0, %v460
        %v462 = vrot.slane %v457, %v461
        %v464 = vadd.f32 %v456, %v462
        %465 = vst [vmem:[%s308] sm:$0xff] %v464
      $region52: #{custom_bert_model.12} parent=43 // pred_fallthru
        _
      %p466 = scmp.lt.s32.totalorder %s21, 1
      %s467 = scalar_select %p466, %s21, 1
      %s468 = smul.addr %s467, 8
      %s469 = scalar_lea.vmem %s6, %s468
      // Predicated region
      $region53: #{custom_bert_model.12} parent=43 // pred_check
        %p470 = pneg %p190
      $region54: #{custom_bert_model.12} parent=43 // pred_check_branch
        %472 = sbr.rel (%p470) target = $region56
      $region55: #{custom_bert_model.12} parent=43 // pred_region
        _
      $region56: #{custom_bert_model.12} parent=43 // pred_fallthru
        _
    $region44: #{custom_bert_model.12} parent=5 // pred_fallthru
      _
    %p473 = scmp.le.s32.totalorder 2, %s12
    // Predicated region
    $region57: #{custom_bert_model.12} parent=5 // pred_check
      %p474 = pneg %p473
    $region58: #{custom_bert_model.12} parent=5 // pred_check_branch
      %476 = sbr.rel (%p474) target = $region60
    $region59: #{custom_bert_model.12} parent=5 // pred_region
      %s477 = ssub.s32 %s12, 2
      // Predicated region
      $region61: #{custom_bert_model.12} parent=59 // pred_check
        %p478 = pneg %p196
      $region62: #{custom_bert_model.12} parent=59 // pred_check_branch
        %480 = sbr.rel (%p478) target = $region64
      $region63: #{custom_bert_model.12} parent=59 // pred_region
        %p481 = scmp.lt.s32.totalorder %s23, 1
        %s482 = scalar_select %p481, %s23, 1
        %s483 = smul.addr %s482, 8
        %s484 = scalar_lea.vmem %s6, %s483
      $region64: #{custom_bert_model.12} parent=59 // pred_fallthru
        _
    $region60: #{custom_bert_model.12} parent=5 // pred_fallthru
      _
  $region6: #{custom_bert_model.12} parent=0 // loop_footer
    %s16 = sadd.s32 1, %s12
  $region7: #{custom_bert_model.12} parent=0 // loop_footer_branch
    %11 = sbr.rel target = $region3
  $region8: #{custom_bert_model.12} parent=0 // loop_exit
    _

// kernel: custom_bert_model.14
$region0: #{custom_bert_model.14}
  #allocation0 [shape = 'u32[]', space=smem, size = 0x4, offset = 0x4, fixed_abs, tag = 'smem constant byte address 0x4 - core index']
  #allocation1 [shape = 'u32[144,128]{1,0:T(1,128)}', space=vmem, size = 0x12000, scoped, tag = 'internal scratch']
  #allocation2 [shape = 'f32[8,128]{1,0:T(8,128)}', space=vmem, size = 0x1000, scoped, tag = 'scratch operand']
  %s0 = inlined_call_operand.vmem [shape: bf16[16,256], index: 0, kind: input, shape index: {}]
  %s1 = inlined_call_operand.vmem [shape: bf16[256,128], index: 1, kind: input, shape index: {}]
  %s2 = inlined_call_operand.vmem [shape: f32[1,128], index: 2, kind: input, shape index: {}]
  %s3 = inlined_call_operand.vmem [shape: f32[16,128], index: 3, kind: input, shape index: {}]
  %s4 = inlined_call_operand.vmem [shape: f32[1,128], index: 4, kind: input, shape index: {}]
  %s5 = inlined_call_operand.vmem [shape: f32[1,128], index: 5, kind: input, shape index: {}]
  %s6 = inlined_call_operand.vmem [shape: f32[16,128], index: 6, kind: output, shape index: {}]
  %s7 = sld [smem:[#allocation0]]
  $region65: #{custom_bert_model.14} parent=0
    _
  %s9 = ssub.s32 1, %s7
  %s10 = scalar_select 0, %s9, %s7
  loop: start=0, step=1, limit=4
  $region2: #{custom_bert_model.14} parent=0 // loop_pre_header
    _
  $region3: #{custom_bert_model.14} parent=0 // loop_header
    %s12 = sphi 0, %s16
    %p13 = scmp.ge.s32.totalorder %s12, 4
    %s19 = sphi 0, %s31
    %s20 = sphi 0, %s27
    %s21 = sphi 0, %s19
    %s22 = sphi 0, %s20
    %s23 = sphi 0, %s21
    %s24 = sphi 0, %s22
    %s36 = sphi 0, %s38
    %s39 = sphi 0, %s36
    %s40 = sphi 0, %s39
    %s56 = sphi 0, %s40
    %s62 = sphi 0, %s64
    %s65 = sphi 0, %s62
    %s66 = sphi 0, %s65
    %s82 = sphi 0, %s66
    %s86 = sphi 0, %s86
    %s88 = sphi 0, %s86
    %s89 = sphi 0, %s88
    %s103 = sphi 0, %s89
    %s109 = sphi 0, %s111
    %s112 = sphi 0, %s109
    %s113 = sphi 0, %s112
    %s129 = sphi 0, %s113
    %s133 = sphi 0, %s133
    %s135 = sphi 0, %s133
    %s136 = sphi 0, %s135
    %s150 = sphi 0, %s136
    %s154 = sphi 0, %s154
    %s156 = sphi 0, %s154
    %s157 = sphi 0, %s156
    %s171 = sphi 0, %s157
    %s177 = sphi 0, %s179
    %s180 = sphi 0, %s177
    %s181 = sphi 0, %s180
    %s197 = sphi 0, %s181
  $region4: #{custom_bert_model.14} parent=0 // loop_header_branch
    %15 = sbr.rel (%p13) target = $region8
  $region5: #{custom_bert_model.14} parent=0 // loop_body
    %s17 = ssub.s32 %s12, 1
    %s18 = ssub.s32 %s12, 2
    %s25 = sadd.s32 1, %s20
    %p26 = scmp.ge.s32.totalorder %s25, 1
    %s27 = scalar_select %p26, 0, %s25
    %s28 = sadd.s32 1, %s19
    %s29 = scalar_select %p26, %s28, %s19
    %p30 = scmp.ge.s32.totalorder %s29, 2
    %s31 = scalar_select %p30, 0, %s29
    %s32 = ssub.s32 %s19, %s31
    %s33 = ssub.s32 %s20, %s27
    %s34 = sor.u32 %s32, %s33
    %p35 = scmp.eq.s32.totalorder %s34, 0
    %s37 = sadd.s32 %s36, 1
    %s38 = scalar_select %p35, %s36, %s37
    %p41 = pneg %p35
    %p42 = scmp.eq.s32.totalorder %s12, 1
    %p43 = por %p41, %p42
    %p44 = scmp.ne.s32.totalorder %s36, %s39
    %p45 = scmp.eq.s32.totalorder %s12, 0
    %p46 = por %p44, %p45
    %p47 = scmp.ne.s32.totalorder %s36, %s39
    %p48 = scmp.eq.s32.totalorder %s17, 1
    %p49 = por %p47, %p48
    %p50 = scmp.ne.s32.totalorder %s39, %s40
    %p51 = scmp.eq.s32.totalorder %s17, 0
    %p52 = por %p50, %p51
    %p53 = scmp.ne.s32.totalorder %s39, %s40
    %p54 = scmp.eq.s32.totalorder %s18, 1
    %p55 = por %p53, %p54
    %p57 = scmp.ne.s32.totalorder %s40, %s56
    %p58 = scmp.eq.s32.totalorder %s18, 0
    %p59 = por %p57, %p58
    %s60 = ssub.s32 %s20, %s27
    %p61 = scmp.eq.s32.totalorder %s60, 0
    %s63 = sadd.s32 %s62, 1
    %s64 = scalar_select %p61, %s62, %s63
    %p67 = pneg %p61
    %p68 = scmp.eq.s32.totalorder %s12, 1
    %p69 = por %p67, %p68
    %p70 = scmp.ne.s32.totalorder %s62, %s65
    %p71 = scmp.eq.s32.totalorder %s12, 0
    %p72 = por %p70, %p71
    %p73 = scmp.ne.s32.totalorder %s62, %s65
    %p74 = scmp.eq.s32.totalorder %s17, 1
    %p75 = por %p73, %p74
    %p76 = scmp.ne.s32.totalorder %s65, %s66
    %p77 = scmp.eq.s32.totalorder %s17, 0
    %p78 = por %p76, %p77
    %p79 = scmp.ne.s32.totalorder %s65, %s66
    %p80 = scmp.eq.s32.totalorder %s18, 1
    %p81 = por %p79, %p80
    %p83 = scmp.ne.s32.totalorder %s66, %s82
    %p84 = scmp.eq.s32.totalorder %s18, 0
    %p85 = por %p83, %p84
    %s87 = sadd.s32 %s86, 1
    %p90 = scmp.eq.s32.totalorder %s12, 1
    %p91 = scmp.ne.s32.totalorder %s86, %s88
    %p92 = scmp.eq.s32.totalorder %s12, 0
    %p93 = por %p91, %p92
    %p94 = scmp.ne.s32.totalorder %s86, %s88
    %p95 = scmp.eq.s32.totalorder %s17, 1
    %p96 = por %p94, %p95
    %p97 = scmp.ne.s32.totalorder %s88, %s89
    %p98 = scmp.eq.s32.totalorder %s17, 0
    %p99 = por %p97, %p98
    %p100 = scmp.ne.s32.totalorder %s88, %s89
    %p101 = scmp.eq.s32.totalorder %s18, 1
    %p102 = por %p100, %p101
    %p104 = scmp.ne.s32.totalorder %s89, %s103
    %p105 = scmp.eq.s32.totalorder %s18, 0
    %p106 = por %p104, %p105
    %s107 = ssub.s32 %s19, %s31
    %p108 = scmp.eq.s32.totalorder %s107, 0
    %s110 = sadd.s32 %s109, 1
    %s111 = scalar_select %p108, %s109, %s110
    %p114 = pneg %p108
    %p115 = scmp.eq.s32.totalorder %s12, 1
    %p116 = por %p114, %p115
    %p117 = scmp.ne.s32.totalorder %s109, %s112
    %p118 = scmp.eq.s32.totalorder %s12, 0
    %p119 = por %p117, %p118
    %p120 = scmp.ne.s32.totalorder %s109, %s112
    %p121 = scmp.eq.s32.totalorder %s17, 1
    %p122 = por %p120, %p121
    %p123 = scmp.ne.s32.totalorder %s112, %s113
    %p124 = scmp.eq.s32.totalorder %s17, 0
    %p125 = por %p123, %p124
    %p126 = scmp.ne.s32.totalorder %s112, %s113
    %p127 = scmp.eq.s32.totalorder %s18, 1
    %p128 = por %p126, %p127
    %p130 = scmp.ne.s32.totalorder %s113, %s129
    %p131 = scmp.eq.s32.totalorder %s18, 0
    %p132 = por %p130, %p131
    %s134 = sadd.s32 %s133, 1
    %p137 = scmp.eq.s32.totalorder %s12, 1
    %p138 = scmp.ne.s32.totalorder %s133, %s135
    %p139 = scmp.eq.s32.totalorder %s12, 0
    %p140 = por %p138, %p139
    %p141 = scmp.ne.s32.totalorder %s133, %s135
    %p142 = scmp.eq.s32.totalorder %s17, 1
    %p143 = por %p141, %p142
    %p144 = scmp.ne.s32.totalorder %s135, %s136
    %p145 = scmp.eq.s32.totalorder %s17, 0
    %p146 = por %p144, %p145
    %p147 = scmp.ne.s32.totalorder %s135, %s136
    %p148 = scmp.eq.s32.totalorder %s18, 1
    %p149 = por %p147, %p148
    %p151 = scmp.ne.s32.totalorder %s136, %s150
    %p152 = scmp.eq.s32.totalorder %s18, 0
    %p153 = por %p151, %p152
    %s155 = sadd.s32 %s154, 1
    %p158 = scmp.eq.s32.totalorder %s12, 1
    %p159 = scmp.ne.s32.totalorder %s154, %s156
    %p160 = scmp.eq.s32.totalorder %s12, 0
    %p161 = por %p159, %p160
    %p162 = scmp.ne.s32.totalorder %s154, %s156
    %p163 = scmp.eq.s32.totalorder %s17, 1
    %p164 = por %p162, %p163
    %p165 = scmp.ne.s32.totalorder %s156, %s157
    %p166 = scmp.eq.s32.totalorder %s17, 0
    %p167 = por %p165, %p166
    %p168 = scmp.ne.s32.totalorder %s156, %s157
    %p169 = scmp.eq.s32.totalorder %s18, 1
    %p170 = por %p168, %p169
    %p172 = scmp.ne.s32.totalorder %s157, %s171
    %p173 = scmp.eq.s32.totalorder %s18, 0
    %p174 = por %p172, %p173
    %s175 = ssub.s32 %s19, %s31
    %p176 = scmp.eq.s32.totalorder %s175, 0
    %s178 = sadd.s32 %s177, 1
    %s179 = scalar_select %p176, %s177, %s178
    %p182 = pneg %p176
    %p183 = scmp.eq.s32.totalorder %s12, 1
    %p184 = por %p182, %p183
    %p185 = scmp.ne.s32.totalorder %s177, %s180
    %p186 = scmp.eq.s32.totalorder %s12, 0
    %p187 = por %p185, %p186
    %p188 = scmp.ne.s32.totalorder %s177, %s180
    %p189 = scmp.eq.s32.totalorder %s17, 1
    %p190 = por %p188, %p189
    %p191 = scmp.ne.s32.totalorder %s180, %s181
    %p192 = scmp.eq.s32.totalorder %s17, 0
    %p193 = por %p191, %p192
    %p194 = scmp.ne.s32.totalorder %s180, %s181
    %p195 = scmp.eq.s32.totalorder %s18, 1
    %p196 = por %p194, %p195
    %p198 = scmp.ne.s32.totalorder %s181, %s197
    %p199 = scmp.eq.s32.totalorder %s18, 0
    %p200 = por %p198, %p199
    %p201 = scmp.le.s32.totalorder 1, %s12
    %p202 = scmp.lt.s32.totalorder %s12, 3
    %p203 = pnand %p201, %p202
    %p204 = pneg %p203
    // Predicated region
    $region9: #{custom_bert_model.14} parent=5 // pred_check
      _
    $region10: #{custom_bert_model.14} parent=5 // pred_check_branch
      %206 = sbr.rel (%p203) target = $region12
    $region11: #{custom_bert_model.14} parent=5 // pred_region
      %s207 = ssub.s32 %s12, 1
      // Predicated region
      $region13: #{custom_bert_model.14} parent=11 // pred_check
        %p208 = pneg %p78
      $region14: #{custom_bert_model.14} parent=11 // pred_check_branch
        %210 = sbr.rel (%p208) target = $region16
      $region15: #{custom_bert_model.14} parent=11 // pred_region
        %s211 = smul.u32 32, %s22
        %p212 = scmp.lt.s32.totalorder %s211, 31
        %s213 = scalar_select %p212, %s211, 31
        %s214 = smul.addr %s213, 4
        %s215 = scalar_lea.vmem %s1, %s214
        %s216 = smul.u32 32, %s22
      $region16: #{custom_bert_model.14} parent=11 // pred_fallthru
        _
      // Predicated region
      $region17: #{custom_bert_model.14} parent=11 // pred_check
        %p217 = pneg %p99
      $region18: #{custom_bert_model.14} parent=11 // pred_check_branch
        %219 = sbr.rel (%p217) target = $region20
      $region19: #{custom_bert_model.14} parent=11 // pred_region
        _
      $region20: #{custom_bert_model.14} parent=11 // pred_fallthru
        _
      // Predicated region
      $region21: #{custom_bert_model.14} parent=11 // pred_check
        %p220 = pneg %p146
      $region22: #{custom_bert_model.14} parent=11 // pred_check_branch
        %222 = sbr.rel (%p220) target = $region24
      $region23: #{custom_bert_model.14} parent=11 // pred_region
        _
      $region24: #{custom_bert_model.14} parent=11 // pred_fallthru
        _
      // Predicated region
      $region25: #{custom_bert_model.14} parent=11 // pred_check
        %p223 = pneg %p167
      $region26: #{custom_bert_model.14} parent=11 // pred_check_branch
        %225 = sbr.rel (%p223) target = $region28
      $region27: #{custom_bert_model.14} parent=11 // pred_region
        _
      $region28: #{custom_bert_model.14} parent=11 // pred_fallthru
        _
    $region12: #{custom_bert_model.14} parent=5 // pred_fallthru
      _
    %p226 = scmp.lt.s32.totalorder %s12, 2
    // Predicated region
    $region29: #{custom_bert_model.14} parent=5 // pred_check
      %p227 = pneg %p226
    $region30: #{custom_bert_model.14} parent=5 // pred_check_branch
      %229 = sbr.rel (%p227) target = $region32
    $region31: #{custom_bert_model.14} parent=5 // pred_region
      // Predicated region
      $region33: #{custom_bert_model.14} parent=31 // pred_check
        %p230 = pneg %p46
      $region34: #{custom_bert_model.14} parent=31 // pred_check_branch
        %232 = sbr.rel (%p230) target = $region36
      $region35: #{custom_bert_model.14} parent=31 // pred_region
        %s233 = smul.u32 2, %s20
        %p234 = scmp.lt.s32.totalorder %s19, 1
        %s235 = scalar_select %p234, %s19, 1
        %p236 = scmp.lt.s32.totalorder %s233, 1
        %s237 = scalar_select %p236, %s233, 1
        %s238 = smul.addr %s235, 2
        %s239 = sadd.s32 %s237, %s238
        %s240 = smul.addr %s239, 4
        %s241 = scalar_lea.vmem %s0, %s240
        %s242 = smul.u32 2, %s20
      $region36: #{custom_bert_model.14} parent=31 // pred_fallthru
        _
      // Predicated region
      $region37: #{custom_bert_model.14} parent=31 // pred_check
        %p243 = pneg %p119
      $region38: #{custom_bert_model.14} parent=31 // pred_check_branch
        %245 = sbr.rel (%p243) target = $region40
      $region39: #{custom_bert_model.14} parent=31 // pred_region
        %p246 = scmp.lt.s32.totalorder %s19, 1
        %s247 = scalar_select %p246, %s19, 1
        %s248 = smul.addr %s247, 8
        %s249 = scalar_lea.vmem %s3, %s248
      $region40: #{custom_bert_model.14} parent=31 // pred_fallthru
        _
    $region32: #{custom_bert_model.14} parent=5 // pred_fallthru
      _
    %p250 = scmp.le.s32.totalorder 1, %s12
    %p251 = scmp.lt.s32.totalorder %s12, 3
    %p252 = pnand %p250, %p251
    %p253 = pneg %p252
    // Predicated region
    $region41: #{custom_bert_model.14} parent=5 // pred_check
      _
    $region42: #{custom_bert_model.14} parent=5 // pred_check_branch
      %255 = sbr.rel (%p252) target = $region44
    $region43: #{custom_bert_model.14} parent=5 // pred_region
      %s256 = ssub.s32 %s12, 1
      %s257 = smul.u32 2, %s22
      %p258 = scmp.lt.s32.totalorder %s21, 1
      %s259 = scalar_select %p258, %s21, 1
      %p260 = scmp.lt.s32.totalorder %s257, 1
      %s261 = scalar_select %p260, %s257, 1
      %s262 = smul.addr %s259, 2
      %s263 = sadd.s32 %s261, %s262
      %s264 = smul.addr %s263, 4
      %s265 = scalar_lea.vmem %s0, %s264
      %p266 = pneg %p52
      %p267 = pneg %p49
      %s268 = smul.u32 32, %s22
      %p269 = scmp.lt.s32.totalorder %s268, 31
      %s270 = scalar_select %p269, %s268, 31
      %s271 = smul.addr %s270, 4
      %s272 = scalar_lea.vmem %s1, %s271
      %p273 = pneg %p78
      %p274 = pneg %p75
      %p275 = pneg %p99
      %p276 = pneg %p96
      %p277 = scmp.lt.s32.totalorder %s21, 1
      %s278 = scalar_select %p277, %s21, 1
      %s279 = smul.addr %s278, 8
      %s280 = scalar_lea.vmem %s3, %s279
      %p281 = pneg %p125
      %p282 = pneg %p122
      %p283 = pneg %p146
      %p284 = pneg %p143
      %p285 = pneg %p167
      %p286 = pneg %p164
      %p287 = pneg %p193
      %p288 = pneg %p190
      %p289 = scmp.lt.s32.totalorder %s21, 1
      %s290 = scalar_select %p289, %s21, 1
      %s291 = smul.addr %s290, 8
      %s292 = scalar_lea.vmem %s6, %s291
      %s293 = smul.u32 2, %s22
      %p294 = scmp.lt.s32.totalorder %s21, 1
      %s295 = scalar_select %p294, %s21, 1
      %p296 = scmp.lt.s32.totalorder %s293, 1
      %s297 = scalar_select %p296, %s293, 1
      %s298 = smul.addr %s295, 2
      %s299 = sadd.s32 %s297, %s298
      %s300 = smul.addr %s299, 4
      %s301 = scalar_lea.vmem %s0, %s300
      %s302 = smul.u32 2, %s22
      %s303 = smul.u32 32, %s22
      %p304 = scmp.lt.s32.totalorder %s303, 31
      %s305 = scalar_select %p304, %s303, 31
      %s306 = smul.addr %s305, 4
      %s307 = scalar_lea.vmem %s1, %s306
      %s308 = smul.u32 32, %s22
      %p309 = scmp.lt.s32.totalorder %s21, 1
      %s310 = scalar_select %p309, %s21, 1
      %s311 = smul.addr %s310, 8
      %s312 = scalar_lea.vmem %s3, %s311
      %p313 = scmp.lt.s32.totalorder %s21, 1
      %s314 = scalar_select %p313, %s21, 1
      %s315 = smul.addr %s314, 8
      %s316 = scalar_lea.vmem %s6, %s315
      %p318 = scmp.eq.s32.totalorder %s22, 0
      // Predicated region
      $region45: #{custom_bert_model.14} parent=43 // pred_check
        %p319 = pneg %p318
      $region46: #{custom_bert_model.14} parent=43 // pred_check_branch
        %321 = sbr.rel (%p319) target = $region48
      $region47: #{custom_bert_model.14} parent=43 // pred_region
        %322 = vst [vmem:[#allocation2] sm:$0xff] 0.0
      $region48: #{custom_bert_model.14} parent=43 // pred_fallthru
        _
      %v323 = vld [vmem:[#allocation2] sm:$0xff]
      %v324 = vld [vmem:[%s301] sm:$0xff]
      %v325 = vld [vmem:[%s307] sm:$0xf]
      %v326 = vld [vmem:[%s307 + $0x4] sm:$0xf]
      %v327 = vld [vmem:[%s307 + $0x8] sm:$0xf]
      %v328 = vld [vmem:[%s307 + $0xc] sm:$0xf]
      %v329 = vld [vmem:[%s307 + $0x10] sm:$0xf]
      %v330 = vld [vmem:[%s307 + $0x14] sm:$0xf]
      %v331 = vld [vmem:[%s307 + $0x18] sm:$0xf]
      %v332 = vld [vmem:[%s307 + $0x1c] sm:$0xf]
      %v333 = vld [vmem:[%s307 + $0x20] sm:$0xf]
      %v334 = vld [vmem:[%s307 + $0x24] sm:$0xf]
      %v335 = vld [vmem:[%s307 + $0x28] sm:$0xf]
      %v336 = vld [vmem:[%s307 + $0x2c] sm:$0xf]
      %v337 = vld [vmem:[%s307 + $0x30] sm:$0xf]
      %v338 = vld [vmem:[%s307 + $0x34] sm:$0xf]
      %v339 = vld [vmem:[%s307 + $0x38] sm:$0xf]
      %v340 = vld [vmem:[%s307 + $0x3c] sm:$0xf]
      %v341 = vld [vmem:[%s307 + $0x40] sm:$0xf]
      %v342 = vld [vmem:[%s307 + $0x44] sm:$0xf]
      %v343 = vld [vmem:[%s307 + $0x48] sm:$0xf]
      %v344 = vld [vmem:[%s307 + $0x4c] sm:$0xf]
      %v345 = vld [vmem:[%s307 + $0x50] sm:$0xf]
      %v346 = vld [vmem:[%s307 + $0x54] sm:$0xf]
      %v347 = vld [vmem:[%s307 + $0x58] sm:$0xf]
      %v348 = vld [vmem:[%s307 + $0x5c] sm:$0xf]
      %v349 = vld [vmem:[%s307 + $0x60] sm:$0xf]
      %v350 = vld [vmem:[%s307 + $0x64] sm:$0xf]
      %v351 = vld [vmem:[%s307 + $0x68] sm:$0xf]
      %v352 = vld [vmem:[%s307 + $0x6c] sm:$0xf]
      %v353 = vld [vmem:[%s307 + $0x70] sm:$0xf]
      %v354 = vld [vmem:[%s307 + $0x74] sm:$0xf]
      %v355 = vld [vmem:[%s307 + $0x78] sm:$0xf]
      %v356 = vld [vmem:[%s307 + $0x7c] sm:$0xf]
      %v358 = vunpack.c.l.b16 %v324
      %v359 = vunpack.c.h.b16 %v324
      %v360 = vpack.c.b16 %v358, %v358
      %v361 = vpack.c.b16 %v359, %v359
      %v396 = vunpack.c.l.b16 %v325
      %v397 = vunpack.c.l.b16 %v326
      %v398 = vunpack.c.l.b16 %v327
      %v399 = vunpack.c.l.b16 %v328
      %v400 = vunpack.c.l.b16 %v329
      %v401 = vunpack.c.l.b16 %v330
      %v402 = vunpack.c.l.b16 %v331
      %v403 = vunpack.c.l.b16 %v332
      %v404 = vunpack.c.l.b16 %v333
      %v405 = vunpack.c.l.b16 %v334
      %v406 = vunpack.c.l.b16 %v335
      %v407 = vunpack.c.l.b16 %v336
      %v408 = vunpack.c.l.b16 %v337
      %v409 = vunpack.c.l.b16 %v338
      %v410 = vunpack.c.l.b16 %v339
      %v411 = vunpack.c.l.b16 %v340
      %v412 = vunpack.c.l.b16 %v341
      %v413 = vunpack.c.l.b16 %v342
      %v414 = vunpack.c.l.b16 %v343
      %v415 = vunpack.c.l.b16 %v344
      %v416 = vunpack.c.l.b16 %v345
      %v417 = vunpack.c.l.b16 %v346
      %v418 = vunpack.c.l.b16 %v347
      %v419 = vunpack.c.l.b16 %v348
      %v420 = vunpack.c.l.b16 %v349
      %v421 = vunpack.c.l.b16 %v350
      %v422 = vunpack.c.l.b16 %v351
      %v423 = vunpack.c.l.b16 %v352
      %v424 = vunpack.c.l.b16 %v353
      %v425 = vunpack.c.l.b16 %v354
      %v426 = vunpack.c.l.b16 %v355
      %v427 = vunpack.c.l.b16 %v356
      %v428 = vpack.c.b16 %v397, %v396
      %v429 = vpack.c.b16 %v399, %v398
      %v430 = vpack.c.b16 %v401, %v400
      %v431 = vpack.c.b16 %v403, %v402
      %v432 = vpack.c.b16 %v405, %v404
      %v433 = vpack.c.b16 %v407, %v406
      %v434 = vpack.c.b16 %v409, %v408
      %v435 = vpack.c.b16 %v411, %v410
      %v436 = vpack.c.b16 %v413, %v412
      %v437 = vpack.c.b16 %v415, %v414
      %v438 = vpack.c.b16 %v417, %v416
      %v439 = vpack.c.b16 %v419, %v418
      %v440 = vpack.c.b16 %v421, %v420
      %v441 = vpack.c.b16 %v423, %v422
      %v442 = vpack.c.b16 %v425, %v424
      %v443 = vpack.c.b16 %v427, %v426
      %460 = vmatprep.subr.bf16.mxu0 0
      %461 = vmatpush1.bf16.msra.mxu0 %v428
      %462 = vmatprep.subr.bf16.mxu0 0
      %463 = vmatpush1.bf16.msra.mxu0 %v429
      %464 = vmatprep.subr.bf16.mxu0 0
      %465 = vmatpush1.bf16.msra.mxu0 %v430
      %466 = vmatprep.subr.bf16.mxu0 0
      %467 = vmatpush1.bf16.msra.mxu0 %v431
      %468 = vmatprep.subr.bf16.mxu0 0
      %469 = vmatpush1.bf16.msra.mxu0 %v432
      %470 = vmatprep.subr.bf16.mxu0 0
      %471 = vmatpush1.bf16.msra.mxu0 %v433
      %472 = vmatprep.subr.bf16.mxu0 0
      %473 = vmatpush1.bf16.msra.mxu0 %v434
      %474 = vmatprep.subr.bf16.mxu0 0
      %475 = vmatpush1.bf16.msra.mxu0 %v435
      %476 = vmatprep.subr.bf16.mxu0 0
      %477 = vmatpush1.bf16.msra.mxu0 %v436
      %478 = vmatprep.subr.bf16.mxu0 0
      %479 = vmatpush1.bf16.msra.mxu0 %v437
      %480 = vmatprep.subr.bf16.mxu0 0
      %481 = vmatpush1.bf16.msra.mxu0 %v438
      %482 = vmatprep.subr.bf16.mxu0 0
      %483 = vmatpush1.bf16.msra.mxu0 %v439
      %484 = vmatprep.subr.bf16.mxu0 0
      %485 = vmatpush1.bf16.msra.mxu0 %v440
      %486 = vmatprep.subr.bf16.mxu0 0
      %487 = vmatpush1.bf16.msra.mxu0 %v441
      %488 = vmatprep.subr.bf16.mxu0 0
      %489 = vmatpush1.bf16.msra.mxu0 %v442
      %490 = vmatprep.subr.bf16.mxu0 0
      %491 = vmatpush1.bf16.msra.mxu0 %v443
      %492 = vmatprep.mubr.bf16.mxu0 %v361
      %493 = vmatmul.mubr.bf16.gmra.mrb[0].mxu0 %v360
      %v494 = vpop.f32.mrb[0].mxu0
      %v495 = vadd.f32 0.0, %v494
      %v496 = vpop.f32.mrb[0].mxu0
      %v497 = vpop.f32.mrb[0].mxu0
      %v498 = vpop.f32.mrb[0].mxu0
      %499 = vdwg.mxu0
      %v500 = vadd.f32 %v323, %v495
      %501 = vst [vmem:[#allocation2] sm:$0xff] %v500
      // Predicated region
      $region49: #{custom_bert_model.14} parent=43 // pred_check
        %p502 = pneg %p318
      $region50: #{custom_bert_model.14} parent=43 // pred_check_branch
        %504 = sbr.rel (%p502) target = $region52
      $region51: #{custom_bert_model.14} parent=43 // pred_region
        %v505 = vld [vmem:[#allocation2] sm:$0xff]
        %v506 = vld [vmem:[%s2] sm:$0x1]
        %v508 = vlaneseq
        %v509 = vshrl.u32 %v508, 7
        %v510 = vsub.s32 0, %v509
        %v511 = vrot.slane %v506, %v510
        %v513 = vadd.f32 %v505, %v511
        %v514 = vld [vmem:[%s312] sm:$0xff]
        %v515 = vadd.f32 %v513, %v514
        %516 = vadd.xlane.f32.xlu0 %v515
        %v517 = vpop.xlane.xlu0 %516
        %v518 = vrcp.pop 128.0
        %v519 = vmul.f32 %v517, %v518
        %v520 = vsub.f32 %v515, %v519
        %v521 = vmul.f32 %v520, %v520
        %522 = vadd.xlane.f32.xlu0 %v521
        %v523 = vpop.xlane.xlu0 %522
        %v524 = vmul.f32 %v523, %v518
        %v525 = vadd.f32 %v524, 1e-12
        %v526 = vrsqrt.pop %v525
        %v527 = vmul.f32 %v520, %v526
        %v528 = vld [vmem:[%s4] sm:$0x1]
        %v530 = vlaneseq
        %v531 = vshrl.u32 %v530, 7
        %v532 = vsub.s32 0, %v531
        %v533 = vrot.slane %v528, %v532
        %v535 = vmul.f32 %v527, %v533
        %v536 = vld [vmem:[%s5] sm:$0x1]
        %v538 = vlaneseq
        %v539 = vshrl.u32 %v538, 7
        %v540 = vsub.s32 0, %v539
        %v541 = vrot.slane %v536, %v540
        %v543 = vadd.f32 %v535, %v541
        %544 = vst [vmem:[%s316] sm:$0xff] %v543
      $region52: #{custom_bert_model.14} parent=43 // pred_fallthru
        _
      %p545 = scmp.lt.s32.totalorder %s21, 1
      %s546 = scalar_select %p545, %s21, 1
      %s547 = smul.addr %s546, 8
      %s548 = scalar_lea.vmem %s6, %s547
      // Predicated region
      $region53: #{custom_bert_model.14} parent=43 // pred_check
        %p549 = pneg %p190
      $region54: #{custom_bert_model.14} parent=43 // pred_check_branch
        %551 = sbr.rel (%p549) target = $region56
      $region55: #{custom_bert_model.14} parent=43 // pred_region
        _
      $region56: #{custom_bert_model.14} parent=43 // pred_fallthru
        _
    $region44: #{custom_bert_model.14} parent=5 // pred_fallthru
      _
    %p552 = scmp.le.s32.totalorder 2, %s12
    // Predicated region
    $region57: #{custom_bert_model.14} parent=5 // pred_check
      %p553 = pneg %p552
    $region58: #{custom_bert_model.14} parent=5 // pred_check_branch
      %555 = sbr.rel (%p553) target = $region60
    $region59: #{custom_bert_model.14} parent=5 // pred_region
      %s556 = ssub.s32 %s12, 2
      // Predicated region
      $region61: #{custom_bert_model.14} parent=59 // pred_check
        %p557 = pneg %p196
      $region62: #{custom_bert_model.14} parent=59 // pred_check_branch
        %559 = sbr.rel (%p557) target = $region64
      $region63: #{custom_bert_model.14} parent=59 // pred_region
        %p560 = scmp.lt.s32.totalorder %s23, 1
        %s561 = scalar_select %p560, %s23, 1
        %s562 = smul.addr %s561, 8
        %s563 = scalar_lea.vmem %s6, %s562
      $region64: #{custom_bert_model.14} parent=59 // pred_fallthru
        _
    $region60: #{custom_bert_model.14} parent=5 // pred_fallthru
      _
  $region6: #{custom_bert_model.14} parent=0 // loop_footer
    %s16 = sadd.s32 1, %s12
  $region7: #{custom_bert_model.14} parent=0 // loop_footer_branch
    %11 = sbr.rel target = $region3
  $region8: #{custom_bert_model.14} parent=0 // loop_exit
    _

// kernel: custom_bert_model.15
$region0: #{custom_bert_model.15}
  #allocation0 [shape = 'u32[]', space=smem, size = 0x4, offset = 0x4, fixed_abs, tag = 'smem constant byte address 0x4 - core index']
  #allocation1 [shape = 'u32[144,128]{1,0:T(1,128)}', space=vmem, size = 0x12000, scoped, tag = 'internal scratch']
  %s0 = inlined_call_operand.vmem [shape: f32[16,128], index: 0, kind: input, shape index: {}]
  %s1 = inlined_call_operand.vmem [shape: bf16[128,384], index: 1, kind: input, shape index: {}]
  %s2 = inlined_call_operand.vmem [shape: f32[1,384], index: 2, kind: input, shape index: {}]
  %s3 = inlined_call_operand.vmem [shape: f32[16,384], index: 3, kind: output, shape index: {}]
  %s4 = sld [smem:[#allocation0]]
  $region45: #{custom_bert_model.15} parent=0
    _
  %s6 = ssub.s32 1, %s4
  %s7 = scalar_select 0, %s6, %s4
  loop: start=0, step=1, limit=4
  $region2: #{custom_bert_model.15} parent=0 // loop_pre_header
    _
  $region3: #{custom_bert_model.15} parent=0 // loop_header
    %s9 = sphi 0, %s13
    %p10 = scmp.ge.s32.totalorder %s9, 4
    %s16 = sphi 0, %s28
    %s17 = sphi 0, %s24
    %s18 = sphi 0, %s16
    %s19 = sphi 0, %s17
    %s20 = sphi 0, %s18
    %s21 = sphi 0, %s19
    %s31 = sphi 0, %s33
    %s34 = sphi 0, %s31
    %s35 = sphi 0, %s34
    %s51 = sphi 0, %s35
    %s57 = sphi 0, %s59
    %s60 = sphi 0, %s57
    %s61 = sphi 0, %s60
    %s77 = sphi 0, %s61
    %s83 = sphi 0, %s85
    %s86 = sphi 0, %s83
    %s87 = sphi 0, %s86
    %s103 = sphi 0, %s87
    %s111 = sphi 0, %s113
    %s114 = sphi 0, %s111
    %s115 = sphi 0, %s114
    %s131 = sphi 0, %s115
  $region4: #{custom_bert_model.15} parent=0 // loop_header_branch
    %12 = sbr.rel (%p10) target = $region8
  $region5: #{custom_bert_model.15} parent=0 // loop_body
    %s14 = ssub.s32 %s9, 1
    %s15 = ssub.s32 %s9, 2
    %s22 = sadd.s32 1, %s17
    %p23 = scmp.ge.s32.totalorder %s22, 2
    %s24 = scalar_select %p23, 0, %s22
    %s25 = sadd.s32 1, %s16
    %s26 = scalar_select %p23, %s25, %s16
    %p27 = scmp.ge.s32.totalorder %s26, 1
    %s28 = scalar_select %p27, 0, %s26
    %s29 = ssub.s32 %s17, %s24
    %p30 = scmp.eq.s32.totalorder %s29, 0
    %s32 = sadd.s32 %s31, 1
    %s33 = scalar_select %p30, %s31, %s32
    %p36 = pneg %p30
    %p37 = scmp.eq.s32.totalorder %s9, 1
    %p38 = por %p36, %p37
    %p39 = scmp.ne.s32.totalorder %s31, %s34
    %p40 = scmp.eq.s32.totalorder %s9, 0
    %p41 = por %p39, %p40
    %p42 = scmp.ne.s32.totalorder %s31, %s34
    %p43 = scmp.eq.s32.totalorder %s14, 1
    %p44 = por %p42, %p43
    %p45 = scmp.ne.s32.totalorder %s34, %s35
    %p46 = scmp.eq.s32.totalorder %s14, 0
    %p47 = por %p45, %p46
    %p48 = scmp.ne.s32.totalorder %s34, %s35
    %p49 = scmp.eq.s32.totalorder %s15, 1
    %p50 = por %p48, %p49
    %p52 = scmp.ne.s32.totalorder %s35, %s51
    %p53 = scmp.eq.s32.totalorder %s15, 0
    %p54 = por %p52, %p53
    %s55 = ssub.s32 %s16, %s28
    %p56 = scmp.eq.s32.totalorder %s55, 0
    %s58 = sadd.s32 %s57, 1
    %s59 = scalar_select %p56, %s57, %s58
    %p62 = pneg %p56
    %p63 = scmp.eq.s32.totalorder %s9, 1
    %p64 = por %p62, %p63
    %p65 = scmp.ne.s32.totalorder %s57, %s60
    %p66 = scmp.eq.s32.totalorder %s9, 0
    %p67 = por %p65, %p66
    %p68 = scmp.ne.s32.totalorder %s57, %s60
    %p69 = scmp.eq.s32.totalorder %s14, 1
    %p70 = por %p68, %p69
    %p71 = scmp.ne.s32.totalorder %s60, %s61
    %p72 = scmp.eq.s32.totalorder %s14, 0
    %p73 = por %p71, %p72
    %p74 = scmp.ne.s32.totalorder %s60, %s61
    %p75 = scmp.eq.s32.totalorder %s15, 1
    %p76 = por %p74, %p75
    %p78 = scmp.ne.s32.totalorder %s61, %s77
    %p79 = scmp.eq.s32.totalorder %s15, 0
    %p80 = por %p78, %p79
    %s81 = ssub.s32 %s16, %s28
    %p82 = scmp.eq.s32.totalorder %s81, 0
    %s84 = sadd.s32 %s83, 1
    %s85 = scalar_select %p82, %s83, %s84
    %p88 = pneg %p82
    %p89 = scmp.eq.s32.totalorder %s9, 1
    %p90 = por %p88, %p89
    %p91 = scmp.ne.s32.totalorder %s83, %s86
    %p92 = scmp.eq.s32.totalorder %s9, 0
    %p93 = por %p91, %p92
    %p94 = scmp.ne.s32.totalorder %s83, %s86
    %p95 = scmp.eq.s32.totalorder %s14, 1
    %p96 = por %p94, %p95
    %p97 = scmp.ne.s32.totalorder %s86, %s87
    %p98 = scmp.eq.s32.totalorder %s14, 0
    %p99 = por %p97, %p98
    %p100 = scmp.ne.s32.totalorder %s86, %s87
    %p101 = scmp.eq.s32.totalorder %s15, 1
    %p102 = por %p100, %p101
    %p104 = scmp.ne.s32.totalorder %s87, %s103
    %p105 = scmp.eq.s32.totalorder %s15, 0
    %p106 = por %p104, %p105
    %s107 = ssub.s32 %s17, %s24
    %s108 = ssub.s32 %s16, %s28
    %s109 = sor.u32 %s107, %s108
    %p110 = scmp.eq.s32.totalorder %s109, 0
    %s112 = sadd.s32 %s111, 1
    %s113 = scalar_select %p110, %s111, %s112
    %p116 = pneg %p110
    %p117 = scmp.eq.s32.totalorder %s9, 1
    %p118 = por %p116, %p117
    %p119 = scmp.ne.s32.totalorder %s111, %s114
    %p120 = scmp.eq.s32.totalorder %s9, 0
    %p121 = por %p119, %p120
    %p122 = scmp.ne.s32.totalorder %s111, %s114
    %p123 = scmp.eq.s32.totalorder %s14, 1
    %p124 = por %p122, %p123
    %p125 = scmp.ne.s32.totalorder %s114, %s115
    %p126 = scmp.eq.s32.totalorder %s14, 0
    %p127 = por %p125, %p126
    %p128 = scmp.ne.s32.totalorder %s114, %s115
    %p129 = scmp.eq.s32.totalorder %s15, 1
    %p130 = por %p128, %p129
    %p132 = scmp.ne.s32.totalorder %s115, %s131
    %p133 = scmp.eq.s32.totalorder %s15, 0
    %p134 = por %p132, %p133
    %p135 = scmp.le.s32.totalorder 1, %s9
    %p136 = scmp.lt.s32.totalorder %s9, 3
    %p137 = pnand %p135, %p136
    %p138 = pneg %p137
    // Predicated region
    $region9: #{custom_bert_model.15} parent=5 // pred_check
      _
    $region10: #{custom_bert_model.15} parent=5 // pred_check_branch
      %140 = sbr.rel (%p137) target = $region12
    $region11: #{custom_bert_model.15} parent=5 // pred_region
      %s141 = ssub.s32 %s9, 1
      // Predicated region
      $region13: #{custom_bert_model.15} parent=11 // pred_check
        %p142 = pneg %p73
      $region14: #{custom_bert_model.15} parent=11 // pred_check_branch
        %144 = sbr.rel (%p142) target = $region16
      $region15: #{custom_bert_model.15} parent=11 // pred_region
        %s145 = smul.u32 3, %s18
        %p146 = scmp.lt.s32.totalorder %s145, 2
        %s147 = scalar_select %p146, %s145, 2
        %s148 = smul.addr %s147, 4
        %s149 = scalar_lea.vmem %s1, %s148
        %s150 = smul.u32 3, %s18
      $region16: #{custom_bert_model.15} parent=11 // pred_fallthru
        _
      // Predicated region
      $region17: #{custom_bert_model.15} parent=11 // pred_check
        %p151 = pneg %p99
      $region18: #{custom_bert_model.15} parent=11 // pred_check_branch
        %153 = sbr.rel (%p151) target = $region20
      $region19: #{custom_bert_model.15} parent=11 // pred_region
        %s154 = smul.u32 3, %s18
        %p155 = scmp.lt.s32.totalorder %s154, 2
        %s156 = scalar_select %p155, %s154, 2
        %s157 = scalar_lea.vmem %s2, %s156
        %s158 = smul.u32 3, %s18
      $region20: #{custom_bert_model.15} parent=11 // pred_fallthru
        _
    $region12: #{custom_bert_model.15} parent=5 // pred_fallthru
      _
    %p159 = scmp.lt.s32.totalorder %s9, 2
    // Predicated region
    $region21: #{custom_bert_model.15} parent=5 // pred_check
      %p160 = pneg %p159
    $region22: #{custom_bert_model.15} parent=5 // pred_check_branch
      %162 = sbr.rel (%p160) target = $region24
    $region23: #{custom_bert_model.15} parent=5 // pred_region
      // Predicated region
      $region25: #{custom_bert_model.15} parent=23 // pred_check
        %p163 = pneg %p41
      $region26: #{custom_bert_model.15} parent=23 // pred_check_branch
        %165 = sbr.rel (%p163) target = $region28
      $region27: #{custom_bert_model.15} parent=23 // pred_region
        %p166 = scmp.lt.s32.totalorder %s17, 1
        %s167 = scalar_select %p166, %s17, 1
        %s168 = smul.addr %s167, 8
        %s169 = scalar_lea.vmem %s0, %s168
      $region28: #{custom_bert_model.15} parent=23 // pred_fallthru
        _
    $region24: #{custom_bert_model.15} parent=5 // pred_fallthru
      _
    %p170 = scmp.le.s32.totalorder 1, %s9
    %p171 = scmp.lt.s32.totalorder %s9, 3
    %p172 = pnand %p170, %p171
    %p173 = pneg %p172
    // Predicated region
    $region29: #{custom_bert_model.15} parent=5 // pred_check
      _
    $region30: #{custom_bert_model.15} parent=5 // pred_check_branch
      %175 = sbr.rel (%p172) target = $region32
    $region31: #{custom_bert_model.15} parent=5 // pred_region
      %s176 = ssub.s32 %s9, 1
      %p177 = scmp.lt.s32.totalorder %s19, 1
      %s178 = scalar_select %p177, %s19, 1
      %s179 = smul.addr %s178, 8
      %s180 = scalar_lea.vmem %s0, %s179
      %p181 = pneg %p47
      %p182 = pneg %p44
      %s183 = smul.u32 3, %s18
      %p184 = scmp.lt.s32.totalorder %s183, 2
      %s185 = scalar_select %p184, %s183, 2
      %s186 = smul.addr %s185, 4
      %s187 = scalar_lea.vmem %s1, %s186
      %p188 = pneg %p73
      %p189 = pneg %p70
      %s190 = smul.u32 3, %s18
      %p191 = scmp.lt.s32.totalorder %s190, 2
      %s192 = scalar_select %p191, %s190, 2
      %s193 = scalar_lea.vmem %s2, %s192
      %p194 = pneg %p99
      %p195 = pneg %p96
      %p196 = pneg %p127
      %p197 = pneg %p124
      %s198 = smul.u32 3, %s18
      %p199 = scmp.lt.s32.totalorder %s19, 1
      %s200 = scalar_select %p199, %s19, 1
      %p201 = scmp.lt.s32.totalorder %s198, 2
      %s202 = scalar_select %p201, %s198, 2
      %s203 = smul.addr %s200, 3
      %s204 = sadd.s32 %s202, %s203
      %s205 = smul.addr %s204, 8
      %s206 = scalar_lea.vmem %s3, %s205
      %p207 = scmp.lt.s32.totalorder %s19, 1
      %s208 = scalar_select %p207, %s19, 1
      %s209 = smul.addr %s208, 8
      %s210 = scalar_lea.vmem %s0, %s209
      %s211 = smul.u32 3, %s18
      %p212 = scmp.lt.s32.totalorder %s211, 2
      %s213 = scalar_select %p212, %s211, 2
      %s214 = smul.addr %s213, 4
      %s215 = scalar_lea.vmem %s1, %s214
      %s216 = smul.u32 3, %s18
      %s217 = smul.u32 3, %s18
      %p218 = scmp.lt.s32.totalorder %s217, 2
      %s219 = scalar_select %p218, %s217, 2
      %s220 = scalar_lea.vmem %s2, %s219
      %s221 = smul.u32 3, %s18
      %s222 = smul.u32 3, %s18
      %p223 = scmp.lt.s32.totalorder %s19, 1
      %s224 = scalar_select %p223, %s19, 1
      %p225 = scmp.lt.s32.totalorder %s222, 2
      %s226 = scalar_select %p225, %s222, 2
      %s227 = smul.addr %s224, 3
      %s228 = sadd.s32 %s226, %s227
      %s229 = smul.addr %s228, 8
      %s230 = scalar_lea.vmem %s3, %s229
      %s231 = smul.u32 3, %s18
      %v233 = vld [vmem:[%s210] sm:$0xff]
      %v234 = vpack.c.bf16 %v233, %v233
      %v235 = vld [vmem:[%s215] sm:$0xff]
      %v236 = vld [vmem:[%s215 + $0x8] sm:$0xf]
      %v237 = vld [vmem:[%s215 + $0xc] sm:$0xff]
      %v238 = vld [vmem:[%s215 + $0x14] sm:$0xf]
      %v239 = vld [vmem:[%s215 + $0x18] sm:$0xff]
      %v240 = vld [vmem:[%s215 + $0x20] sm:$0xf]
      %v241 = vld [vmem:[%s215 + $0x24] sm:$0xff]
      %v242 = vld [vmem:[%s215 + $0x2c] sm:$0xf]
      %v243 = vld [vmem:[%s215 + $0x30] sm:$0xff]
      %v244 = vld [vmem:[%s215 + $0x38] sm:$0xf]
      %v245 = vld [vmem:[%s215 + $0x3c] sm:$0xff]
      %v246 = vld [vmem:[%s215 + $0x44] sm:$0xf]
      %v247 = vld [vmem:[%s215 + $0x48] sm:$0xff]
      %v248 = vld [vmem:[%s215 + $0x50] sm:$0xf]
      %v249 = vld [vmem:[%s215 + $0x54] sm:$0xff]
      %v250 = vld [vmem:[%s215 + $0x5c] sm:$0xf]
      %v251 = vld [vmem:[%s215 + $0x60] sm:$0xff]
      %v252 = vld [vmem:[%s215 + $0x68] sm:$0xf]
      %v253 = vld [vmem:[%s215 + $0x6c] sm:$0xff]
      %v254 = vld [vmem:[%s215 + $0x74] sm:$0xf]
      %v255 = vld [vmem:[%s215 + $0x78] sm:$0xff]
      %v256 = vld [vmem:[%s215 + $0x80] sm:$0xf]
      %v257 = vld [vmem:[%s215 + $0x84] sm:$0xff]
      %v258 = vld [vmem:[%s215 + $0x8c] sm:$0xf]
      %v259 = vld [vmem:[%s215 + $0x90] sm:$0xff]
      %v260 = vld [vmem:[%s215 + $0x98] sm:$0xf]
      %v261 = vld [vmem:[%s215 + $0x9c] sm:$0xff]
      %v262 = vld [vmem:[%s215 + $0xa4] sm:$0xf]
      %v263 = vld [vmem:[%s215 + $0xa8] sm:$0xff]
      %v264 = vld [vmem:[%s215 + $0xb0] sm:$0xf]
      %v265 = vld [vmem:[%s215 + $0xb4] sm:$0xff]
      %v266 = vld [vmem:[%s215 + $0xbc] sm:$0xf]
      %v267 = vld [vmem:[%s220] sm:$0x7]
      %v269 = vlaneseq
      %v270 = vshrl.u32 %v269, 7
      %v271 = vsub.s32 0, %v270
      %v272 = vrot.slane %v267, %v271
      %v273 = vlaneseq
      %v274 = vshrl.u32 %v273, 7
      %v275 = vsub.s32 1, %v274
      %v276 = vrot.slane %v267, %v275
      %v277 = vlaneseq
      %v278 = vshrl.u32 %v277, 7
      %v279 = vsub.s32 2, %v278
      %v280 = vrot.slane %v267, %v279
      %v316 = vunpack.c.l.b16 %v235
      %v317 = vunpack.c.h.b16 %v235
      %v318 = vunpack.c.l.b16 %v236
      %v319 = vunpack.c.l.b16 %v237
      %v320 = vunpack.c.h.b16 %v237
      %v321 = vunpack.c.l.b16 %v238
      %v322 = vunpack.c.l.b16 %v239
      %v323 = vunpack.c.h.b16 %v239
      %v324 = vunpack.c.l.b16 %v240
      %v325 = vunpack.c.l.b16 %v241
      %v326 = vunpack.c.h.b16 %v241
      %v327 = vunpack.c.l.b16 %v242
      %v328 = vunpack.c.l.b16 %v243
      %v329 = vunpack.c.h.b16 %v243
      %v330 = vunpack.c.l.b16 %v244
      %v331 = vunpack.c.l.b16 %v245
      %v332 = vunpack.c.h.b16 %v245
      %v333 = vunpack.c.l.b16 %v246
      %v334 = vunpack.c.l.b16 %v247
      %v335 = vunpack.c.h.b16 %v247
      %v336 = vunpack.c.l.b16 %v248
      %v337 = vunpack.c.l.b16 %v249
      %v338 = vunpack.c.h.b16 %v249
      %v339 = vunpack.c.l.b16 %v250
      %v340 = vunpack.c.l.b16 %v251
      %v341 = vunpack.c.h.b16 %v251
      %v342 = vunpack.c.l.b16 %v252
      %v343 = vunpack.c.l.b16 %v253
      %v344 = vunpack.c.h.b16 %v253
      %v345 = vunpack.c.l.b16 %v254
      %v346 = vunpack.c.l.b16 %v255
      %v347 = vunpack.c.h.b16 %v255
      %v348 = vunpack.c.l.b16 %v256
      %v349 = vunpack.c.l.b16 %v257
      %v350 = vunpack.c.h.b16 %v257
      %v351 = vunpack.c.l.b16 %v258
      %v352 = vunpack.c.l.b16 %v259
      %v353 = vunpack.c.h.b16 %v259
      %v354 = vunpack.c.l.b16 %v260
      %v355 = vunpack.c.l.b16 %v261
      %v356 = vunpack.c.h.b16 %v261
      %v357 = vunpack.c.l.b16 %v262
      %v358 = vunpack.c.l.b16 %v263
      %v359 = vunpack.c.h.b16 %v263
      %v360 = vunpack.c.l.b16 %v264
      %v361 = vunpack.c.l.b16 %v265
      %v362 = vunpack.c.h.b16 %v265
      %v363 = vunpack.c.l.b16 %v266
      %v364 = vpack.c.b16 %v319, %v316
      %v365 = vpack.c.b16 %v320, %v317
      %v366 = vpack.c.b16 %v321, %v318
      %v367 = vpack.c.b16 %v325, %v322
      %v368 = vpack.c.b16 %v326, %v323
      %v369 = vpack.c.b16 %v327, %v324
      %v370 = vpack.c.b16 %v331, %v328
      %v371 = vpack.c.b16 %v332, %v329
      %v372 = vpack.c.b16 %v333, %v330
      %v373 = vpack.c.b16 %v337, %v334
      %v374 = vpack.c.b16 %v338, %v335
      %v375 = vpack.c.b16 %v339, %v336
      %v376 = vpack.c.b16 %v343, %v340
      %v377 = vpack.c.b16 %v344, %v341
      %v378 = vpack.c.b16 %v345, %v342
      %v379 = vpack.c.b16 %v349, %v346
      %v380 = vpack.c.b16 %v350, %v347
      %v381 = vpack.c.b16 %v351, %v348
      %v382 = vpack.c.b16 %v355, %v352
      %v383 = vpack.c.b16 %v356, %v353
      %v384 = vpack.c.b16 %v357, %v354
      %v385 = vpack.c.b16 %v361, %v358
      %v386 = vpack.c.b16 %v362, %v359
      %v387 = vpack.c.b16 %v363, %v360
      %412 = vmatprep.subr.bf16.mxu0 %v365
      %413 = vmatpush1.bf16.msra.mxu0 %v364
      %414 = vmatprep.subr.bf16.mxu0 %v368
      %415 = vmatpush1.bf16.msra.mxu0 %v367
      %416 = vmatprep.subr.bf16.mxu0 %v371
      %417 = vmatpush1.bf16.msra.mxu0 %v370
      %418 = vmatprep.subr.bf16.mxu0 %v374
      %419 = vmatpush1.bf16.msra.mxu0 %v373
      %420 = vmatprep.subr.bf16.mxu0 %v377
      %421 = vmatpush1.bf16.msra.mxu0 %v376
      %422 = vmatprep.subr.bf16.mxu0 %v380
      %423 = vmatpush1.bf16.msra.mxu0 %v379
      %424 = vmatprep.subr.bf16.mxu0 %v383
      %425 = vmatpush1.bf16.msra.mxu0 %v382
      %426 = vmatprep.subr.bf16.mxu0 %v386
      %427 = vmatpush1.bf16.msra.mxu0 %v385
      %428 = vmatprep.subr.bf16.mxu0 0
      %429 = vmatpush1.bf16.msra.mxu0 0
      %430 = vmatprep.subr.bf16.mxu0 0
      %431 = vmatpush1.bf16.msra.mxu0 0
      %432 = vmatprep.subr.bf16.mxu0 0
      %433 = vmatpush1.bf16.msra.mxu0 0
      %434 = vmatprep.subr.bf16.mxu0 0
      %435 = vmatpush1.bf16.msra.mxu0 0
      %436 = vmatprep.subr.bf16.mxu0 0
      %437 = vmatpush1.bf16.msra.mxu0 0
      %438 = vmatprep.subr.bf16.mxu0 0
      %439 = vmatpush1.bf16.msra.mxu0 0
      %440 = vmatprep.subr.bf16.mxu0 0
      %441 = vmatpush1.bf16.msra.mxu0 0
      %442 = vmatprep.subr.bf16.mxu0 0
      %443 = vmatpush1.bf16.msra.mxu0 0
      %444 = vmatprep.mubr.bf16.mxu0 0
      %445 = vmatmul.mubr.bf16.gmra.mrb[0].mxu0 %v234
      %v446 = vpop.f32.mrb[0].mxu0
      %v447 = vadd.f32 %v272, %v446
      %v448 = vpop.f32.mrb[0].mxu0
      %v449 = vadd.f32 %v276, %v448
      %v450 = vpop.f32.mrb[0].mxu0
      %v451 = vpop.f32.mrb[0].mxu0
      %452 = vdwg.mxu0
      %453 = vmatprep.subr.bf16.mxu0 0
      %454 = vmatpush1.bf16.msra.mxu0 %v366
      %455 = vmatprep.subr.bf16.mxu0 0
      %456 = vmatpush1.bf16.msra.mxu0 %v369
      %457 = vmatprep.subr.bf16.mxu0 0
      %458 = vmatpush1.bf16.msra.mxu0 %v372
      %459 = vmatprep.subr.bf16.mxu0 0
      %460 = vmatpush1.bf16.msra.mxu0 %v375
      %461 = vmatprep.subr.bf16.mxu0 0
      %462 = vmatpush1.bf16.msra.mxu0 %v378
      %463 = vmatprep.subr.bf16.mxu0 0
      %464 = vmatpush1.bf16.msra.mxu0 %v381
      %465 = vmatprep.subr.bf16.mxu0 0
      %466 = vmatpush1.bf16.msra.mxu0 %v384
      %467 = vmatprep.subr.bf16.mxu0 0
      %468 = vmatpush1.bf16.msra.mxu0 %v387
      %469 = vmatprep.subr.bf16.mxu0 0
      %470 = vmatpush1.bf16.msra.mxu0 0
      %471 = vmatprep.subr.bf16.mxu0 0
      %472 = vmatpush1.bf16.msra.mxu0 0
      %473 = vmatprep.subr.bf16.mxu0 0
      %474 = vmatpush1.bf16.msra.mxu0 0
      %475 = vmatprep.subr.bf16.mxu0 0
      %476 = vmatpush1.bf16.msra.mxu0 0
      %477 = vmatprep.subr.bf16.mxu0 0
      %478 = vmatpush1.bf16.msra.mxu0 0
      %479 = vmatprep.subr.bf16.mxu0 0
      %480 = vmatpush1.bf16.msra.mxu0 0
      %481 = vmatprep.subr.bf16.mxu0 0
      %482 = vmatpush1.bf16.msra.mxu0 0
      %483 = vmatprep.subr.bf16.mxu0 0
      %484 = vmatpush1.bf16.msra.mxu0 0
      %485 = vmatprep.mubr.bf16.mxu0 0
      %486 = vmatmul.mubr.bf16.gmra.mrb[0].mxu0 %v234
      %v487 = vpop.f32.mrb[0].mxu0
      %v488 = vadd.f32 %v280, %v487
      %v489 = vpop.f32.mrb[0].mxu0
      %v490 = vpop.f32.mrb[0].mxu0
      %v491 = vpop.f32.mrb[0].mxu0
      %492 = vdwg.mxu0
      %493 = vst [vmem:[%s230] sm:$0xff] %v447
      %494 = vst [vmem:[%s230 + $0x8] sm:$0xff] %v449
      %495 = vst [vmem:[%s230 + $0x10] sm:$0xff] %v488
      %s496 = smul.u32 3, %s18
      %p497 = scmp.lt.s32.totalorder %s19, 1
      %s498 = scalar_select %p497, %s19, 1
      %p499 = scmp.lt.s32.totalorder %s496, 2
      %s500 = scalar_select %p499, %s496, 2
      %s501 = smul.addr %s498, 3
      %s502 = sadd.s32 %s500, %s501
      %s503 = smul.addr %s502, 8
      %s504 = scalar_lea.vmem %s3, %s503
      // Predicated region
      $region33: #{custom_bert_model.15} parent=31 // pred_check
        %p505 = pneg %p124
      $region34: #{custom_bert_model.15} parent=31 // pred_check_branch
        %507 = sbr.rel (%p505) target = $region36
      $region35: #{custom_bert_model.15} parent=31 // pred_region
        %s508 = smul.u32 3, %s18
      $region36: #{custom_bert_model.15} parent=31 // pred_fallthru
        _
    $region32: #{custom_bert_model.15} parent=5 // pred_fallthru
      _
    %p509 = scmp.le.s32.totalorder 2, %s9
    // Predicated region
    $region37: #{custom_bert_model.15} parent=5 // pred_check
      %p510 = pneg %p509
    $region38: #{custom_bert_model.15} parent=5 // pred_check_branch
      %512 = sbr.rel (%p510) target = $region40
    $region39: #{custom_bert_model.15} parent=5 // pred_region
      %s513 = ssub.s32 %s9, 2
      // Predicated region
      $region41: #{custom_bert_model.15} parent=39 // pred_check
        %p514 = pneg %p130
      $region42: #{custom_bert_model.15} parent=39 // pred_check_branch
        %516 = sbr.rel (%p514) target = $region44
      $region43: #{custom_bert_model.15} parent=39 // pred_region
        %s517 = smul.u32 3, %s20
        %p518 = scmp.lt.s32.totalorder %s21, 1
        %s519 = scalar_select %p518, %s21, 1
        %p520 = scmp.lt.s32.totalorder %s517, 2
        %s521 = scalar_select %p520, %s517, 2
        %s522 = smul.addr %s519, 3
        %s523 = sadd.s32 %s521, %s522
        %s524 = smul.addr %s523, 8
        %s525 = scalar_lea.vmem %s3, %s524
      $region44: #{custom_bert_model.15} parent=39 // pred_fallthru
        _
    $region40: #{custom_bert_model.15} parent=5 // pred_fallthru
      _
  $region6: #{custom_bert_model.15} parent=0 // loop_footer
    %s13 = sadd.s32 1, %s9
  $region7: #{custom_bert_model.15} parent=0 // loop_footer_branch
    %8 = sbr.rel target = $region3
  $region8: #{custom_bert_model.15} parent=0 // loop_exit
    _

// kernel: custom_bert_model.19
$region0: #{custom_bert_model.19}
  #allocation0 [shape = 'u32[]', space=smem, size = 0x4, offset = 0x4, fixed_abs, tag = 'smem constant byte address 0x4 - core index']
  #allocation1 [shape = 'u32[144,128]{1,0:T(1,128)}', space=vmem, size = 0x12000, scoped, tag = 'internal scratch']
  #allocation2 [shape = 'f32[8,128]{1,0:T(8,128)}', space=vmem, size = 0x1000, scoped, tag = 'scratch operand']
  %s0 = inlined_call_operand.vmem [shape: bf16[16,256], index: 0, kind: input, shape index: {}]
  %s1 = inlined_call_operand.vmem [shape: bf16[256,128], index: 1, kind: input, shape index: {}]
  %s2 = inlined_call_operand.vmem [shape: f32[1,128], index: 2, kind: input, shape index: {}]
  %s3 = inlined_call_operand.vmem [shape: f32[16,128], index: 3, kind: input, shape index: {}]
  %s4 = inlined_call_operand.vmem [shape: f32[1,128], index: 4, kind: input, shape index: {}]
  %s5 = inlined_call_operand.vmem [shape: f32[1,128], index: 5, kind: input, shape index: {}]
  %s6 = inlined_call_operand.hbm [shape: f32[16,128], index: 6, kind: output, shape index: {}]
  %s7 = sld [smem:[#allocation0]]
  $region65: #{custom_bert_model.19} parent=0
    _
  %s9 = ssub.s32 1, %s7
  %s10 = scalar_select 0, %s9, %s7
  $region1: #{custom_bert_model.19} parent=0
    #allocation3 [shape = 'u8[8192]{0}', space=vmem, size = 0x2000, scoped, tag = 'output window, operand 0']
    #allocation4 [shape = 's32[2]{0}', space=sflag, size = 0x8, scoped, tag = 'scoped memory for custom_bert_model.19']
    %11 = vsyncpa [#allocation4], 0
    %s12 = scalar_lea.sflag [#allocation4], 1
    %13 = vsyncpa %s12, 0
    loop: start=0, step=1, limit=4
    $region2: #{custom_bert_model.19} parent=1 // loop_pre_header
      _
    $region3: #{custom_bert_model.19} parent=1 // loop_header
      %s15 = sphi 0, %s19
      %p16 = scmp.ge.s32.totalorder %s15, 4
      %s22 = sphi 0, %s34
      %s23 = sphi 0, %s30
      %s24 = sphi 0, %s22
      %s25 = sphi 0, %s23
      %s26 = sphi 0, %s24
      %s27 = sphi 0, %s25
      %s39 = sphi 0, %s41
      %s42 = sphi 0, %s39
      %s43 = sphi 0, %s42
      %s59 = sphi 0, %s43
      %s65 = sphi 0, %s67
      %s68 = sphi 0, %s65
      %s69 = sphi 0, %s68
      %s85 = sphi 0, %s69
      %s89 = sphi 0, %s89
      %s91 = sphi 0, %s89
      %s92 = sphi 0, %s91
      %s106 = sphi 0, %s92
      %s112 = sphi 0, %s114
      %s115 = sphi 0, %s112
      %s116 = sphi 0, %s115
      %s132 = sphi 0, %s116
      %s136 = sphi 0, %s136
      %s138 = sphi 0, %s136
      %s139 = sphi 0, %s138
      %s153 = sphi 0, %s139
      %s157 = sphi 0, %s157
      %s159 = sphi 0, %s157
      %s160 = sphi 0, %s159
      %s174 = sphi 0, %s160
      %s180 = sphi 0, %s182
      %s183 = sphi 0, %s180
      %s184 = sphi 0, %s183
      %s200 = sphi 0, %s184
    $region4: #{custom_bert_model.19} parent=1 // loop_header_branch
      %18 = sbr.rel (%p16) target = $region8
    $region5: #{custom_bert_model.19} parent=1 // loop_body
      %s20 = ssub.s32 %s15, 1
      %s21 = ssub.s32 %s15, 2
      %s28 = sadd.s32 1, %s23
      %p29 = scmp.ge.s32.totalorder %s28, 1
      %s30 = scalar_select %p29, 0, %s28
      %s31 = sadd.s32 1, %s22
      %s32 = scalar_select %p29, %s31, %s22
      %p33 = scmp.ge.s32.totalorder %s32, 2
      %s34 = scalar_select %p33, 0, %s32
      %s35 = ssub.s32 %s22, %s34
      %s36 = ssub.s32 %s23, %s30
      %s37 = sor.u32 %s35, %s36
      %p38 = scmp.eq.s32.totalorder %s37, 0
      %s40 = sadd.s32 %s39, 1
      %s41 = scalar_select %p38, %s39, %s40
      %p44 = pneg %p38
      %p45 = scmp.eq.s32.totalorder %s15, 1
      %p46 = por %p44, %p45
      %p47 = scmp.ne.s32.totalorder %s39, %s42
      %p48 = scmp.eq.s32.totalorder %s15, 0
      %p49 = por %p47, %p48
      %p50 = scmp.ne.s32.totalorder %s39, %s42
      %p51 = scmp.eq.s32.totalorder %s20, 1
      %p52 = por %p50, %p51
      %p53 = scmp.ne.s32.totalorder %s42, %s43
      %p54 = scmp.eq.s32.totalorder %s20, 0
      %p55 = por %p53, %p54
      %p56 = scmp.ne.s32.totalorder %s42, %s43
      %p57 = scmp.eq.s32.totalorder %s21, 1
      %p58 = por %p56, %p57
      %p60 = scmp.ne.s32.totalorder %s43, %s59
      %p61 = scmp.eq.s32.totalorder %s21, 0
      %p62 = por %p60, %p61
      %s63 = ssub.s32 %s23, %s30
      %p64 = scmp.eq.s32.totalorder %s63, 0
      %s66 = sadd.s32 %s65, 1
      %s67 = scalar_select %p64, %s65, %s66
      %p70 = pneg %p64
      %p71 = scmp.eq.s32.totalorder %s15, 1
      %p72 = por %p70, %p71
      %p73 = scmp.ne.s32.totalorder %s65, %s68
      %p74 = scmp.eq.s32.totalorder %s15, 0
      %p75 = por %p73, %p74
      %p76 = scmp.ne.s32.totalorder %s65, %s68
      %p77 = scmp.eq.s32.totalorder %s20, 1
      %p78 = por %p76, %p77
      %p79 = scmp.ne.s32.totalorder %s68, %s69
      %p80 = scmp.eq.s32.totalorder %s20, 0
      %p81 = por %p79, %p80
      %p82 = scmp.ne.s32.totalorder %s68, %s69
      %p83 = scmp.eq.s32.totalorder %s21, 1
      %p84 = por %p82, %p83
      %p86 = scmp.ne.s32.totalorder %s69, %s85
      %p87 = scmp.eq.s32.totalorder %s21, 0
      %p88 = por %p86, %p87
      %s90 = sadd.s32 %s89, 1
      %p93 = scmp.eq.s32.totalorder %s15, 1
      %p94 = scmp.ne.s32.totalorder %s89, %s91
      %p95 = scmp.eq.s32.totalorder %s15, 0
      %p96 = por %p94, %p95
      %p97 = scmp.ne.s32.totalorder %s89, %s91
      %p98 = scmp.eq.s32.totalorder %s20, 1
      %p99 = por %p97, %p98
      %p100 = scmp.ne.s32.totalorder %s91, %s92
      %p101 = scmp.eq.s32.totalorder %s20, 0
      %p102 = por %p100, %p101
      %p103 = scmp.ne.s32.totalorder %s91, %s92
      %p104 = scmp.eq.s32.totalorder %s21, 1
      %p105 = por %p103, %p104
      %p107 = scmp.ne.s32.totalorder %s92, %s106
      %p108 = scmp.eq.s32.totalorder %s21, 0
      %p109 = por %p107, %p108
      %s110 = ssub.s32 %s22, %s34
      %p111 = scmp.eq.s32.totalorder %s110, 0
      %s113 = sadd.s32 %s112, 1
      %s114 = scalar_select %p111, %s112, %s113
      %p117 = pneg %p111
      %p118 = scmp.eq.s32.totalorder %s15, 1
      %p119 = por %p117, %p118
      %p120 = scmp.ne.s32.totalorder %s112, %s115
      %p121 = scmp.eq.s32.totalorder %s15, 0
      %p122 = por %p120, %p121
      %p123 = scmp.ne.s32.totalorder %s112, %s115
      %p124 = scmp.eq.s32.totalorder %s20, 1
      %p125 = por %p123, %p124
      %p126 = scmp.ne.s32.totalorder %s115, %s116
      %p127 = scmp.eq.s32.totalorder %s20, 0
      %p128 = por %p126, %p127
      %p129 = scmp.ne.s32.totalorder %s115, %s116
      %p130 = scmp.eq.s32.totalorder %s21, 1
      %p131 = por %p129, %p130
      %p133 = scmp.ne.s32.totalorder %s116, %s132
      %p134 = scmp.eq.s32.totalorder %s21, 0
      %p135 = por %p133, %p134
      %s137 = sadd.s32 %s136, 1
      %p140 = scmp.eq.s32.totalorder %s15, 1
      %p141 = scmp.ne.s32.totalorder %s136, %s138
      %p142 = scmp.eq.s32.totalorder %s15, 0
      %p143 = por %p141, %p142
      %p144 = scmp.ne.s32.totalorder %s136, %s138
      %p145 = scmp.eq.s32.totalorder %s20, 1
      %p146 = por %p144, %p145
      %p147 = scmp.ne.s32.totalorder %s138, %s139
      %p148 = scmp.eq.s32.totalorder %s20, 0
      %p149 = por %p147, %p148
      %p150 = scmp.ne.s32.totalorder %s138, %s139
      %p151 = scmp.eq.s32.totalorder %s21, 1
      %p152 = por %p150, %p151
      %p154 = scmp.ne.s32.totalorder %s139, %s153
      %p155 = scmp.eq.s32.totalorder %s21, 0
      %p156 = por %p154, %p155
      %s158 = sadd.s32 %s157, 1
      %p161 = scmp.eq.s32.totalorder %s15, 1
      %p162 = scmp.ne.s32.totalorder %s157, %s159
      %p163 = scmp.eq.s32.totalorder %s15, 0
      %p164 = por %p162, %p163
      %p165 = scmp.ne.s32.totalorder %s157, %s159
      %p166 = scmp.eq.s32.totalorder %s20, 1
      %p167 = por %p165, %p166
      %p168 = scmp.ne.s32.totalorder %s159, %s160
      %p169 = scmp.eq.s32.totalorder %s20, 0
      %p170 = por %p168, %p169
      %p171 = scmp.ne.s32.totalorder %s159, %s160
      %p172 = scmp.eq.s32.totalorder %s21, 1
      %p173 = por %p171, %p172
      %p175 = scmp.ne.s32.totalorder %s160, %s174
      %p176 = scmp.eq.s32.totalorder %s21, 0
      %p177 = por %p175, %p176
      %s178 = ssub.s32 %s22, %s34
      %p179 = scmp.eq.s32.totalorder %s178, 0
      %s181 = sadd.s32 %s180, 1
      %s182 = scalar_select %p179, %s180, %s181
      %p185 = pneg %p179
      %p186 = scmp.eq.s32.totalorder %s15, 1
      %p187 = por %p185, %p186
      %p188 = scmp.ne.s32.totalorder %s180, %s183
      %p189 = scmp.eq.s32.totalorder %s15, 0
      %p190 = por %p188, %p189
      %p191 = scmp.ne.s32.totalorder %s180, %s183
      %p192 = scmp.eq.s32.totalorder %s20, 1
      %p193 = por %p191, %p192
      %p194 = scmp.ne.s32.totalorder %s183, %s184
      %p195 = scmp.eq.s32.totalorder %s20, 0
      %p196 = por %p194, %p195
      %p197 = scmp.ne.s32.totalorder %s183, %s184
      %p198 = scmp.eq.s32.totalorder %s21, 1
      %p199 = por %p197, %p198
      %p201 = scmp.ne.s32.totalorder %s184, %s200
      %p202 = scmp.eq.s32.totalorder %s21, 0
      %p203 = por %p201, %p202
      %p204 = scmp.le.s32.totalorder 1, %s15
      %p205 = scmp.lt.s32.totalorder %s15, 3
      %p206 = pnand %p204, %p205
      %p207 = pneg %p206
      // Predicated region
      $region9: #{custom_bert_model.19} parent=5 // pred_check
        _
      $region10: #{custom_bert_model.19} parent=5 // pred_check_branch
        %209 = sbr.rel (%p206) target = $region12
      $region11: #{custom_bert_model.19} parent=5 // pred_region
        %s210 = ssub.s32 %s15, 1
        // Predicated region
        $region13: #{custom_bert_model.19} parent=11 // pred_check
          %p211 = pneg %p81
        $region14: #{custom_bert_model.19} parent=11 // pred_check_branch
          %213 = sbr.rel (%p211) target = $region16
        $region15: #{custom_bert_model.19} parent=11 // pred_region
          %s214 = smul.u32 32, %s25
          %p215 = scmp.lt.s32.totalorder %s214, 31
          %s216 = scalar_select %p215, %s214, 31
          %s217 = smul.addr %s216, 4
          %s218 = scalar_lea.vmem %s1, %s217
          %s219 = smul.u32 32, %s25
        $region16: #{custom_bert_model.19} parent=11 // pred_fallthru
          _
        // Predicated region
        $region17: #{custom_bert_model.19} parent=11 // pred_check
          %p220 = pneg %p102
        $region18: #{custom_bert_model.19} parent=11 // pred_check_branch
          %222 = sbr.rel (%p220) target = $region20
        $region19: #{custom_bert_model.19} parent=11 // pred_region
          _
        $region20: #{custom_bert_model.19} parent=11 // pred_fallthru
          _
        // Predicated region
        $region21: #{custom_bert_model.19} parent=11 // pred_check
          %p223 = pneg %p149
        $region22: #{custom_bert_model.19} parent=11 // pred_check_branch
          %225 = sbr.rel (%p223) target = $region24
        $region23: #{custom_bert_model.19} parent=11 // pred_region
          _
        $region24: #{custom_bert_model.19} parent=11 // pred_fallthru
          _
        // Predicated region
        $region25: #{custom_bert_model.19} parent=11 // pred_check
          %p226 = pneg %p170
        $region26: #{custom_bert_model.19} parent=11 // pred_check_branch
          %228 = sbr.rel (%p226) target = $region28
        $region27: #{custom_bert_model.19} parent=11 // pred_region
          _
        $region28: #{custom_bert_model.19} parent=11 // pred_fallthru
          _
      $region12: #{custom_bert_model.19} parent=5 // pred_fallthru
        _
      %p229 = scmp.lt.s32.totalorder %s15, 2
      // Predicated region
      $region29: #{custom_bert_model.19} parent=5 // pred_check
        %p230 = pneg %p229
      $region30: #{custom_bert_model.19} parent=5 // pred_check_branch
        %232 = sbr.rel (%p230) target = $region32
      $region31: #{custom_bert_model.19} parent=5 // pred_region
        // Predicated region
        $region33: #{custom_bert_model.19} parent=31 // pred_check
          %p233 = pneg %p49
        $region34: #{custom_bert_model.19} parent=31 // pred_check_branch
          %235 = sbr.rel (%p233) target = $region36
        $region35: #{custom_bert_model.19} parent=31 // pred_region
          %s236 = smul.u32 2, %s23
          %p237 = scmp.lt.s32.totalorder %s22, 1
          %s238 = scalar_select %p237, %s22, 1
          %p239 = scmp.lt.s32.totalorder %s236, 1
          %s240 = scalar_select %p239, %s236, 1
          %s241 = smul.addr %s238, 2
          %s242 = sadd.s32 %s240, %s241
          %s243 = smul.addr %s242, 4
          %s244 = scalar_lea.vmem %s0, %s243
          %s245 = smul.u32 2, %s23
        $region36: #{custom_bert_model.19} parent=31 // pred_fallthru
          _
        // Predicated region
        $region37: #{custom_bert_model.19} parent=31 // pred_check
          %p246 = pneg %p122
        $region38: #{custom_bert_model.19} parent=31 // pred_check_branch
          %248 = sbr.rel (%p246) target = $region40
        $region39: #{custom_bert_model.19} parent=31 // pred_region
          %p249 = scmp.lt.s32.totalorder %s22, 1
          %s250 = scalar_select %p249, %s22, 1
          %s251 = smul.addr %s250, 8
          %s252 = scalar_lea.vmem %s3, %s251
        $region40: #{custom_bert_model.19} parent=31 // pred_fallthru
          _
      $region32: #{custom_bert_model.19} parent=5 // pred_fallthru
        _
      %p253 = scmp.le.s32.totalorder 1, %s15
      %p254 = scmp.lt.s32.totalorder %s15, 3
      %p255 = pnand %p253, %p254
      %p256 = pneg %p255
      // Predicated region
      $region41: #{custom_bert_model.19} parent=5 // pred_check
        _
      $region42: #{custom_bert_model.19} parent=5 // pred_check_branch
        %258 = sbr.rel (%p255) target = $region44
      $region43: #{custom_bert_model.19} parent=5 // pred_region
        %s259 = ssub.s32 %s15, 1
        %s260 = smul.u32 2, %s25
        %p261 = scmp.lt.s32.totalorder %s24, 1
        %s262 = scalar_select %p261, %s24, 1
        %p263 = scmp.lt.s32.totalorder %s260, 1
        %s264 = scalar_select %p263, %s260, 1
        %s265 = smul.addr %s262, 2
        %s266 = sadd.s32 %s264, %s265
        %s267 = smul.addr %s266, 4
        %s268 = scalar_lea.vmem %s0, %s267
        %p269 = pneg %p55
        %p270 = pneg %p52
        %s271 = smul.u32 32, %s25
        %p272 = scmp.lt.s32.totalorder %s271, 31
        %s273 = scalar_select %p272, %s271, 31
        %s274 = smul.addr %s273, 4
        %s275 = scalar_lea.vmem %s1, %s274
        %p276 = pneg %p81
        %p277 = pneg %p78
        %p278 = pneg %p102
        %p279 = pneg %p99
        %p280 = scmp.lt.s32.totalorder %s24, 1
        %s281 = scalar_select %p280, %s24, 1
        %s282 = smul.addr %s281, 8
        %s283 = scalar_lea.vmem %s3, %s282
        %p284 = pneg %p128
        %p285 = pneg %p125
        %p286 = pneg %p149
        %p287 = pneg %p146
        %p288 = pneg %p170
        %p289 = pneg %p167
        %p290 = pneg %p196
        %p291 = pneg %p193
        %s292 = sand.u32 %s183, 1
        %s293 = scalar_lea.sflag [#allocation4], %s292
        %s294 = sand.u32 %s183, 1
        %s295 = smul.addr %s294, 8
        %s296 = scalar_lea.vmem [#allocation3], %s295
        %s297 = smul.u32 2, %s25
        %p298 = scmp.lt.s32.totalorder %s24, 1
        %s299 = scalar_select %p298, %s24, 1
        %p300 = scmp.lt.s32.totalorder %s297, 1
        %s301 = scalar_select %p300, %s297, 1
        %s302 = smul.addr %s299, 2
        %s303 = sadd.s32 %s301, %s302
        %s304 = smul.addr %s303, 4
        %s305 = scalar_lea.vmem %s0, %s304
        %s306 = smul.u32 2, %s25
        %s307 = smul.u32 32, %s25
        %p308 = scmp.lt.s32.totalorder %s307, 31
        %s309 = scalar_select %p308, %s307, 31
        %s310 = smul.addr %s309, 4
        %s311 = scalar_lea.vmem %s1, %s310
        %s312 = smul.u32 32, %s25
        %p313 = scmp.lt.s32.totalorder %s24, 1
        %s314 = scalar_select %p313, %s24, 1
        %s315 = smul.addr %s314, 8
        %s316 = scalar_lea.vmem %s3, %s315
        %p318 = scmp.eq.s32.totalorder %s25, 0
        // Predicated region
        $region45: #{custom_bert_model.19} parent=43 // pred_check
          %p319 = pneg %p318
        $region46: #{custom_bert_model.19} parent=43 // pred_check_branch
          %321 = sbr.rel (%p319) target = $region48
        $region47: #{custom_bert_model.19} parent=43 // pred_region
          %322 = vst [vmem:[#allocation2] sm:$0xff] 0.0
        $region48: #{custom_bert_model.19} parent=43 // pred_fallthru
          _
        %v323 = vld [vmem:[#allocation2] sm:$0xff]
        %v324 = vld [vmem:[%s305] sm:$0xff]
        %v325 = vld [vmem:[%s311] sm:$0xf]
        %v326 = vld [vmem:[%s311 + $0x4] sm:$0xf]
        %v327 = vld [vmem:[%s311 + $0x8] sm:$0xf]
        %v328 = vld [vmem:[%s311 + $0xc] sm:$0xf]
        %v329 = vld [vmem:[%s311 + $0x10] sm:$0xf]
        %v330 = vld [vmem:[%s311 + $0x14] sm:$0xf]
        %v331 = vld [vmem:[%s311 + $0x18] sm:$0xf]
        %v332 = vld [vmem:[%s311 + $0x1c] sm:$0xf]
        %v333 = vld [vmem:[%s311 + $0x20] sm:$0xf]
        %v334 = vld [vmem:[%s311 + $0x24] sm:$0xf]
        %v335 = vld [vmem:[%s311 + $0x28] sm:$0xf]
        %v336 = vld [vmem:[%s311 + $0x2c] sm:$0xf]
        %v337 = vld [vmem:[%s311 + $0x30] sm:$0xf]
        %v338 = vld [vmem:[%s311 + $0x34] sm:$0xf]
        %v339 = vld [vmem:[%s311 + $0x38] sm:$0xf]
        %v340 = vld [vmem:[%s311 + $0x3c] sm:$0xf]
        %v341 = vld [vmem:[%s311 + $0x40] sm:$0xf]
        %v342 = vld [vmem:[%s311 + $0x44] sm:$0xf]
        %v343 = vld [vmem:[%s311 + $0x48] sm:$0xf]
        %v344 = vld [vmem:[%s311 + $0x4c] sm:$0xf]
        %v345 = vld [vmem:[%s311 + $0x50] sm:$0xf]
        %v346 = vld [vmem:[%s311 + $0x54] sm:$0xf]
        %v347 = vld [vmem:[%s311 + $0x58] sm:$0xf]
        %v348 = vld [vmem:[%s311 + $0x5c] sm:$0xf]
        %v349 = vld [vmem:[%s311 + $0x60] sm:$0xf]
        %v350 = vld [vmem:[%s311 + $0x64] sm:$0xf]
        %v351 = vld [vmem:[%s311 + $0x68] sm:$0xf]
        %v352 = vld [vmem:[%s311 + $0x6c] sm:$0xf]
        %v353 = vld [vmem:[%s311 + $0x70] sm:$0xf]
        %v354 = vld [vmem:[%s311 + $0x74] sm:$0xf]
        %v355 = vld [vmem:[%s311 + $0x78] sm:$0xf]
        %v356 = vld [vmem:[%s311 + $0x7c] sm:$0xf]
        %v358 = vunpack.c.l.b16 %v324
        %v359 = vunpack.c.h.b16 %v324
        %v360 = vpack.c.b16 %v358, %v358
        %v361 = vpack.c.b16 %v359, %v359
        %v396 = vunpack.c.l.b16 %v325
        %v397 = vunpack.c.l.b16 %v326
        %v398 = vunpack.c.l.b16 %v327
        %v399 = vunpack.c.l.b16 %v328
        %v400 = vunpack.c.l.b16 %v329
        %v401 = vunpack.c.l.b16 %v330
        %v402 = vunpack.c.l.b16 %v331
        %v403 = vunpack.c.l.b16 %v332
        %v404 = vunpack.c.l.b16 %v333
        %v405 = vunpack.c.l.b16 %v334
        %v406 = vunpack.c.l.b16 %v335
        %v407 = vunpack.c.l.b16 %v336
        %v408 = vunpack.c.l.b16 %v337
        %v409 = vunpack.c.l.b16 %v338
        %v410 = vunpack.c.l.b16 %v339
        %v411 = vunpack.c.l.b16 %v340
        %v412 = vunpack.c.l.b16 %v341
        %v413 = vunpack.c.l.b16 %v342
        %v414 = vunpack.c.l.b16 %v343
        %v415 = vunpack.c.l.b16 %v344
        %v416 = vunpack.c.l.b16 %v345
        %v417 = vunpack.c.l.b16 %v346
        %v418 = vunpack.c.l.b16 %v347
        %v419 = vunpack.c.l.b16 %v348
        %v420 = vunpack.c.l.b16 %v349
        %v421 = vunpack.c.l.b16 %v350
        %v422 = vunpack.c.l.b16 %v351
        %v423 = vunpack.c.l.b16 %v352
        %v424 = vunpack.c.l.b16 %v353
        %v425 = vunpack.c.l.b16 %v354
        %v426 = vunpack.c.l.b16 %v355
        %v427 = vunpack.c.l.b16 %v356
        %v428 = vpack.c.b16 %v397, %v396
        %v429 = vpack.c.b16 %v399, %v398
        %v430 = vpack.c.b16 %v401, %v400
        %v431 = vpack.c.b16 %v403, %v402
        %v432 = vpack.c.b16 %v405, %v404
        %v433 = vpack.c.b16 %v407, %v406
        %v434 = vpack.c.b16 %v409, %v408
        %v435 = vpack.c.b16 %v411, %v410
        %v436 = vpack.c.b16 %v413, %v412
        %v437 = vpack.c.b16 %v415, %v414
        %v438 = vpack.c.b16 %v417, %v416
        %v439 = vpack.c.b16 %v419, %v418
        %v440 = vpack.c.b16 %v421, %v420
        %v441 = vpack.c.b16 %v423, %v422
        %v442 = vpack.c.b16 %v425, %v424
        %v443 = vpack.c.b16 %v427, %v426
        %460 = vmatprep.subr.bf16.mxu0 0
        %461 = vmatpush1.bf16.msra.mxu0 %v428
        %462 = vmatprep.subr.bf16.mxu0 0
        %463 = vmatpush1.bf16.msra.mxu0 %v429
        %464 = vmatprep.subr.bf16.mxu0 0
        %465 = vmatpush1.bf16.msra.mxu0 %v430
        %466 = vmatprep.subr.bf16.mxu0 0
        %467 = vmatpush1.bf16.msra.mxu0 %v431
        %468 = vmatprep.subr.bf16.mxu0 0
        %469 = vmatpush1.bf16.msra.mxu0 %v432
        %470 = vmatprep.subr.bf16.mxu0 0
        %471 = vmatpush1.bf16.msra.mxu0 %v433
        %472 = vmatprep.subr.bf16.mxu0 0
        %473 = vmatpush1.bf16.msra.mxu0 %v434
        %474 = vmatprep.subr.bf16.mxu0 0
        %475 = vmatpush1.bf16.msra.mxu0 %v435
        %476 = vmatprep.subr.bf16.mxu0 0
        %477 = vmatpush1.bf16.msra.mxu0 %v436
        %478 = vmatprep.subr.bf16.mxu0 0
        %479 = vmatpush1.bf16.msra.mxu0 %v437
        %480 = vmatprep.subr.bf16.mxu0 0
        %481 = vmatpush1.bf16.msra.mxu0 %v438
        %482 = vmatprep.subr.bf16.mxu0 0
        %483 = vmatpush1.bf16.msra.mxu0 %v439
        %484 = vmatprep.subr.bf16.mxu0 0
        %485 = vmatpush1.bf16.msra.mxu0 %v440
        %486 = vmatprep.subr.bf16.mxu0 0
        %487 = vmatpush1.bf16.msra.mxu0 %v441
        %488 = vmatprep.subr.bf16.mxu0 0
        %489 = vmatpush1.bf16.msra.mxu0 %v442
        %490 = vmatprep.subr.bf16.mxu0 0
        %491 = vmatpush1.bf16.msra.mxu0 %v443
        %492 = vmatprep.mubr.bf16.mxu0 %v361
        %493 = vmatmul.mubr.bf16.gmra.mrb[0].mxu0 %v360
        %v494 = vpop.f32.mrb[0].mxu0
        %v495 = vadd.f32 0.0, %v494
        %v496 = vpop.f32.mrb[0].mxu0
        %v497 = vpop.f32.mrb[0].mxu0
        %v498 = vpop.f32.mrb[0].mxu0
        %499 = vdwg.mxu0
        %v500 = vadd.f32 %v323, %v495
        %501 = vst [vmem:[#allocation2] sm:$0xff] %v500
        // Predicated region
        $region49: #{custom_bert_model.19} parent=43 // pred_check
          %p502 = pneg %p318
        $region50: #{custom_bert_model.19} parent=43 // pred_check_branch
          %504 = sbr.rel (%p502) target = $region52
        $region51: #{custom_bert_model.19} parent=43 // pred_region
          %v505 = vld [vmem:[#allocation2] sm:$0xff]
          %v506 = vld [vmem:[%s2] sm:$0x1]
          %v508 = vlaneseq
          %v509 = vshrl.u32 %v508, 7
          %v510 = vsub.s32 0, %v509
          %v511 = vrot.slane %v506, %v510
          %v513 = vadd.f32 %v505, %v511
          %v514 = vld [vmem:[%s316] sm:$0xff]
          %v515 = vadd.f32 %v513, %v514
          %516 = vadd.xlane.f32.xlu0 %v515
          %v517 = vpop.xlane.xlu0 %516
          %v518 = vrcp.pop 128.0
          %v519 = vmul.f32 %v517, %v518
          %v520 = vsub.f32 %v515, %v519
          %v521 = vmul.f32 %v520, %v520
          %522 = vadd.xlane.f32.xlu0 %v521
          %v523 = vpop.xlane.xlu0 %522
          %v524 = vmul.f32 %v523, %v518
          %v525 = vadd.f32 %v524, 1e-12
          %v526 = vrsqrt.pop %v525
          %v527 = vmul.f32 %v520, %v526
          %v528 = vld [vmem:[%s4] sm:$0x1]
          %v530 = vlaneseq
          %v531 = vshrl.u32 %v530, 7
          %v532 = vsub.s32 0, %v531
          %v533 = vrot.slane %v528, %v532
          %v535 = vmul.f32 %v527, %v533
          %v536 = vld [vmem:[%s5] sm:$0x1]
          %v538 = vlaneseq
          %v539 = vshrl.u32 %v538, 7
          %v540 = vsub.s32 0, %v539
          %v541 = vrot.slane %v536, %v540
          %v543 = vadd.f32 %v535, %v541
          %544 = vst [vmem:[%s296] sm:$0xff] %v543
        $region52: #{custom_bert_model.19} parent=43 // pred_fallthru
          _
        %s545 = sand.u32 %s183, 1
        %s546 = scalar_lea.sflag [#allocation4], %s545
        %s547 = sand.u32 %s183, 1
        %s548 = smul.addr %s547, 8
        %s549 = scalar_lea.vmem [#allocation3], %s548
        // Predicated region
        $region53: #{custom_bert_model.19} parent=43 // pred_check
          %p550 = pneg %p193
        $region54: #{custom_bert_model.19} parent=43 // pred_check_branch
          %552 = sbr.rel (%p550) target = $region56
        $region55: #{custom_bert_model.19} parent=43 // pred_region
          %s554 = ssub.s32 128, 128
          %555 = vsyncadd %s546, %s554
          %s556 = smul.addr %s24, 128
          %s557 = scalar_lea.hbm %s6, %s556
          %s559 = sshll.u32 %s549, 4
          %s560 = int_to_ptr.vmem [resolvable:$true] %s559
          %562 = dma.vmem_to_hbm [thread:$0]  %s560, 128, %s557, %s546
        $region56: #{custom_bert_model.19} parent=43 // pred_fallthru
          _
      $region44: #{custom_bert_model.19} parent=5 // pred_fallthru
        _
      %p563 = scmp.le.s32.totalorder 2, %s15
      // Predicated region
      $region57: #{custom_bert_model.19} parent=5 // pred_check
        %p564 = pneg %p563
      $region58: #{custom_bert_model.19} parent=5 // pred_check_branch
        %566 = sbr.rel (%p564) target = $region60
      $region59: #{custom_bert_model.19} parent=5 // pred_region
        %s567 = ssub.s32 %s15, 2
        // Predicated region
        $region61: #{custom_bert_model.19} parent=59 // pred_check
          %p568 = pneg %p199
        $region62: #{custom_bert_model.19} parent=59 // pred_check_branch
          %570 = sbr.rel (%p568) target = $region64
        $region63: #{custom_bert_model.19} parent=59 // pred_region
          %s571 = sand.u32 %s184, 1
          %s572 = scalar_lea.sflag [#allocation4], %s571
          %s573 = sand.u32 %s184, 1
          %s574 = smul.addr %s573, 8
          %s575 = scalar_lea.vmem [#allocation3], %s574
          %576 = dma.done %s572, 128
        $region64: #{custom_bert_model.19} parent=59 // pred_fallthru
          _
      $region60: #{custom_bert_model.19} parent=5 // pred_fallthru
        _
    $region6: #{custom_bert_model.19} parent=1 // loop_footer
      %s19 = sadd.s32 1, %s15
    $region7: #{custom_bert_model.19} parent=1 // loop_footer_branch
      %14 = sbr.rel target = $region3
    $region8: #{custom_bert_model.19} parent=1 // loop_exit
      _
    %577 = vsyncpa [#allocation4], 1
    %s578 = scalar_lea.sflag [#allocation4], 1
    %579 = vsyncpa %s578, 1

</llo_original>
